<compile_context>
chip_gen: v7x
topology: tpu7x:2x2x1
jax: 0.10.0
libtpu: 0.0.40
codegen_flags: <defaults>
</compile_context>

<pallas_src>
import functools

import numpy as np

import jax
import jax.numpy as jnp
from jax.experimental import pallas as pl
from jax.experimental.pallas import tpu as pltpu


def _down_mat(n):
    """[n//2, n]: left-multiplying applies the zero-padded [.25,.5,.25] conv
    along that axis and keeps the even-indexed outputs."""
    m = n // 2
    i = jax.lax.broadcasted_iota(jnp.int32, (m, n), 0)
    j = jax.lax.broadcasted_iota(jnp.int32, (m, n), 1)
    d = j - 2 * i
    return jnp.where(d == 0, jnp.float32(0.5),
                     jnp.where(jnp.abs(d) == 1, jnp.float32(0.25),
                               jnp.float32(0.0)))


def _down_mat_t(n):
    """[n, n//2]: transposed version (right-multiplication form), built
    directly so no in-kernel transpose is needed."""
    m = n // 2
    j = jax.lax.broadcasted_iota(jnp.int32, (n, m), 0)
    i = jax.lax.broadcasted_iota(jnp.int32, (n, m), 1)
    d = j - 2 * i
    return jnp.where(d == 0, jnp.float32(0.5),
                     jnp.where(jnp.abs(d) == 1, jnp.float32(0.25),
                               jnp.float32(0.0)))


def _wavelet_kernel(x_ref, o_ref, *, levels):
    tb, H, W = x_ref.shape
    # Untouched regions of the output are just the input.
    o_ref[...] = x_ref[...]
    # `temp` always holds result[:, :sh, :sw] for the current level.
    temp = x_ref[...].astype(jnp.float32)
    for level in range(levels):
        sh, sw = H >> level, W >> level
        if min(sh, sw) <= 2:
            break
        # NOTE: the reference numpy code requires sh, sw even here (it raises
        # otherwise); for odd scales we simply truncate to sh//2 / sw//2 rows.
        dwt_b = jnp.broadcast_to(_down_mat_t(sw)[None], (tb, sw, sw // 2))
        dh_b = jnp.broadcast_to(_down_mat(sh)[None], (tb, sh // 2, sh))
        # Column pass: [tb, sh, sw] x [tb, sw, sw//2] -> [tb, sh, sw//2]
        t1 = jax.lax.dot_general(
            temp, dwt_b,
            dimension_numbers=(((2,), (1,)), ((0,), (0,))),
            preferred_element_type=jnp.float32)
        # Row pass: [tb, sh//2, sh] x [tb, sh, sw//2] -> [tb, sh//2, sw//2]
        down = jax.lax.dot_general(
            dh_b, t1,
            dimension_numbers=(((2,), (1,)), ((0,), (0,))),
            preferred_element_type=jnp.float32)
        # Write the smoothed/downsampled approximation into the top-left quadrant.
        o_ref[:, : sh // 2, : sw // 2] = down.astype(o_ref.dtype)
        temp = down


def wavelet_transform_forward(x, *, levels=3, block_rows=None):
    """x: [B, C, H, W] -> [B, C, H, W], matching WaveletTransform.forward."""
    B, C, H, W = x.shape
    BC = B * C
    xf = x.reshape(BC, H, W)

    # Tile the image axis with a VMEM-budgeted, B*C-independent tile size.
    if block_rows is None:
        budget = 1 << 20                                # ~1 MiB per input block
        per_row = H * W * x.dtype.itemsize
        block_rows = max(1, budget // max(per_row, 1))
    tb = int(max(1, min(block_rows, BC)))
    bc_pad = pl.cdiv(BC, tb) * tb
    if bc_pad != BC:
        xf = jnp.concatenate(
            [xf, jnp.zeros((bc_pad - BC, H, W), xf.dtype)], axis=0)

    out = pl.pallas_call(
        functools.partial(_wavelet_kernel, levels=levels),
        out_shape=jax.ShapeDtypeStruct((bc_pad, H, W), x.dtype),
        grid=(bc_pad // tb,),
        in_specs=[pl.BlockSpec((tb, H, W), lambda i: (i, 0, 0))],
        out_specs=pl.BlockSpec((tb, H, W), lambda i: (i, 0, 0)),
        compiler_params=pltpu.CompilerParams(
            dimension_semantics=("parallel",)),
    )(xf)

    return out[:BC].reshape(B, C, H, W)


def _reference(x_np, levels=3):
    """Numpy re-implementation of the torch module (scipy-free), for checking."""
    B, C, H, W = x_np.shape
    v = np.array([0.25, 0.5, 0.25], dtype=np.float32)
    k = np.outer(v, v)
    out = np.array(x_np, dtype=np.float32, copy=True)
    for b in range(B):
        for c in range(C):
            res = out[b, c].copy()
            for level in range(levels):
                sh, sw = H // 2 ** level, W // 2 ** level
                if min(sh, sw) <= 2:
                    break
                temp = res[:sh, :sw].copy()
                pad = np.zeros((sh + 2, sw + 2), dtype=np.float32)
                pad[1:-1, 1:-1] = temp
                approx = np.zeros_like(temp)
                for dy in (-1, 0, 1):
                    for dx in (-1, 0, 1):
                        approx += k[dy + 1, dx + 1] * \
                            pad[1 + dy:1 + dy + sh, 1 + dx:1 + dx + sw]
                res[:sh // 2, :sw // 2] = approx[::2, ::2]
            out[b, c] = res
    return out


if __name__ == "__main__":
    key = jax.random.PRNGKey(0)
    k1, k2 = jax.random.split(key)

    # Case 1: shapes matching the module's intended use (B, C, H, W).
    B, C, H, W = 2, 4, 16, 16
    x = jax.random.normal(k1, (B, C, H, W), jnp.float32)
    out = jax.block_until_ready(wavelet_transform_forward(x, levels=3))
    assert out.shape == (B, C, H, W), out.shape
    ref = _reference(np.asarray(x), levels=3)
    assert np.allclose(np.asarray(out), ref, atol=1e-5, rtol=1e-5), \
        "mismatch vs numpy reference (case 1)"

    # Case 2: exercises the multi-tile grid + row padding path (BC=15, tile=4)
    # and non-square planes.
    B2, C2, H2, W2 = 3, 5, 32, 16
    x2 = jax.random.normal(k2, (B2, C2, H2, W2), jnp.float32)
    out2 = jax.block_until_ready(
        wavelet_transform_forward(x2, levels=3, block_rows=4))
    assert out2.shape == (B2, C2, H2, W2), out2.shape
    ref2 = _reference(np.asarray(x2), levels=3)
    assert np.allclose(np.asarray(out2), ref2, atol=1e-5, rtol=1e-5), \
        "mismatch vs numpy reference (case 2)"

    print("KERNEL_OK")
</pallas_src>

<mosaic_0001>
module attributes {stable_mosaic.version = 11 : i64} {
  func.func @_wavelet_kernel(%arg0: i32, %arg1: memref<8x16x16xf32, #tpu.memory_space<vmem>>, %arg2: memref<8x16x16xf32, #tpu.memory_space<vmem>>) attributes {dimension_semantics = [#tpu.dimension_semantics<parallel>], iteration_bounds = array<i64: 1>, scalar_prefetch = 0 : i64, scratch_operands = 0 : i64, tpu.core_type = #tpu.core_type<tc>, window_params = [{transform_indices = @transform_0, window_bounds = array<i64: 8, 16, 16>}, {transform_indices = @transform_1, window_bounds = array<i64: 8, 16, 16>}]} {
    %c0 = arith.constant 0 : index
    %c0_0 = arith.constant 0 : index
    %c0_1 = arith.constant 0 : index
    %0 = vector.load %arg1[%c0, %c0_0, %c0_1] : memref<8x16x16xf32, #tpu.memory_space<vmem>>, vector<8x16x16xf32>
    %c0_2 = arith.constant 0 : index
    %c0_3 = arith.constant 0 : index
    %c0_4 = arith.constant 0 : index
    %1 = vector.load %arg2[%c0_2, %c0_3, %c0_4] : memref<8x16x16xf32, #tpu.memory_space<vmem>>, vector<8x16x16xf32>
    tpu.vector_store %arg2[%c0_2, %c0_3, %c0_4], %0 {strides = array<i32>} : memref<8x16x16xf32, #tpu.memory_space<vmem>>, vector<8x16x16xf32>,
    %c0_5 = arith.constant 0 : index
    %c0_6 = arith.constant 0 : index
    %c0_7 = arith.constant 0 : index
    %2 = vector.load %arg1[%c0_5, %c0_6, %c0_7] : memref<8x16x16xf32, #tpu.memory_space<vmem>>, vector<8x16x16xf32>
    %3 = tpu.iota {dimensions = array<i32: 0>} : vector<16x8xi32>
    %4 = tpu.iota {dimensions = array<i32: 1>} : vector<16x8xi32>
    %c2_i32 = arith.constant 2 : i32
    %5 = vector.broadcast %c2_i32 : i32 to vector<16x8xi32>
    %6 = arith.muli %5, %4 : vector<16x8xi32>
    %7 = arith.subi %3, %6 : vector<16x8xi32>
    %c0_i32 = arith.constant 0 : i32
    %8 = vector.broadcast %c0_i32 : i32 to vector<16x8xi32>
    %9 = arith.cmpi eq, %7, %8 : vector<16x8xi32>
    %10 = math.absi %7 : vector<16x8xi32>
    %c1_i32 = arith.constant 1 : i32
    %11 = vector.broadcast %c1_i32 : i32 to vector<16x8xi32>
    %12 = arith.cmpi eq, %10, %11 : vector<16x8xi32>
    %cst = arith.constant 2.500000e-01 : f32
    %cst_8 = arith.constant 0.000000e+00 : f32
    %13 = vector.broadcast %cst : f32 to vector<16x8xf32>
    %14 = vector.broadcast %cst_8 : f32 to vector<16x8xf32>
    %15 = arith.select %12, %13, %14 : vector<16x8xi1>, vector<16x8xf32>
    %cst_9 = arith.constant 5.000000e-01 : f32
    %16 = vector.broadcast %cst_9 : f32 to vector<16x8xf32>
    %17 = arith.select %9, %16, %15 : vector<16x8xi1>, vector<16x8xf32>
    %18 = vector.shape_cast %17 : vector<16x8xf32> to vector<1x16x8xf32>
    %19 = vector.shape_cast %18 : vector<1x16x8xf32> to vector<1x16x8xf32>
    %20 = vector.broadcast %19 : vector<1x16x8xf32> to vector<8x16x8xf32>
    %21 = tpu.iota {dimensions = array<i32: 0>} : vector<8x16xi32>
    %22 = tpu.iota {dimensions = array<i32: 1>} : vector<8x16xi32>
    %c2_i32_10 = arith.constant 2 : i32
    %23 = vector.broadcast %c2_i32_10 : i32 to vector<8x16xi32>
    %24 = arith.muli %23, %21 : vector<8x16xi32>
    %25 = arith.subi %22, %24 : vector<8x16xi32>
    %c0_i32_11 = arith.constant 0 : i32
    %26 = vector.broadcast %c0_i32_11 : i32 to vector<8x16xi32>
    %27 = arith.cmpi eq, %25, %26 : vector<8x16xi32>
    %28 = math.absi %25 : vector<8x16xi32>
    %c1_i32_12 = arith.constant 1 : i32
    %29 = vector.broadcast %c1_i32_12 : i32 to vector<8x16xi32>
    %30 = arith.cmpi eq, %28, %29 : vector<8x16xi32>
    %cst_13 = arith.constant 2.500000e-01 : f32
    %cst_14 = arith.constant 0.000000e+00 : f32
    %31 = vector.broadcast %cst_13 : f32 to vector<8x16xf32>
    %32 = vector.broadcast %cst_14 : f32 to vector<8x16xf32>
    %33 = arith.select %30, %31, %32 : vector<8x16xi1>, vector<8x16xf32>
    %cst_15 = arith.constant 5.000000e-01 : f32
    %34 = vector.broadcast %cst_15 : f32 to vector<8x16xf32>
    %35 = arith.select %27, %34, %33 : vector<8x16xi1>, vector<8x16xf32>
    %36 = vector.shape_cast %35 : vector<8x16xf32> to vector<1x8x16xf32>
    %37 = vector.shape_cast %36 : vector<1x8x16xf32> to vector<1x8x16xf32>
    %38 = vector.broadcast %37 : vector<1x8x16xf32> to vector<8x8x16xf32>
    %cst_16 = arith.constant dense<0.000000e+00> : vector<8x16x8xf32>
    %39 = tpu.matmul %2, %20, %cst_16 {dimension_numbers = #tpu.dot_dimension_numbers<[2], [1], [1], [2], [0, 0, 0, 1, 1, 2], [0], [0]>} : vector<8x16x16xf32>, vector<8x16x8xf32>, vector<8x16x8xf32> -> vector<8x16x8xf32>
    %cst_17 = arith.constant dense<0.000000e+00> : vector<8x8x8xf32>
    %40 = tpu.matmul %38, %39, %cst_17 {dimension_numbers = #tpu.dot_dimension_numbers<[2], [1], [1], [2], [0, 0, 0, 1, 1, 2], [0], [0]>} : vector<8x8x16xf32>, vector<8x16x8xf32>, vector<8x8x8xf32> -> vector<8x8x8xf32>
    %c0_18 = arith.constant 0 : index
    %c0_19 = arith.constant 0 : index
    %c0_20 = arith.constant 0 : index
    %41 = vector.load %arg2[%c0_18, %c0_19, %c0_20] : memref<8x16x16xf32, #tpu.memory_space<vmem>>, vector<8x8x8xf32>
    tpu.vector_store %arg2[%c0_18, %c0_19, %c0_20], %40 {strides = array<i32>} : memref<8x16x16xf32, #tpu.memory_space<vmem>>, vector<8x8x8xf32>,
    %42 = tpu.iota {dimensions = array<i32: 0>} : vector<8x4xi32>
    %43 = tpu.iota {dimensions = array<i32: 1>} : vector<8x4xi32>
    %c2_i32_21 = arith.constant 2 : i32
    %44 = vector.broadcast %c2_i32_21 : i32 to vector<8x4xi32>
    %45 = arith.muli %44, %43 : vector<8x4xi32>
    %46 = arith.subi %42, %45 : vector<8x4xi32>
    %c0_i32_22 = arith.constant 0 : i32
    %47 = vector.broadcast %c0_i32_22 : i32 to vector<8x4xi32>
    %48 = arith.cmpi eq, %46, %47 : vector<8x4xi32>
    %49 = math.absi %46 : vector<8x4xi32>
    %c1_i32_23 = arith.constant 1 : i32
    %50 = vector.broadcast %c1_i32_23 : i32 to vector<8x4xi32>
    %51 = arith.cmpi eq, %49, %50 : vector<8x4xi32>
    %cst_24 = arith.constant 2.500000e-01 : f32
    %cst_25 = arith.constant 0.000000e+00 : f32
    %52 = vector.broadcast %cst_24 : f32 to vector<8x4xf32>
    %53 = vector.broadcast %cst_25 : f32 to vector<8x4xf32>
    %54 = arith.select %51, %52, %53 : vector<8x4xi1>, vector<8x4xf32>
    %cst_26 = arith.constant 5.000000e-01 : f32
    %55 = vector.broadcast %cst_26 : f32 to vector<8x4xf32>
    %56 = arith.select %48, %55, %54 : vector<8x4xi1>, vector<8x4xf32>
    %57 = vector.shape_cast %56 : vector<8x4xf32> to vector<1x8x4xf32>
    %58 = vector.shape_cast %57 : vector<1x8x4xf32> to vector<1x8x4xf32>
    %59 = vector.broadcast %58 : vector<1x8x4xf32> to vector<8x8x4xf32>
    %60 = tpu.iota {dimensions = array<i32: 0>} : vector<4x8xi32>
    %61 = tpu.iota {dimensions = array<i32: 1>} : vector<4x8xi32>
    %c2_i32_27 = arith.constant 2 : i32
    %62 = vector.broadcast %c2_i32_27 : i32 to vector<4x8xi32>
    %63 = arith.muli %62, %60 : vector<4x8xi32>
    %64 = arith.subi %61, %63 : vector<4x8xi32>
    %c0_i32_28 = arith.constant 0 : i32
    %65 = vector.broadcast %c0_i32_28 : i32 to vector<4x8xi32>
    %66 = arith.cmpi eq, %64, %65 : vector<4x8xi32>
    %67 = math.absi %64 : vector<4x8xi32>
    %c1_i32_29 = arith.constant 1 : i32
    %68 = vector.broadcast %c1_i32_29 : i32 to vector<4x8xi32>
    %69 = arith.cmpi eq, %67, %68 : vector<4x8xi32>
    %cst_30 = arith.constant 2.500000e-01 : f32
    %cst_31 = arith.constant 0.000000e+00 : f32
    %70 = vector.broadcast %cst_30 : f32 to vector<4x8xf32>
    %71 = vector.broadcast %cst_31 : f32 to vector<4x8xf32>
    %72 = arith.select %69, %70, %71 : vector<4x8xi1>, vector<4x8xf32>
    %cst_32 = arith.constant 5.000000e-01 : f32
    %73 = vector.broadcast %cst_32 : f32 to vector<4x8xf32>
    %74 = arith.select %66, %73, %72 : vector<4x8xi1>, vector<4x8xf32>
    %75 = vector.shape_cast %74 : vector<4x8xf32> to vector<1x4x8xf32>
    %76 = vector.shape_cast %75 : vector<1x4x8xf32> to vector<1x4x8xf32>
    %77 = vector.broadcast %76 : vector<1x4x8xf32> to vector<8x4x8xf32>
    %cst_33 = arith.constant dense<0.000000e+00> : vector<8x8x4xf32>
    %78 = tpu.matmul %40, %59, %cst_33 {dimension_numbers = #tpu.dot_dimension_numbers<[2], [1], [1], [2], [0, 0, 0, 1, 1, 2], [0], [0]>} : vector<8x8x8xf32>, vector<8x8x4xf32>, vector<8x8x4xf32> -> vector<8x8x4xf32>
    %cst_34 = arith.constant dense<0.000000e+00> : vector<8x4x4xf32>
    %79 = tpu.matmul %77, %78, %cst_34 {dimension_numbers = #tpu.dot_dimension_numbers<[2], [1], [1], [2], [0, 0, 0, 1, 1, 2], [0], [0]>} : vector<8x4x8xf32>, vector<8x8x4xf32>, vector<8x4x4xf32> -> vector<8x4x4xf32>
    %c0_35 = arith.constant 0 : index
    %c0_36 = arith.constant 0 : index
    %c0_37 = arith.constant 0 : index
    %80 = vector.load %arg2[%c0_35, %c0_36, %c0_37] : memref<8x16x16xf32, #tpu.memory_space<vmem>>, vector<8x4x4xf32>
    tpu.vector_store %arg2[%c0_35, %c0_36, %c0_37], %79 {strides = array<i32>} : memref<8x16x16xf32, #tpu.memory_space<vmem>>, vector<8x4x4xf32>,
    %81 = tpu.iota {dimensions = array<i32: 0>} : vector<4x2xi32>
    %82 = tpu.iota {dimensions = array<i32: 1>} : vector<4x2xi32>
    %c2_i32_38 = arith.constant 2 : i32
    %83 = vector.broadcast %c2_i32_38 : i32 to vector<4x2xi32>
    %84 = arith.muli %83, %82 : vector<4x2xi32>
    %85 = arith.subi %81, %84 : vector<4x2xi32>
    %c0_i32_39 = arith.constant 0 : i32
    %86 = vector.broadcast %c0_i32_39 : i32 to vector<4x2xi32>
    %87 = arith.cmpi eq, %85, %86 : vector<4x2xi32>
    %88 = math.absi %85 : vector<4x2xi32>
    %c1_i32_40 = arith.constant 1 : i32
    %89 = vector.broadcast %c1_i32_40 : i32 to vector<4x2xi32>
    %90 = arith.cmpi eq, %88, %89 : vector<4x2xi32>
    %cst_41 = arith.constant 2.500000e-01 : f32
    %cst_42 = arith.constant 0.000000e+00 : f32
    %91 = vector.broadcast %cst_41 : f32 to vector<4x2xf32>
    %92 = vector.broadcast %cst_42 : f32 to vector<4x2xf32>
    %93 = arith.select %90, %91, %92 : vector<4x2xi1>, vector<4x2xf32>
    %cst_43 = arith.constant 5.000000e-01 : f32
    %94 = vector.broadcast %cst_43 : f32 to vector<4x2xf32>
    %95 = arith.select %87, %94, %93 : vector<4x2xi1>, vector<4x2xf32>
    %96 = vector.shape_cast %95 : vector<4x2xf32> to vector<1x4x2xf32>
    %97 = vector.shape_cast %96 : vector<1x4x2xf32> to vector<1x4x2xf32>
    %98 = vector.broadcast %97 : vector<1x4x2xf32> to vector<8x4x2xf32>
    %99 = tpu.iota {dimensions = array<i32: 0>} : vector<2x4xi32>
    %100 = tpu.iota {dimensions = array<i32: 1>} : vector<2x4xi32>
    %c2_i32_44 = arith.constant 2 : i32
    %101 = vector.broadcast %c2_i32_44 : i32 to vector<2x4xi32>
    %102 = arith.muli %101, %99 : vector<2x4xi32>
    %103 = arith.subi %100, %102 : vector<2x4xi32>
    %c0_i32_45 = arith.constant 0 : i32
    %104 = vector.broadcast %c0_i32_45 : i32 to vector<2x4xi32>
    %105 = arith.cmpi eq, %103, %104 : vector<2x4xi32>
    %106 = math.absi %103 : vector<2x4xi32>
    %c1_i32_46 = arith.constant 1 : i32
    %107 = vector.broadcast %c1_i32_46 : i32 to vector<2x4xi32>
    %108 = arith.cmpi eq, %106, %107 : vector<2x4xi32>
    %cst_47 = arith.constant 2.500000e-01 : f32
    %cst_48 = arith.constant 0.000000e+00 : f32
    %109 = vector.broadcast %cst_47 : f32 to vector<2x4xf32>
    %110 = vector.broadcast %cst_48 : f32 to vector<2x4xf32>
    %111 = arith.select %108, %109, %110 : vector<2x4xi1>, vector<2x4xf32>
    %cst_49 = arith.constant 5.000000e-01 : f32
    %112 = vector.broadcast %cst_49 : f32 to vector<2x4xf32>
    %113 = arith.select %105, %112, %111 : vector<2x4xi1>, vector<2x4xf32>
    %114 = vector.shape_cast %113 : vector<2x4xf32> to vector<1x2x4xf32>
    %115 = vector.shape_cast %114 : vector<1x2x4xf32> to vector<1x2x4xf32>
    %116 = vector.broadcast %115 : vector<1x2x4xf32> to vector<8x2x4xf32>
    %cst_50 = arith.constant dense<0.000000e+00> : vector<8x4x2xf32>
    %117 = tpu.matmul %79, %98, %cst_50 {dimension_numbers = #tpu.dot_dimension_numbers<[2], [1], [1], [2], [0, 0, 0, 1, 1, 2], [0], [0]>} : vector<8x4x4xf32>, vector<8x4x2xf32>, vector<8x4x2xf32> -> vector<8x4x2xf32>
    %cst_51 = arith.constant dense<0.000000e+00> : vector<8x2x2xf32>
    %118 = tpu.matmul %116, %117, %cst_51 {dimension_numbers = #tpu.dot_dimension_numbers<[2], [1], [1], [2], [0, 0, 0, 1, 1, 2], [0], [0]>} : vector<8x2x4xf32>, vector<8x4x2xf32>, vector<8x2x2xf32> -> vector<8x2x2xf32>
    %c0_52 = arith.constant 0 : index
    %c0_53 = arith.constant 0 : index
    %c0_54 = arith.constant 0 : index
    %119 = vector.load %arg2[%c0_52, %c0_53, %c0_54] : memref<8x16x16xf32, #tpu.memory_space<vmem>>, vector<8x2x2xf32>
    tpu.vector_store %arg2[%c0_52, %c0_53, %c0_54], %118 {strides = array<i32>} : memref<8x16x16xf32, #tpu.memory_space<vmem>>, vector<8x2x2xf32>,
    return
  }
  func.func @transform_0(%arg0: i32) -> (i32, i32, i32) {
    %c0_i32 = arith.constant 0 : i32
    %c0_i32_0 = arith.constant 0 : i32
    %c0_i32_1 = arith.constant 0 : i32
    return %arg0, %c0_i32, %c0_i32_0 : i32, i32, i32
  }
  func.func @transform_1(%arg0: i32) -> (i32, i32, i32) {
    %c0_i32 = arith.constant 0 : i32
    %c0_i32_0 = arith.constant 0 : i32
    %c0_i32_1 = arith.constant 0 : i32
    return %arg0, %c0_i32, %c0_i32_0 : i32, i32, i32
  }
}

</mosaic_0001>

<llo_original>
// kernel: tpu_custom_call.1
$region0: #{tpu_custom_call.1}
  #allocation0 [shape = 'u32[]', space=smem, size = 0x4, offset = 0x4, fixed_abs, tag = 'smem constant byte address 0x4 - core index']
  #allocation1 [shape = 'u32[144,128]{1,0:T(1,128)}', space=vmem, size = 0x12000, scoped, tag = 'internal scratch']
  %s0 = inlined_call_operand.hbm [shape: f32[8,16,16], index: 0, kind: input, shape index: {}]
  %s1 = inlined_call_operand.hbm [shape: f32[8,16,16], index: 1, kind: output, shape index: {}]
  %s2 = sld [smem:[#allocation0]]
  $region18: #{tpu_custom_call.1} parent=0
    _
  %s4 = ssub.s32 1, %s2
  %s5 = scalar_select 0, %s4, %s2
  $region1: #{tpu_custom_call.1} parent=0
    #allocation2 [shape = 'u8[65536]{0}', space=vmem, size = 0x10000, scoped, tag = 'input window, operand 0, single buffered']
    #allocation3 [shape = 's32[1]{0}', space=sflag, size = 0x4, scoped, tag = 'scoped memory for tpu_custom_call.1']
    #allocation4 [shape = 's32[1]{0}', space=sflag, size = 0x4, scoped, tag = 'scoped memory for tpu_custom_call.1']
    #allocation5 [shape = 'u8[65536]{0}', space=vmem, size = 0x10000, scoped, tag = 'output window, operand 0, single buffered']
    %6 = vsyncpa [#allocation3], 0
    %7 = vsyncpa [#allocation4], 0
    // Predicated region
    $region2: #{tpu_custom_call.1} parent=1 // pred_check
      _
    $region3: #{tpu_custom_call.1} parent=1 // pred_check_branch
      %9 = sbr.rel (0) target = $region5
    $region4: #{tpu_custom_call.1} parent=1 // pred_region
      %s11 = ssub.s32 2048, 2048
      %12 = vsyncadd [#allocation3], %s11
      %s13 = sshll.u32 [#allocation2], 4
      %s14 = int_to_ptr.vmem [resolvable:$true] %s13
      %19 = dma.hbm_to_vmem [thread:$0]  %s0, 2048, %s14, [#allocation3], 128, 128, 8
    $region5: #{tpu_custom_call.1} parent=1 // pred_fallthru
      _
    // Predicated region
    $region6: #{tpu_custom_call.1} parent=1 // pred_check
      _
    $region7: #{tpu_custom_call.1} parent=1 // pred_check_branch
      %21 = sbr.rel (0) target = $region9
    $region8: #{tpu_custom_call.1} parent=1 // pred_region
      %22 = dma.done [#allocation3], 2048
    $region9: #{tpu_custom_call.1} parent=1 // pred_fallthru
      _
    %v23 = vld [vmem:[#allocation2] sm:$0xff]
    %v24 = vld [vmem:[#allocation2 + $0x8] sm:$0xff]
    %v25 = vld [vmem:[#allocation2 + $0x10] sm:$0xff]
    %v26 = vld [vmem:[#allocation2 + $0x18] sm:$0xff]
    %v27 = vld [vmem:[#allocation2 + $0x20] sm:$0xff]
    %v28 = vld [vmem:[#allocation2 + $0x28] sm:$0xff]
    %v29 = vld [vmem:[#allocation2 + $0x30] sm:$0xff]
    %v30 = vld [vmem:[#allocation2 + $0x38] sm:$0xff]
    %v31 = vld [vmem:[#allocation2 + $0x40] sm:$0xff]
    %v32 = vld [vmem:[#allocation2 + $0x48] sm:$0xff]
    %v33 = vld [vmem:[#allocation2 + $0x50] sm:$0xff]
    %v34 = vld [vmem:[#allocation2 + $0x58] sm:$0xff]
    %v35 = vld [vmem:[#allocation2 + $0x60] sm:$0xff]
    %v36 = vld [vmem:[#allocation2 + $0x68] sm:$0xff]
    %v37 = vld [vmem:[#allocation2 + $0x70] sm:$0xff]
    %v38 = vld [vmem:[#allocation2 + $0x78] sm:$0xff]
    %vm39 = vcmask 130048
    %40 = vst.msk [vmem:[#allocation5] sm:$0xff] %vm39, %v23
    %41 = vst.msk [vmem:[#allocation5 + $0x8] sm:$0xff] %vm39, %v24
    %42 = vst.msk [vmem:[#allocation5 + $0x10] sm:$0xff] %vm39, %v25
    %43 = vst.msk [vmem:[#allocation5 + $0x18] sm:$0xff] %vm39, %v26
    %44 = vst.msk [vmem:[#allocation5 + $0x20] sm:$0xff] %vm39, %v27
    %45 = vst.msk [vmem:[#allocation5 + $0x28] sm:$0xff] %vm39, %v28
    %46 = vst.msk [vmem:[#allocation5 + $0x30] sm:$0xff] %vm39, %v29
    %47 = vst.msk [vmem:[#allocation5 + $0x38] sm:$0xff] %vm39, %v30
    %48 = vst.msk [vmem:[#allocation5 + $0x40] sm:$0xff] %vm39, %v31
    %49 = vst.msk [vmem:[#allocation5 + $0x48] sm:$0xff] %vm39, %v32
    %50 = vst.msk [vmem:[#allocation5 + $0x50] sm:$0xff] %vm39, %v33
    %51 = vst.msk [vmem:[#allocation5 + $0x58] sm:$0xff] %vm39, %v34
    %52 = vst.msk [vmem:[#allocation5 + $0x60] sm:$0xff] %vm39, %v35
    %53 = vst.msk [vmem:[#allocation5 + $0x68] sm:$0xff] %vm39, %v36
    %54 = vst.msk [vmem:[#allocation5 + $0x70] sm:$0xff] %vm39, %v37
    %55 = vst.msk [vmem:[#allocation5 + $0x78] sm:$0xff] %vm39, %v38
    %v56 = vld [vmem:[#allocation2] sm:$0xff]
    %v57 = vld [vmem:[#allocation2 + $0x8] sm:$0xff]
    %v58 = vld [vmem:[#allocation2 + $0x10] sm:$0xff]
    %v59 = vld [vmem:[#allocation2 + $0x18] sm:$0xff]
    %v60 = vld [vmem:[#allocation2 + $0x20] sm:$0xff]
    %v61 = vld [vmem:[#allocation2 + $0x28] sm:$0xff]
    %v62 = vld [vmem:[#allocation2 + $0x30] sm:$0xff]
    %v63 = vld [vmem:[#allocation2 + $0x38] sm:$0xff]
    %v64 = vld [vmem:[#allocation2 + $0x40] sm:$0xff]
    %v65 = vld [vmem:[#allocation2 + $0x48] sm:$0xff]
    %v66 = vld [vmem:[#allocation2 + $0x50] sm:$0xff]
    %v67 = vld [vmem:[#allocation2 + $0x58] sm:$0xff]
    %v68 = vld [vmem:[#allocation2 + $0x60] sm:$0xff]
    %v69 = vld [vmem:[#allocation2 + $0x68] sm:$0xff]
    %v70 = vld [vmem:[#allocation2 + $0x70] sm:$0xff]
    %v71 = vld [vmem:[#allocation2 + $0x78] sm:$0xff]
    %v72 = vlaneseq
    %v73 = vshrl.u32 %v72, 7
    %v74 = vadd.s32 %v73, 8
    %v75 = vlaneseq
    %v76 = vand.u32 %v75, 127
    %v77 = vmul.u32 %v76, 2
    %v78 = vsub.s32 %v73, %v77
    %v79 = vsub.s32 %v74, %v77
    %vm80 = vcmp.eq.s32.totalorder %v78, 0
    %vm81 = vcmp.eq.s32.totalorder %v79, 0
    %vm82 = vcmp.lt.s32.totalorder %v78, 0
    %v83 = vsub.s32 0, %v78
    %v84 = vsel %vm82, %v83, %v78
    %vm85 = vcmp.lt.s32.totalorder %v79, 0
    %v86 = vsub.s32 0, %v79
    %v87 = vsel %vm85, %v86, %v79
    %vm88 = vcmp.eq.s32.totalorder %v84, 1
    %vm89 = vcmp.eq.s32.totalorder %v87, 1
    %v90 = vsel %vm88, 0.25, 0.0
    %v91 = vsel %vm89, 0.25, 0.0
    %v92 = vsel %vm80, 0.5, %v90
    %v93 = vsel %vm81, 0.5, %v91
    %v94 = vmul.u32 %v73, 2
    %v95 = vsub.s32 %v76, %v94
    %vm96 = vcmp.eq.s32.totalorder %v95, 0
    %vm97 = vcmp.lt.s32.totalorder %v95, 0
    %v98 = vsub.s32 0, %v95
    %v99 = vsel %vm97, %v98, %v95
    %vm100 = vcmp.eq.s32.totalorder %v99, 1
    %v101 = vsel %vm100, 0.25, 0.0
    %v102 = vsel %vm96, 0.5, %v101
    %v104 = vsel %vm39, %v56, 0
    %v107 = vsel %vm39, %v57, 0
    %109 = vmatprep.subr.mxu0 0.0
    %110 = vmatpush1.msra.mxu0 %v92
    %111 = vmatprep.subr.mxu0 0.0
    %112 = vmatpush1.msra.mxu0 %v93
    %113 = vmatprep.subr.mxu0 0.0
    %114 = vmatpush1.msra.mxu0 0.0
    %115 = vmatprep.subr.mxu0 0.0
    %116 = vmatpush1.msra.mxu0 0.0
    %117 = vmatprep.subr.mxu0 0.0
    %118 = vmatpush1.msra.mxu0 0.0
    %119 = vmatprep.subr.mxu0 0.0
    %120 = vmatpush1.msra.mxu0 0.0
    %121 = vmatprep.subr.mxu0 0.0
    %122 = vmatpush1.msra.mxu0 0.0
    %123 = vmatprep.subr.mxu0 0.0
    %124 = vmatpush1.msra.mxu0 0.0
    %125 = vmatprep.subr.mxu0 0.0
    %126 = vmatpush1.msra.mxu0 0.0
    %127 = vmatprep.subr.mxu0 0.0
    %128 = vmatpush1.msra.mxu0 0.0
    %129 = vmatprep.subr.mxu0 0.0
    %130 = vmatpush1.msra.mxu0 0.0
    %131 = vmatprep.subr.mxu0 0.0
    %132 = vmatpush1.msra.mxu0 0.0
    %133 = vmatprep.subr.mxu0 0.0
    %134 = vmatpush1.msra.mxu0 0.0
    %135 = vmatprep.subr.mxu0 0.0
    %136 = vmatpush1.msra.mxu0 0.0
    %137 = vmatprep.subr.mxu0 0.0
    %138 = vmatpush1.msra.mxu0 0.0
    %139 = vmatprep.subr.mxu0 0.0
    %140 = vmatpush1.msra.mxu0 0.0
    %141 = vmatprep.subr.mxu0 0.0
    %142 = vmatpush1.msra.mxu0 0.0
    %143 = vmatprep.subr.mxu0 0.0
    %144 = vmatpush1.msra.mxu0 0.0
    %145 = vmatprep.subr.mxu0 0.0
    %146 = vmatpush1.msra.mxu0 0.0
    %147 = vmatprep.subr.mxu0 0.0
    %148 = vmatpush1.msra.mxu0 0.0
    %149 = vmatprep.subr.mxu0 0.0
    %150 = vmatpush1.msra.mxu0 0.0
    %151 = vmatprep.subr.mxu0 0.0
    %152 = vmatpush1.msra.mxu0 0.0
    %153 = vmatprep.subr.mxu0 0.0
    %154 = vmatpush1.msra.mxu0 0.0
    %155 = vmatprep.subr.mxu0 0.0
    %156 = vmatpush1.msra.mxu0 0.0
    %157 = vmatprep.subr.mxu0 0.0
    %158 = vmatpush1.msra.mxu0 0.0
    %159 = vmatprep.subr.mxu0 0.0
    %160 = vmatpush1.msra.mxu0 0.0
    %161 = vmatprep.subr.mxu0 0.0
    %162 = vmatpush1.msra.mxu0 0.0
    %163 = vmatprep.subr.mxu0 0.0
    %164 = vmatpush1.msra.mxu0 0.0
    %165 = vmatprep.subr.mxu0 0.0
    %166 = vmatpush1.msra.mxu0 0.0
    %167 = vmatprep.subr.mxu0 0.0
    %168 = vmatpush1.msra.mxu0 0.0
    %169 = vmatprep.subr.mxu0 0.0
    %170 = vmatpush1.msra.mxu0 0.0
    %171 = vmatprep.subr.mxu0 0.0
    %172 = vmatpush1.msra.mxu0 0.0
    %173 = vmatprep.mubr.f32.mxu0 0.0
    %174 = vmatmul.mubr.f32.gmra.mrb[0].mxu0 %v104
    %v175 = vpop.f32.mrb[0].mxu0
    %v176 = vadd.f32 0.0, %v175
    %v177 = vpop.f32.mrb[0].mxu0
    %178 = vmatprep.mubr.f32.mxu0 0.0
    %179 = vmatmul.mubr.f32.gmra.mrb[0].mxu0 %v107
    %v180 = vpop.f32.mrb[0].mxu0
    %v181 = vadd.f32 0.0, %v180
    %v182 = vpop.f32.mrb[0].mxu0
    %183 = vdwg.mxu0
    %v185 = vsel %vm39, %v58, 0
    %v188 = vsel %vm39, %v59, 0
    %190 = vmatprep.subr.mxu0 0.0
    %191 = vmatpush1.msra.mxu0 %v92
    %192 = vmatprep.subr.mxu0 0.0
    %193 = vmatpush1.msra.mxu0 %v93
    %194 = vmatprep.subr.mxu0 0.0
    %195 = vmatpush1.msra.mxu0 0.0
    %196 = vmatprep.subr.mxu0 0.0
    %197 = vmatpush1.msra.mxu0 0.0
    %198 = vmatprep.subr.mxu0 0.0
    %199 = vmatpush1.msra.mxu0 0.0
    %200 = vmatprep.subr.mxu0 0.0
    %201 = vmatpush1.msra.mxu0 0.0
    %202 = vmatprep.subr.mxu0 0.0
    %203 = vmatpush1.msra.mxu0 0.0
    %204 = vmatprep.subr.mxu0 0.0
    %205 = vmatpush1.msra.mxu0 0.0
    %206 = vmatprep.subr.mxu0 0.0
    %207 = vmatpush1.msra.mxu0 0.0
    %208 = vmatprep.subr.mxu0 0.0
    %209 = vmatpush1.msra.mxu0 0.0
    %210 = vmatprep.subr.mxu0 0.0
    %211 = vmatpush1.msra.mxu0 0.0
    %212 = vmatprep.subr.mxu0 0.0
    %213 = vmatpush1.msra.mxu0 0.0
    %214 = vmatprep.subr.mxu0 0.0
    %215 = vmatpush1.msra.mxu0 0.0
    %216 = vmatprep.subr.mxu0 0.0
    %217 = vmatpush1.msra.mxu0 0.0
    %218 = vmatprep.subr.mxu0 0.0
    %219 = vmatpush1.msra.mxu0 0.0
    %220 = vmatprep.subr.mxu0 0.0
    %221 = vmatpush1.msra.mxu0 0.0
    %222 = vmatprep.subr.mxu0 0.0
    %223 = vmatpush1.msra.mxu0 0.0
    %224 = vmatprep.subr.mxu0 0.0
    %225 = vmatpush1.msra.mxu0 0.0
    %226 = vmatprep.subr.mxu0 0.0
    %227 = vmatpush1.msra.mxu0 0.0
    %228 = vmatprep.subr.mxu0 0.0
    %229 = vmatpush1.msra.mxu0 0.0
    %230 = vmatprep.subr.mxu0 0.0
    %231 = vmatpush1.msra.mxu0 0.0
    %232 = vmatprep.subr.mxu0 0.0
    %233 = vmatpush1.msra.mxu0 0.0
    %234 = vmatprep.subr.mxu0 0.0
    %235 = vmatpush1.msra.mxu0 0.0
    %236 = vmatprep.subr.mxu0 0.0
    %237 = vmatpush1.msra.mxu0 0.0
    %238 = vmatprep.subr.mxu0 0.0
    %239 = vmatpush1.msra.mxu0 0.0
    %240 = vmatprep.subr.mxu0 0.0
    %241 = vmatpush1.msra.mxu0 0.0
    %242 = vmatprep.subr.mxu0 0.0
    %243 = vmatpush1.msra.mxu0 0.0
    %244 = vmatprep.subr.mxu0 0.0
    %245 = vmatpush1.msra.mxu0 0.0
    %246 = vmatprep.subr.mxu0 0.0
    %247 = vmatpush1.msra.mxu0 0.0
    %248 = vmatprep.subr.mxu0 0.0
    %249 = vmatpush1.msra.mxu0 0.0
    %250 = vmatprep.subr.mxu0 0.0
    %251 = vmatpush1.msra.mxu0 0.0
    %252 = vmatprep.subr.mxu0 0.0
    %253 = vmatpush1.msra.mxu0 0.0
    %254 = vmatprep.mubr.f32.mxu0 0.0
    %255 = vmatmul.mubr.f32.gmra.mrb[0].mxu0 %v185
    %v256 = vpop.f32.mrb[0].mxu0
    %v257 = vadd.f32 0.0, %v256
    %v258 = vpop.f32.mrb[0].mxu0
    %259 = vmatprep.mubr.f32.mxu0 0.0
    %260 = vmatmul.mubr.f32.gmra.mrb[0].mxu0 %v188
    %v261 = vpop.f32.mrb[0].mxu0
    %v262 = vadd.f32 0.0, %v261
    %v263 = vpop.f32.mrb[0].mxu0
    %264 = vdwg.mxu0
    %v266 = vsel %vm39, %v60, 0
    %v269 = vsel %vm39, %v61, 0
    %271 = vmatprep.subr.mxu0 0.0
    %272 = vmatpush1.msra.mxu0 %v92
    %273 = vmatprep.subr.mxu0 0.0
    %274 = vmatpush1.msra.mxu0 %v93
    %275 = vmatprep.subr.mxu0 0.0
    %276 = vmatpush1.msra.mxu0 0.0
    %277 = vmatprep.subr.mxu0 0.0
    %278 = vmatpush1.msra.mxu0 0.0
    %279 = vmatprep.subr.mxu0 0.0
    %280 = vmatpush1.msra.mxu0 0.0
    %281 = vmatprep.subr.mxu0 0.0
    %282 = vmatpush1.msra.mxu0 0.0
    %283 = vmatprep.subr.mxu0 0.0
    %284 = vmatpush1.msra.mxu0 0.0
    %285 = vmatprep.subr.mxu0 0.0
    %286 = vmatpush1.msra.mxu0 0.0
    %287 = vmatprep.subr.mxu0 0.0
    %288 = vmatpush1.msra.mxu0 0.0
    %289 = vmatprep.subr.mxu0 0.0
    %290 = vmatpush1.msra.mxu0 0.0
    %291 = vmatprep.subr.mxu0 0.0
    %292 = vmatpush1.msra.mxu0 0.0
    %293 = vmatprep.subr.mxu0 0.0
    %294 = vmatpush1.msra.mxu0 0.0
    %295 = vmatprep.subr.mxu0 0.0
    %296 = vmatpush1.msra.mxu0 0.0
    %297 = vmatprep.subr.mxu0 0.0
    %298 = vmatpush1.msra.mxu0 0.0
    %299 = vmatprep.subr.mxu0 0.0
    %300 = vmatpush1.msra.mxu0 0.0
    %301 = vmatprep.subr.mxu0 0.0
    %302 = vmatpush1.msra.mxu0 0.0
    %303 = vmatprep.subr.mxu0 0.0
    %304 = vmatpush1.msra.mxu0 0.0
    %305 = vmatprep.subr.mxu0 0.0
    %306 = vmatpush1.msra.mxu0 0.0
    %307 = vmatprep.subr.mxu0 0.0
    %308 = vmatpush1.msra.mxu0 0.0
    %309 = vmatprep.subr.mxu0 0.0
    %310 = vmatpush1.msra.mxu0 0.0
    %311 = vmatprep.subr.mxu0 0.0
    %312 = vmatpush1.msra.mxu0 0.0
    %313 = vmatprep.subr.mxu0 0.0
    %314 = vmatpush1.msra.mxu0 0.0
    %315 = vmatprep.subr.mxu0 0.0
    %316 = vmatpush1.msra.mxu0 0.0
    %317 = vmatprep.subr.mxu0 0.0
    %318 = vmatpush1.msra.mxu0 0.0
    %319 = vmatprep.subr.mxu0 0.0
    %320 = vmatpush1.msra.mxu0 0.0
    %321 = vmatprep.subr.mxu0 0.0
    %322 = vmatpush1.msra.mxu0 0.0
    %323 = vmatprep.subr.mxu0 0.0
    %324 = vmatpush1.msra.mxu0 0.0
    %325 = vmatprep.subr.mxu0 0.0
    %326 = vmatpush1.msra.mxu0 0.0
    %327 = vmatprep.subr.mxu0 0.0
    %328 = vmatpush1.msra.mxu0 0.0
    %329 = vmatprep.subr.mxu0 0.0
    %330 = vmatpush1.msra.mxu0 0.0
    %331 = vmatprep.subr.mxu0 0.0
    %332 = vmatpush1.msra.mxu0 0.0
    %333 = vmatprep.subr.mxu0 0.0
    %334 = vmatpush1.msra.mxu0 0.0
    %335 = vmatprep.mubr.f32.mxu0 0.0
    %336 = vmatmul.mubr.f32.gmra.mrb[0].mxu0 %v266
    %v337 = vpop.f32.mrb[0].mxu0
    %v338 = vadd.f32 0.0, %v337
    %v339 = vpop.f32.mrb[0].mxu0
    %340 = vmatprep.mubr.f32.mxu0 0.0
    %341 = vmatmul.mubr.f32.gmra.mrb[0].mxu0 %v269
    %v342 = vpop.f32.mrb[0].mxu0
    %v343 = vadd.f32 0.0, %v342
    %v344 = vpop.f32.mrb[0].mxu0
    %345 = vdwg.mxu0
    %v347 = vsel %vm39, %v62, 0
    %v350 = vsel %vm39, %v63, 0
    %352 = vmatprep.subr.mxu0 0.0
    %353 = vmatpush1.msra.mxu0 %v92
    %354 = vmatprep.subr.mxu0 0.0
    %355 = vmatpush1.msra.mxu0 %v93
    %356 = vmatprep.subr.mxu0 0.0
    %357 = vmatpush1.msra.mxu0 0.0
    %358 = vmatprep.subr.mxu0 0.0
    %359 = vmatpush1.msra.mxu0 0.0
    %360 = vmatprep.subr.mxu0 0.0
    %361 = vmatpush1.msra.mxu0 0.0
    %362 = vmatprep.subr.mxu0 0.0
    %363 = vmatpush1.msra.mxu0 0.0
    %364 = vmatprep.subr.mxu0 0.0
    %365 = vmatpush1.msra.mxu0 0.0
    %366 = vmatprep.subr.mxu0 0.0
    %367 = vmatpush1.msra.mxu0 0.0
    %368 = vmatprep.subr.mxu0 0.0
    %369 = vmatpush1.msra.mxu0 0.0
    %370 = vmatprep.subr.mxu0 0.0
    %371 = vmatpush1.msra.mxu0 0.0
    %372 = vmatprep.subr.mxu0 0.0
    %373 = vmatpush1.msra.mxu0 0.0
    %374 = vmatprep.subr.mxu0 0.0
    %375 = vmatpush1.msra.mxu0 0.0
    %376 = vmatprep.subr.mxu0 0.0
    %377 = vmatpush1.msra.mxu0 0.0
    %378 = vmatprep.subr.mxu0 0.0
    %379 = vmatpush1.msra.mxu0 0.0
    %380 = vmatprep.subr.mxu0 0.0
    %381 = vmatpush1.msra.mxu0 0.0
    %382 = vmatprep.subr.mxu0 0.0
    %383 = vmatpush1.msra.mxu0 0.0
    %384 = vmatprep.subr.mxu0 0.0
    %385 = vmatpush1.msra.mxu0 0.0
    %386 = vmatprep.subr.mxu0 0.0
    %387 = vmatpush1.msra.mxu0 0.0
    %388 = vmatprep.subr.mxu0 0.0
    %389 = vmatpush1.msra.mxu0 0.0
    %390 = vmatprep.subr.mxu0 0.0
    %391 = vmatpush1.msra.mxu0 0.0
    %392 = vmatprep.subr.mxu0 0.0
    %393 = vmatpush1.msra.mxu0 0.0
    %394 = vmatprep.subr.mxu0 0.0
    %395 = vmatpush1.msra.mxu0 0.0
    %396 = vmatprep.subr.mxu0 0.0
    %397 = vmatpush1.msra.mxu0 0.0
    %398 = vmatprep.subr.mxu0 0.0
    %399 = vmatpush1.msra.mxu0 0.0
    %400 = vmatprep.subr.mxu0 0.0
    %401 = vmatpush1.msra.mxu0 0.0
    %402 = vmatprep.subr.mxu0 0.0
    %403 = vmatpush1.msra.mxu0 0.0
    %404 = vmatprep.subr.mxu0 0.0
    %405 = vmatpush1.msra.mxu0 0.0
    %406 = vmatprep.subr.mxu0 0.0
    %407 = vmatpush1.msra.mxu0 0.0
    %408 = vmatprep.subr.mxu0 0.0
    %409 = vmatpush1.msra.mxu0 0.0
    %410 = vmatprep.subr.mxu0 0.0
    %411 = vmatpush1.msra.mxu0 0.0
    %412 = vmatprep.subr.mxu0 0.0
    %413 = vmatpush1.msra.mxu0 0.0
    %414 = vmatprep.subr.mxu0 0.0
    %415 = vmatpush1.msra.mxu0 0.0
    %416 = vmatprep.mubr.f32.mxu0 0.0
    %417 = vmatmul.mubr.f32.gmra.mrb[0].mxu0 %v347
    %v418 = vpop.f32.mrb[0].mxu0
    %v419 = vadd.f32 0.0, %v418
    %v420 = vpop.f32.mrb[0].mxu0
    %421 = vmatprep.mubr.f32.mxu0 0.0
    %422 = vmatmul.mubr.f32.gmra.mrb[0].mxu0 %v350
    %v423 = vpop.f32.mrb[0].mxu0
    %v424 = vadd.f32 0.0, %v423
    %v425 = vpop.f32.mrb[0].mxu0
    %426 = vdwg.mxu0
    %v428 = vsel %vm39, %v64, 0
    %v431 = vsel %vm39, %v65, 0
    %433 = vmatprep.subr.mxu0 0.0
    %434 = vmatpush1.msra.mxu0 %v92
    %435 = vmatprep.subr.mxu0 0.0
    %436 = vmatpush1.msra.mxu0 %v93
    %437 = vmatprep.subr.mxu0 0.0
    %438 = vmatpush1.msra.mxu0 0.0
    %439 = vmatprep.subr.mxu0 0.0
    %440 = vmatpush1.msra.mxu0 0.0
    %441 = vmatprep.subr.mxu0 0.0
    %442 = vmatpush1.msra.mxu0 0.0
    %443 = vmatprep.subr.mxu0 0.0
    %444 = vmatpush1.msra.mxu0 0.0
    %445 = vmatprep.subr.mxu0 0.0
    %446 = vmatpush1.msra.mxu0 0.0
    %447 = vmatprep.subr.mxu0 0.0
    %448 = vmatpush1.msra.mxu0 0.0
    %449 = vmatprep.subr.mxu0 0.0
    %450 = vmatpush1.msra.mxu0 0.0
    %451 = vmatprep.subr.mxu0 0.0
    %452 = vmatpush1.msra.mxu0 0.0
    %453 = vmatprep.subr.mxu0 0.0
    %454 = vmatpush1.msra.mxu0 0.0
    %455 = vmatprep.subr.mxu0 0.0
    %456 = vmatpush1.msra.mxu0 0.0
    %457 = vmatprep.subr.mxu0 0.0
    %458 = vmatpush1.msra.mxu0 0.0
    %459 = vmatprep.subr.mxu0 0.0
    %460 = vmatpush1.msra.mxu0 0.0
    %461 = vmatprep.subr.mxu0 0.0
    %462 = vmatpush1.msra.mxu0 0.0
    %463 = vmatprep.subr.mxu0 0.0
    %464 = vmatpush1.msra.mxu0 0.0
    %465 = vmatprep.subr.mxu0 0.0
    %466 = vmatpush1.msra.mxu0 0.0
    %467 = vmatprep.subr.mxu0 0.0
    %468 = vmatpush1.msra.mxu0 0.0
    %469 = vmatprep.subr.mxu0 0.0
    %470 = vmatpush1.msra.mxu0 0.0
    %471 = vmatprep.subr.mxu0 0.0
    %472 = vmatpush1.msra.mxu0 0.0
    %473 = vmatprep.subr.mxu0 0.0
    %474 = vmatpush1.msra.mxu0 0.0
    %475 = vmatprep.subr.mxu0 0.0
    %476 = vmatpush1.msra.mxu0 0.0
    %477 = vmatprep.subr.mxu0 0.0
    %478 = vmatpush1.msra.mxu0 0.0
    %479 = vmatprep.subr.mxu0 0.0
    %480 = vmatpush1.msra.mxu0 0.0
    %481 = vmatprep.subr.mxu0 0.0
    %482 = vmatpush1.msra.mxu0 0.0
    %483 = vmatprep.subr.mxu0 0.0
    %484 = vmatpush1.msra.mxu0 0.0
    %485 = vmatprep.subr.mxu0 0.0
    %486 = vmatpush1.msra.mxu0 0.0
    %487 = vmatprep.subr.mxu0 0.0
    %488 = vmatpush1.msra.mxu0 0.0
    %489 = vmatprep.subr.mxu0 0.0
    %490 = vmatpush1.msra.mxu0 0.0
    %491 = vmatprep.subr.mxu0 0.0
    %492 = vmatpush1.msra.mxu0 0.0
    %493 = vmatprep.subr.mxu0 0.0
    %494 = vmatpush1.msra.mxu0 0.0
    %495 = vmatprep.subr.mxu0 0.0
    %496 = vmatpush1.msra.mxu0 0.0
    %497 = vmatprep.mubr.f32.mxu0 0.0
    %498 = vmatmul.mubr.f32.gmra.mrb[0].mxu0 %v428
    %v499 = vpop.f32.mrb[0].mxu0
    %v500 = vadd.f32 0.0, %v499
    %v501 = vpop.f32.mrb[0].mxu0
    %502 = vmatprep.mubr.f32.mxu0 0.0
    %503 = vmatmul.mubr.f32.gmra.mrb[0].mxu0 %v431
    %v504 = vpop.f32.mrb[0].mxu0
    %v505 = vadd.f32 0.0, %v504
    %v506 = vpop.f32.mrb[0].mxu0
    %507 = vdwg.mxu0
    %v509 = vsel %vm39, %v66, 0
    %v512 = vsel %vm39, %v67, 0
    %514 = vmatprep.subr.mxu0 0.0
    %515 = vmatpush1.msra.mxu0 %v92
    %516 = vmatprep.subr.mxu0 0.0
    %517 = vmatpush1.msra.mxu0 %v93
    %518 = vmatprep.subr.mxu0 0.0
    %519 = vmatpush1.msra.mxu0 0.0
    %520 = vmatprep.subr.mxu0 0.0
    %521 = vmatpush1.msra.mxu0 0.0
    %522 = vmatprep.subr.mxu0 0.0
    %523 = vmatpush1.msra.mxu0 0.0
    %524 = vmatprep.subr.mxu0 0.0
    %525 = vmatpush1.msra.mxu0 0.0
    %526 = vmatprep.subr.mxu0 0.0
    %527 = vmatpush1.msra.mxu0 0.0
    %528 = vmatprep.subr.mxu0 0.0
    %529 = vmatpush1.msra.mxu0 0.0
    %530 = vmatprep.subr.mxu0 0.0
    %531 = vmatpush1.msra.mxu0 0.0
    %532 = vmatprep.subr.mxu0 0.0
    %533 = vmatpush1.msra.mxu0 0.0
    %534 = vmatprep.subr.mxu0 0.0
    %535 = vmatpush1.msra.mxu0 0.0
    %536 = vmatprep.subr.mxu0 0.0
    %537 = vmatpush1.msra.mxu0 0.0
    %538 = vmatprep.subr.mxu0 0.0
    %539 = vmatpush1.msra.mxu0 0.0
    %540 = vmatprep.subr.mxu0 0.0
    %541 = vmatpush1.msra.mxu0 0.0
    %542 = vmatprep.subr.mxu0 0.0
    %543 = vmatpush1.msra.mxu0 0.0
    %544 = vmatprep.subr.mxu0 0.0
    %545 = vmatpush1.msra.mxu0 0.0
    %546 = vmatprep.subr.mxu0 0.0
    %547 = vmatpush1.msra.mxu0 0.0
    %548 = vmatprep.subr.mxu0 0.0
    %549 = vmatpush1.msra.mxu0 0.0
    %550 = vmatprep.subr.mxu0 0.0
    %551 = vmatpush1.msra.mxu0 0.0
    %552 = vmatprep.subr.mxu0 0.0
    %553 = vmatpush1.msra.mxu0 0.0
    %554 = vmatprep.subr.mxu0 0.0
    %555 = vmatpush1.msra.mxu0 0.0
    %556 = vmatprep.subr.mxu0 0.0
    %557 = vmatpush1.msra.mxu0 0.0
    %558 = vmatprep.subr.mxu0 0.0
    %559 = vmatpush1.msra.mxu0 0.0
    %560 = vmatprep.subr.mxu0 0.0
    %561 = vmatpush1.msra.mxu0 0.0
    %562 = vmatprep.subr.mxu0 0.0
    %563 = vmatpush1.msra.mxu0 0.0
    %564 = vmatprep.subr.mxu0 0.0
    %565 = vmatpush1.msra.mxu0 0.0
    %566 = vmatprep.subr.mxu0 0.0
    %567 = vmatpush1.msra.mxu0 0.0
    %568 = vmatprep.subr.mxu0 0.0
    %569 = vmatpush1.msra.mxu0 0.0
    %570 = vmatprep.subr.mxu0 0.0
    %571 = vmatpush1.msra.mxu0 0.0
    %572 = vmatprep.subr.mxu0 0.0
    %573 = vmatpush1.msra.mxu0 0.0
    %574 = vmatprep.subr.mxu0 0.0
    %575 = vmatpush1.msra.mxu0 0.0
    %576 = vmatprep.subr.mxu0 0.0
    %577 = vmatpush1.msra.mxu0 0.0
    %578 = vmatprep.mubr.f32.mxu0 0.0
    %579 = vmatmul.mubr.f32.gmra.mrb[0].mxu0 %v509
    %v580 = vpop.f32.mrb[0].mxu0
    %v581 = vadd.f32 0.0, %v580
    %v582 = vpop.f32.mrb[0].mxu0
    %583 = vmatprep.mubr.f32.mxu0 0.0
    %584 = vmatmul.mubr.f32.gmra.mrb[0].mxu0 %v512
    %v585 = vpop.f32.mrb[0].mxu0
    %v586 = vadd.f32 0.0, %v585
    %v587 = vpop.f32.mrb[0].mxu0
    %588 = vdwg.mxu0
    %v590 = vsel %vm39, %v68, 0
    %v593 = vsel %vm39, %v69, 0
    %595 = vmatprep.subr.mxu0 0.0
    %596 = vmatpush1.msra.mxu0 %v92
    %597 = vmatprep.subr.mxu0 0.0
    %598 = vmatpush1.msra.mxu0 %v93
    %599 = vmatprep.subr.mxu0 0.0
    %600 = vmatpush1.msra.mxu0 0.0
    %601 = vmatprep.subr.mxu0 0.0
    %602 = vmatpush1.msra.mxu0 0.0
    %603 = vmatprep.subr.mxu0 0.0
    %604 = vmatpush1.msra.mxu0 0.0
    %605 = vmatprep.subr.mxu0 0.0
    %606 = vmatpush1.msra.mxu0 0.0
    %607 = vmatprep.subr.mxu0 0.0
    %608 = vmatpush1.msra.mxu0 0.0
    %609 = vmatprep.subr.mxu0 0.0
    %610 = vmatpush1.msra.mxu0 0.0
    %611 = vmatprep.subr.mxu0 0.0
    %612 = vmatpush1.msra.mxu0 0.0
    %613 = vmatprep.subr.mxu0 0.0
    %614 = vmatpush1.msra.mxu0 0.0
    %615 = vmatprep.subr.mxu0 0.0
    %616 = vmatpush1.msra.mxu0 0.0
    %617 = vmatprep.subr.mxu0 0.0
    %618 = vmatpush1.msra.mxu0 0.0
    %619 = vmatprep.subr.mxu0 0.0
    %620 = vmatpush1.msra.mxu0 0.0
    %621 = vmatprep.subr.mxu0 0.0
    %622 = vmatpush1.msra.mxu0 0.0
    %623 = vmatprep.subr.mxu0 0.0
    %624 = vmatpush1.msra.mxu0 0.0
    %625 = vmatprep.subr.mxu0 0.0
    %626 = vmatpush1.msra.mxu0 0.0
    %627 = vmatprep.subr.mxu0 0.0
    %628 = vmatpush1.msra.mxu0 0.0
    %629 = vmatprep.subr.mxu0 0.0
    %630 = vmatpush1.msra.mxu0 0.0
    %631 = vmatprep.subr.mxu0 0.0
    %632 = vmatpush1.msra.mxu0 0.0
    %633 = vmatprep.subr.mxu0 0.0
    %634 = vmatpush1.msra.mxu0 0.0
    %635 = vmatprep.subr.mxu0 0.0
    %636 = vmatpush1.msra.mxu0 0.0
    %637 = vmatprep.subr.mxu0 0.0
    %638 = vmatpush1.msra.mxu0 0.0
    %639 = vmatprep.subr.mxu0 0.0
    %640 = vmatpush1.msra.mxu0 0.0
    %641 = vmatprep.subr.mxu0 0.0
    %642 = vmatpush1.msra.mxu0 0.0
    %643 = vmatprep.subr.mxu0 0.0
    %644 = vmatpush1.msra.mxu0 0.0
    %645 = vmatprep.subr.mxu0 0.0
    %646 = vmatpush1.msra.mxu0 0.0
    %647 = vmatprep.subr.mxu0 0.0
    %648 = vmatpush1.msra.mxu0 0.0
    %649 = vmatprep.subr.mxu0 0.0
    %650 = vmatpush1.msra.mxu0 0.0
    %651 = vmatprep.subr.mxu0 0.0
    %652 = vmatpush1.msra.mxu0 0.0
    %653 = vmatprep.subr.mxu0 0.0
    %654 = vmatpush1.msra.mxu0 0.0
    %655 = vmatprep.subr.mxu0 0.0
    %656 = vmatpush1.msra.mxu0 0.0
    %657 = vmatprep.subr.mxu0 0.0
    %658 = vmatpush1.msra.mxu0 0.0
    %659 = vmatprep.mubr.f32.mxu0 0.0
    %660 = vmatmul.mubr.f32.gmra.mrb[0].mxu0 %v590
    %v661 = vpop.f32.mrb[0].mxu0
    %v662 = vadd.f32 0.0, %v661
    %v663 = vpop.f32.mrb[0].mxu0
    %664 = vmatprep.mubr.f32.mxu0 0.0
    %665 = vmatmul.mubr.f32.gmra.mrb[0].mxu0 %v593
    %v666 = vpop.f32.mrb[0].mxu0
    %v667 = vadd.f32 0.0, %v666
    %v668 = vpop.f32.mrb[0].mxu0
    %669 = vdwg.mxu0
    %v671 = vsel %vm39, %v70, 0
    %v674 = vsel %vm39, %v71, 0
    %676 = vmatprep.subr.mxu0 0.0
    %677 = vmatpush1.msra.mxu0 %v92
    %678 = vmatprep.subr.mxu0 0.0
    %679 = vmatpush1.msra.mxu0 %v93
    %680 = vmatprep.subr.mxu0 0.0
    %681 = vmatpush1.msra.mxu0 0.0
    %682 = vmatprep.subr.mxu0 0.0
    %683 = vmatpush1.msra.mxu0 0.0
    %684 = vmatprep.subr.mxu0 0.0
    %685 = vmatpush1.msra.mxu0 0.0
    %686 = vmatprep.subr.mxu0 0.0
    %687 = vmatpush1.msra.mxu0 0.0
    %688 = vmatprep.subr.mxu0 0.0
    %689 = vmatpush1.msra.mxu0 0.0
    %690 = vmatprep.subr.mxu0 0.0
    %691 = vmatpush1.msra.mxu0 0.0
    %692 = vmatprep.subr.mxu0 0.0
    %693 = vmatpush1.msra.mxu0 0.0
    %694 = vmatprep.subr.mxu0 0.0
    %695 = vmatpush1.msra.mxu0 0.0
    %696 = vmatprep.subr.mxu0 0.0
    %697 = vmatpush1.msra.mxu0 0.0
    %698 = vmatprep.subr.mxu0 0.0
    %699 = vmatpush1.msra.mxu0 0.0
    %700 = vmatprep.subr.mxu0 0.0
    %701 = vmatpush1.msra.mxu0 0.0
    %702 = vmatprep.subr.mxu0 0.0
    %703 = vmatpush1.msra.mxu0 0.0
    %704 = vmatprep.subr.mxu0 0.0
    %705 = vmatpush1.msra.mxu0 0.0
    %706 = vmatprep.subr.mxu0 0.0
    %707 = vmatpush1.msra.mxu0 0.0
    %708 = vmatprep.subr.mxu0 0.0
    %709 = vmatpush1.msra.mxu0 0.0
    %710 = vmatprep.subr.mxu0 0.0
    %711 = vmatpush1.msra.mxu0 0.0
    %712 = vmatprep.subr.mxu0 0.0
    %713 = vmatpush1.msra.mxu0 0.0
    %714 = vmatprep.subr.mxu0 0.0
    %715 = vmatpush1.msra.mxu0 0.0
    %716 = vmatprep.subr.mxu0 0.0
    %717 = vmatpush1.msra.mxu0 0.0
    %718 = vmatprep.subr.mxu0 0.0
    %719 = vmatpush1.msra.mxu0 0.0
    %720 = vmatprep.subr.mxu0 0.0
    %721 = vmatpush1.msra.mxu0 0.0
    %722 = vmatprep.subr.mxu0 0.0
    %723 = vmatpush1.msra.mxu0 0.0
    %724 = vmatprep.subr.mxu0 0.0
    %725 = vmatpush1.msra.mxu0 0.0
    %726 = vmatprep.subr.mxu0 0.0
    %727 = vmatpush1.msra.mxu0 0.0
    %728 = vmatprep.subr.mxu0 0.0
    %729 = vmatpush1.msra.mxu0 0.0
    %730 = vmatprep.subr.mxu0 0.0
    %731 = vmatpush1.msra.mxu0 0.0
    %732 = vmatprep.subr.mxu0 0.0
    %733 = vmatpush1.msra.mxu0 0.0
    %734 = vmatprep.subr.mxu0 0.0
    %735 = vmatpush1.msra.mxu0 0.0
    %736 = vmatprep.subr.mxu0 0.0
    %737 = vmatpush1.msra.mxu0 0.0
    %738 = vmatprep.subr.mxu0 0.0
    %739 = vmatpush1.msra.mxu0 0.0
    %740 = vmatprep.mubr.f32.mxu0 0.0
    %741 = vmatmul.mubr.f32.gmra.mrb[0].mxu0 %v671
    %v742 = vpop.f32.mrb[0].mxu0
    %v743 = vadd.f32 0.0, %v742
    %v744 = vpop.f32.mrb[0].mxu0
    %745 = vmatprep.mubr.f32.mxu0 0.0
    %746 = vmatmul.mubr.f32.gmra.mrb[0].mxu0 %v674
    %v747 = vpop.f32.mrb[0].mxu0
    %v748 = vadd.f32 0.0, %v747
    %v749 = vpop.f32.mrb[0].mxu0
    %750 = vdwg.mxu0
    %v752 = vsel %vm39, %v102, 0
    %754 = vmatprep.subr.mxu0 0.0
    %755 = vmatpush1.msra.mxu0 %v176
    %756 = vmatprep.subr.mxu0 0.0
    %757 = vmatpush1.msra.mxu0 %v181
    %758 = vmatprep.subr.mxu0 0.0
    %759 = vmatpush1.msra.mxu0 0.0
    %760 = vmatprep.subr.mxu0 0.0
    %761 = vmatpush1.msra.mxu0 0.0
    %762 = vmatprep.subr.mxu0 0.0
    %763 = vmatpush1.msra.mxu0 0.0
    %764 = vmatprep.subr.mxu0 0.0
    %765 = vmatpush1.msra.mxu0 0.0
    %766 = vmatprep.subr.mxu0 0.0
    %767 = vmatpush1.msra.mxu0 0.0
    %768 = vmatprep.subr.mxu0 0.0
    %769 = vmatpush1.msra.mxu0 0.0
    %770 = vmatprep.subr.mxu0 0.0
    %771 = vmatpush1.msra.mxu0 0.0
    %772 = vmatprep.subr.mxu0 0.0
    %773 = vmatpush1.msra.mxu0 0.0
    %774 = vmatprep.subr.mxu0 0.0
    %775 = vmatpush1.msra.mxu0 0.0
    %776 = vmatprep.subr.mxu0 0.0
    %777 = vmatpush1.msra.mxu0 0.0
    %778 = vmatprep.subr.mxu0 0.0
    %779 = vmatpush1.msra.mxu0 0.0
    %780 = vmatprep.subr.mxu0 0.0
    %781 = vmatpush1.msra.mxu0 0.0
    %782 = vmatprep.subr.mxu0 0.0
    %783 = vmatpush1.msra.mxu0 0.0
    %784 = vmatprep.subr.mxu0 0.0
    %785 = vmatpush1.msra.mxu0 0.0
    %786 = vmatprep.subr.mxu0 0.0
    %787 = vmatpush1.msra.mxu0 0.0
    %788 = vmatprep.subr.mxu0 0.0
    %789 = vmatpush1.msra.mxu0 0.0
    %790 = vmatprep.subr.mxu0 0.0
    %791 = vmatpush1.msra.mxu0 0.0
    %792 = vmatprep.subr.mxu0 0.0
    %793 = vmatpush1.msra.mxu0 0.0
    %794 = vmatprep.subr.mxu0 0.0
    %795 = vmatpush1.msra.mxu0 0.0
    %796 = vmatprep.subr.mxu0 0.0
    %797 = vmatpush1.msra.mxu0 0.0
    %798 = vmatprep.subr.mxu0 0.0
    %799 = vmatpush1.msra.mxu0 0.0
    %800 = vmatprep.subr.mxu0 0.0
    %801 = vmatpush1.msra.mxu0 0.0
    %802 = vmatprep.subr.mxu0 0.0
    %803 = vmatpush1.msra.mxu0 0.0
    %804 = vmatprep.subr.mxu0 0.0
    %805 = vmatpush1.msra.mxu0 0.0
    %806 = vmatprep.subr.mxu0 0.0
    %807 = vmatpush1.msra.mxu0 0.0
    %808 = vmatprep.subr.mxu0 0.0
    %809 = vmatpush1.msra.mxu0 0.0
    %810 = vmatprep.subr.mxu0 0.0
    %811 = vmatpush1.msra.mxu0 0.0
    %812 = vmatprep.subr.mxu0 0.0
    %813 = vmatpush1.msra.mxu0 0.0
    %814 = vmatprep.subr.mxu0 0.0
    %815 = vmatpush1.msra.mxu0 0.0
    %816 = vmatprep.subr.mxu0 0.0
    %817 = vmatpush1.msra.mxu0 0.0
    %818 = vmatprep.mubr.f32.mxu0 0.0
    %819 = vmatmul.mubr.f32.gmra.mrb[0].mxu0 %v752
    %v820 = vpop.f32.mrb[0].mxu0
    %v821 = vadd.f32 0.0, %v820
    %v822 = vpop.f32.mrb[0].mxu0
    %823 = vdwg.mxu0
    %824 = vmatprep.subr.mxu0 0.0
    %825 = vmatpush1.msra.mxu0 %v257
    %826 = vmatprep.subr.mxu0 0.0
    %827 = vmatpush1.msra.mxu0 %v262
    %828 = vmatprep.subr.mxu0 0.0
    %829 = vmatpush1.msra.mxu0 0.0
    %830 = vmatprep.subr.mxu0 0.0
    %831 = vmatpush1.msra.mxu0 0.0
    %832 = vmatprep.subr.mxu0 0.0
    %833 = vmatpush1.msra.mxu0 0.0
    %834 = vmatprep.subr.mxu0 0.0
    %835 = vmatpush1.msra.mxu0 0.0
    %836 = vmatprep.subr.mxu0 0.0
    %837 = vmatpush1.msra.mxu0 0.0
    %838 = vmatprep.subr.mxu0 0.0
    %839 = vmatpush1.msra.mxu0 0.0
    %840 = vmatprep.subr.mxu0 0.0
    %841 = vmatpush1.msra.mxu0 0.0
    %842 = vmatprep.subr.mxu0 0.0
    %843 = vmatpush1.msra.mxu0 0.0
    %844 = vmatprep.subr.mxu0 0.0
    %845 = vmatpush1.msra.mxu0 0.0
    %846 = vmatprep.subr.mxu0 0.0
    %847 = vmatpush1.msra.mxu0 0.0
    %848 = vmatprep.subr.mxu0 0.0
    %849 = vmatpush1.msra.mxu0 0.0
    %850 = vmatprep.subr.mxu0 0.0
    %851 = vmatpush1.msra.mxu0 0.0
    %852 = vmatprep.subr.mxu0 0.0
    %853 = vmatpush1.msra.mxu0 0.0
    %854 = vmatprep.subr.mxu0 0.0
    %855 = vmatpush1.msra.mxu0 0.0
    %856 = vmatprep.subr.mxu0 0.0
    %857 = vmatpush1.msra.mxu0 0.0
    %858 = vmatprep.subr.mxu0 0.0
    %859 = vmatpush1.msra.mxu0 0.0
    %860 = vmatprep.subr.mxu0 0.0
    %861 = vmatpush1.msra.mxu0 0.0
    %862 = vmatprep.subr.mxu0 0.0
    %863 = vmatpush1.msra.mxu0 0.0
    %864 = vmatprep.subr.mxu0 0.0
    %865 = vmatpush1.msra.mxu0 0.0
    %866 = vmatprep.subr.mxu0 0.0
    %867 = vmatpush1.msra.mxu0 0.0
    %868 = vmatprep.subr.mxu0 0.0
    %869 = vmatpush1.msra.mxu0 0.0
    %870 = vmatprep.subr.mxu0 0.0
    %871 = vmatpush1.msra.mxu0 0.0
    %872 = vmatprep.subr.mxu0 0.0
    %873 = vmatpush1.msra.mxu0 0.0
    %874 = vmatprep.subr.mxu0 0.0
    %875 = vmatpush1.msra.mxu0 0.0
    %876 = vmatprep.subr.mxu0 0.0
    %877 = vmatpush1.msra.mxu0 0.0
    %878 = vmatprep.subr.mxu0 0.0
    %879 = vmatpush1.msra.mxu0 0.0
    %880 = vmatprep.subr.mxu0 0.0
    %881 = vmatpush1.msra.mxu0 0.0
    %882 = vmatprep.subr.mxu0 0.0
    %883 = vmatpush1.msra.mxu0 0.0
    %884 = vmatprep.subr.mxu0 0.0
    %885 = vmatpush1.msra.mxu0 0.0
    %886 = vmatprep.subr.mxu0 0.0
    %887 = vmatpush1.msra.mxu0 0.0
    %888 = vmatprep.mubr.f32.mxu0 0.0
    %889 = vmatmul.mubr.f32.gmra.mrb[0].mxu0 %v752
    %v890 = vpop.f32.mrb[0].mxu0
    %v891 = vadd.f32 0.0, %v890
    %v892 = vpop.f32.mrb[0].mxu0
    %893 = vdwg.mxu0
    %894 = vmatprep.subr.mxu0 0.0
    %895 = vmatpush1.msra.mxu0 %v338
    %896 = vmatprep.subr.mxu0 0.0
    %897 = vmatpush1.msra.mxu0 %v343
    %898 = vmatprep.subr.mxu0 0.0
    %899 = vmatpush1.msra.mxu0 0.0
    %900 = vmatprep.subr.mxu0 0.0
    %901 = vmatpush1.msra.mxu0 0.0
    %902 = vmatprep.subr.mxu0 0.0
    %903 = vmatpush1.msra.mxu0 0.0
    %904 = vmatprep.subr.mxu0 0.0
    %905 = vmatpush1.msra.mxu0 0.0
    %906 = vmatprep.subr.mxu0 0.0
    %907 = vmatpush1.msra.mxu0 0.0
    %908 = vmatprep.subr.mxu0 0.0
    %909 = vmatpush1.msra.mxu0 0.0
    %910 = vmatprep.subr.mxu0 0.0
    %911 = vmatpush1.msra.mxu0 0.0
    %912 = vmatprep.subr.mxu0 0.0
    %913 = vmatpush1.msra.mxu0 0.0
    %914 = vmatprep.subr.mxu0 0.0
    %915 = vmatpush1.msra.mxu0 0.0
    %916 = vmatprep.subr.mxu0 0.0
    %917 = vmatpush1.msra.mxu0 0.0
    %918 = vmatprep.subr.mxu0 0.0
    %919 = vmatpush1.msra.mxu0 0.0
    %920 = vmatprep.subr.mxu0 0.0
    %921 = vmatpush1.msra.mxu0 0.0
    %922 = vmatprep.subr.mxu0 0.0
    %923 = vmatpush1.msra.mxu0 0.0
    %924 = vmatprep.subr.mxu0 0.0
    %925 = vmatpush1.msra.mxu0 0.0
    %926 = vmatprep.subr.mxu0 0.0
    %927 = vmatpush1.msra.mxu0 0.0
    %928 = vmatprep.subr.mxu0 0.0
    %929 = vmatpush1.msra.mxu0 0.0
    %930 = vmatprep.subr.mxu0 0.0
    %931 = vmatpush1.msra.mxu0 0.0
    %932 = vmatprep.subr.mxu0 0.0
    %933 = vmatpush1.msra.mxu0 0.0
    %934 = vmatprep.subr.mxu0 0.0
    %935 = vmatpush1.msra.mxu0 0.0
    %936 = vmatprep.subr.mxu0 0.0
    %937 = vmatpush1.msra.mxu0 0.0
    %938 = vmatprep.subr.mxu0 0.0
    %939 = vmatpush1.msra.mxu0 0.0
    %940 = vmatprep.subr.mxu0 0.0
    %941 = vmatpush1.msra.mxu0 0.0
    %942 = vmatprep.subr.mxu0 0.0
    %943 = vmatpush1.msra.mxu0 0.0
    %944 = vmatprep.subr.mxu0 0.0
    %945 = vmatpush1.msra.mxu0 0.0
    %946 = vmatprep.subr.mxu0 0.0
    %947 = vmatpush1.msra.mxu0 0.0
    %948 = vmatprep.subr.mxu0 0.0
    %949 = vmatpush1.msra.mxu0 0.0
    %950 = vmatprep.subr.mxu0 0.0
    %951 = vmatpush1.msra.mxu0 0.0
    %952 = vmatprep.subr.mxu0 0.0
    %953 = vmatpush1.msra.mxu0 0.0
    %954 = vmatprep.subr.mxu0 0.0
    %955 = vmatpush1.msra.mxu0 0.0
    %956 = vmatprep.subr.mxu0 0.0
    %957 = vmatpush1.msra.mxu0 0.0
    %958 = vmatprep.mubr.f32.mxu0 0.0
    %959 = vmatmul.mubr.f32.gmra.mrb[0].mxu0 %v752
    %v960 = vpop.f32.mrb[0].mxu0
    %v961 = vadd.f32 0.0, %v960
    %v962 = vpop.f32.mrb[0].mxu0
    %963 = vdwg.mxu0
    %964 = vmatprep.subr.mxu0 0.0
    %965 = vmatpush1.msra.mxu0 %v419
    %966 = vmatprep.subr.mxu0 0.0
    %967 = vmatpush1.msra.mxu0 %v424
    %968 = vmatprep.subr.mxu0 0.0
    %969 = vmatpush1.msra.mxu0 0.0
    %970 = vmatprep.subr.mxu0 0.0
    %971 = vmatpush1.msra.mxu0 0.0
    %972 = vmatprep.subr.mxu0 0.0
    %973 = vmatpush1.msra.mxu0 0.0
    %974 = vmatprep.subr.mxu0 0.0
    %975 = vmatpush1.msra.mxu0 0.0
    %976 = vmatprep.subr.mxu0 0.0
    %977 = vmatpush1.msra.mxu0 0.0
    %978 = vmatprep.subr.mxu0 0.0
    %979 = vmatpush1.msra.mxu0 0.0
    %980 = vmatprep.subr.mxu0 0.0
    %981 = vmatpush1.msra.mxu0 0.0
    %982 = vmatprep.subr.mxu0 0.0
    %983 = vmatpush1.msra.mxu0 0.0
    %984 = vmatprep.subr.mxu0 0.0
    %985 = vmatpush1.msra.mxu0 0.0
    %986 = vmatprep.subr.mxu0 0.0
    %987 = vmatpush1.msra.mxu0 0.0
    %988 = vmatprep.subr.mxu0 0.0
    %989 = vmatpush1.msra.mxu0 0.0
    %990 = vmatprep.subr.mxu0 0.0
    %991 = vmatpush1.msra.mxu0 0.0
    %992 = vmatprep.subr.mxu0 0.0
    %993 = vmatpush1.msra.mxu0 0.0
    %994 = vmatprep.subr.mxu0 0.0
    %995 = vmatpush1.msra.mxu0 0.0
    %996 = vmatprep.subr.mxu0 0.0
    %997 = vmatpush1.msra.mxu0 0.0
    %998 = vmatprep.subr.mxu0 0.0
    %999 = vmatpush1.msra.mxu0 0.0
    %1000 = vmatprep.subr.mxu0 0.0
    %1001 = vmatpush1.msra.mxu0 0.0
    %1002 = vmatprep.subr.mxu0 0.0
    %1003 = vmatpush1.msra.mxu0 0.0
    %1004 = vmatprep.subr.mxu0 0.0
    %1005 = vmatpush1.msra.mxu0 0.0
    %1006 = vmatprep.subr.mxu0 0.0
    %1007 = vmatpush1.msra.mxu0 0.0
    %1008 = vmatprep.subr.mxu0 0.0
    %1009 = vmatpush1.msra.mxu0 0.0
    %1010 = vmatprep.subr.mxu0 0.0
    %1011 = vmatpush1.msra.mxu0 0.0
    %1012 = vmatprep.subr.mxu0 0.0
    %1013 = vmatpush1.msra.mxu0 0.0
    %1014 = vmatprep.subr.mxu0 0.0
    %1015 = vmatpush1.msra.mxu0 0.0
    %1016 = vmatprep.subr.mxu0 0.0
    %1017 = vmatpush1.msra.mxu0 0.0
    %1018 = vmatprep.subr.mxu0 0.0
    %1019 = vmatpush1.msra.mxu0 0.0
    %1020 = vmatprep.subr.mxu0 0.0
    %1021 = vmatpush1.msra.mxu0 0.0
    %1022 = vmatprep.subr.mxu0 0.0
    %1023 = vmatpush1.msra.mxu0 0.0
    %1024 = vmatprep.subr.mxu0 0.0
    %1025 = vmatpush1.msra.mxu0 0.0
    %1026 = vmatprep.subr.mxu0 0.0
    %1027 = vmatpush1.msra.mxu0 0.0
    %1028 = vmatprep.mubr.f32.mxu0 0.0
    %1029 = vmatmul.mubr.f32.gmra.mrb[0].mxu0 %v752
    %v1030 = vpop.f32.mrb[0].mxu0
    %v1031 = vadd.f32 0.0, %v1030
    %v1032 = vpop.f32.mrb[0].mxu0
    %1033 = vdwg.mxu0
    %1034 = vmatprep.subr.mxu0 0.0
    %1035 = vmatpush1.msra.mxu0 %v500
    %1036 = vmatprep.subr.mxu0 0.0
    %1037 = vmatpush1.msra.mxu0 %v505
    %1038 = vmatprep.subr.mxu0 0.0
    %1039 = vmatpush1.msra.mxu0 0.0
    %1040 = vmatprep.subr.mxu0 0.0
    %1041 = vmatpush1.msra.mxu0 0.0
    %1042 = vmatprep.subr.mxu0 0.0
    %1043 = vmatpush1.msra.mxu0 0.0
    %1044 = vmatprep.subr.mxu0 0.0
    %1045 = vmatpush1.msra.mxu0 0.0
    %1046 = vmatprep.subr.mxu0 0.0
    %1047 = vmatpush1.msra.mxu0 0.0
    %1048 = vmatprep.subr.mxu0 0.0
    %1049 = vmatpush1.msra.mxu0 0.0
    %1050 = vmatprep.subr.mxu0 0.0
    %1051 = vmatpush1.msra.mxu0 0.0
    %1052 = vmatprep.subr.mxu0 0.0
    %1053 = vmatpush1.msra.mxu0 0.0
    %1054 = vmatprep.subr.mxu0 0.0
    %1055 = vmatpush1.msra.mxu0 0.0
    %1056 = vmatprep.subr.mxu0 0.0
    %1057 = vmatpush1.msra.mxu0 0.0
    %1058 = vmatprep.subr.mxu0 0.0
    %1059 = vmatpush1.msra.mxu0 0.0
    %1060 = vmatprep.subr.mxu0 0.0
    %1061 = vmatpush1.msra.mxu0 0.0
    %1062 = vmatprep.subr.mxu0 0.0
    %1063 = vmatpush1.msra.mxu0 0.0
    %1064 = vmatprep.subr.mxu0 0.0
    %1065 = vmatpush1.msra.mxu0 0.0
    %1066 = vmatprep.subr.mxu0 0.0
    %1067 = vmatpush1.msra.mxu0 0.0
    %1068 = vmatprep.subr.mxu0 0.0
    %1069 = vmatpush1.msra.mxu0 0.0
    %1070 = vmatprep.subr.mxu0 0.0
    %1071 = vmatpush1.msra.mxu0 0.0
    %1072 = vmatprep.subr.mxu0 0.0
    %1073 = vmatpush1.msra.mxu0 0.0
    %1074 = vmatprep.subr.mxu0 0.0
    %1075 = vmatpush1.msra.mxu0 0.0
    %1076 = vmatprep.subr.mxu0 0.0
    %1077 = vmatpush1.msra.mxu0 0.0
    %1078 = vmatprep.subr.mxu0 0.0
    %1079 = vmatpush1.msra.mxu0 0.0
    %1080 = vmatprep.subr.mxu0 0.0
    %1081 = vmatpush1.msra.mxu0 0.0
    %1082 = vmatprep.subr.mxu0 0.0
    %1083 = vmatpush1.msra.mxu0 0.0
    %1084 = vmatprep.subr.mxu0 0.0
    %1085 = vmatpush1.msra.mxu0 0.0
    %1086 = vmatprep.subr.mxu0 0.0
    %1087 = vmatpush1.msra.mxu0 0.0
    %1088 = vmatprep.subr.mxu0 0.0
    %1089 = vmatpush1.msra.mxu0 0.0
    %1090 = vmatprep.subr.mxu0 0.0
    %1091 = vmatpush1.msra.mxu0 0.0
    %1092 = vmatprep.subr.mxu0 0.0
    %1093 = vmatpush1.msra.mxu0 0.0
    %1094 = vmatprep.subr.mxu0 0.0
    %1095 = vmatpush1.msra.mxu0 0.0
    %1096 = vmatprep.subr.mxu0 0.0
    %1097 = vmatpush1.msra.mxu0 0.0
    %1098 = vmatprep.mubr.f32.mxu0 0.0
    %1099 = vmatmul.mubr.f32.gmra.mrb[0].mxu0 %v752
    %v1100 = vpop.f32.mrb[0].mxu0
    %v1101 = vadd.f32 0.0, %v1100
    %v1102 = vpop.f32.mrb[0].mxu0
    %1103 = vdwg.mxu0
    %1104 = vmatprep.subr.mxu0 0.0
    %1105 = vmatpush1.msra.mxu0 %v581
    %1106 = vmatprep.subr.mxu0 0.0
    %1107 = vmatpush1.msra.mxu0 %v586
    %1108 = vmatprep.subr.mxu0 0.0
    %1109 = vmatpush1.msra.mxu0 0.0
    %1110 = vmatprep.subr.mxu0 0.0
    %1111 = vmatpush1.msra.mxu0 0.0
    %1112 = vmatprep.subr.mxu0 0.0
    %1113 = vmatpush1.msra.mxu0 0.0
    %1114 = vmatprep.subr.mxu0 0.0
    %1115 = vmatpush1.msra.mxu0 0.0
    %1116 = vmatprep.subr.mxu0 0.0
    %1117 = vmatpush1.msra.mxu0 0.0
    %1118 = vmatprep.subr.mxu0 0.0
    %1119 = vmatpush1.msra.mxu0 0.0
    %1120 = vmatprep.subr.mxu0 0.0
    %1121 = vmatpush1.msra.mxu0 0.0
    %1122 = vmatprep.subr.mxu0 0.0
    %1123 = vmatpush1.msra.mxu0 0.0
    %1124 = vmatprep.subr.mxu0 0.0
    %1125 = vmatpush1.msra.mxu0 0.0
    %1126 = vmatprep.subr.mxu0 0.0
    %1127 = vmatpush1.msra.mxu0 0.0
    %1128 = vmatprep.subr.mxu0 0.0
    %1129 = vmatpush1.msra.mxu0 0.0
    %1130 = vmatprep.subr.mxu0 0.0
    %1131 = vmatpush1.msra.mxu0 0.0
    %1132 = vmatprep.subr.mxu0 0.0
    %1133 = vmatpush1.msra.mxu0 0.0
    %1134 = vmatprep.subr.mxu0 0.0
    %1135 = vmatpush1.msra.mxu0 0.0
    %1136 = vmatprep.subr.mxu0 0.0
    %1137 = vmatpush1.msra.mxu0 0.0
    %1138 = vmatprep.subr.mxu0 0.0
    %1139 = vmatpush1.msra.mxu0 0.0
    %1140 = vmatprep.subr.mxu0 0.0
    %1141 = vmatpush1.msra.mxu0 0.0
    %1142 = vmatprep.subr.mxu0 0.0
    %1143 = vmatpush1.msra.mxu0 0.0
    %1144 = vmatprep.subr.mxu0 0.0
    %1145 = vmatpush1.msra.mxu0 0.0
    %1146 = vmatprep.subr.mxu0 0.0
    %1147 = vmatpush1.msra.mxu0 0.0
    %1148 = vmatprep.subr.mxu0 0.0
    %1149 = vmatpush1.msra.mxu0 0.0
    %1150 = vmatprep.subr.mxu0 0.0
    %1151 = vmatpush1.msra.mxu0 0.0
    %1152 = vmatprep.subr.mxu0 0.0
    %1153 = vmatpush1.msra.mxu0 0.0
    %1154 = vmatprep.subr.mxu0 0.0
    %1155 = vmatpush1.msra.mxu0 0.0
    %1156 = vmatprep.subr.mxu0 0.0
    %1157 = vmatpush1.msra.mxu0 0.0
    %1158 = vmatprep.subr.mxu0 0.0
    %1159 = vmatpush1.msra.mxu0 0.0
    %1160 = vmatprep.subr.mxu0 0.0
    %1161 = vmatpush1.msra.mxu0 0.0
    %1162 = vmatprep.subr.mxu0 0.0
    %1163 = vmatpush1.msra.mxu0 0.0
    %1164 = vmatprep.subr.mxu0 0.0
    %1165 = vmatpush1.msra.mxu0 0.0
    %1166 = vmatprep.subr.mxu0 0.0
    %1167 = vmatpush1.msra.mxu0 0.0
    %1168 = vmatprep.mubr.f32.mxu0 0.0
    %1169 = vmatmul.mubr.f32.gmra.mrb[0].mxu0 %v752
    %v1170 = vpop.f32.mrb[0].mxu0
    %v1171 = vadd.f32 0.0, %v1170
    %v1172 = vpop.f32.mrb[0].mxu0
    %1173 = vdwg.mxu0
    %1174 = vmatprep.subr.mxu0 0.0
    %1175 = vmatpush1.msra.mxu0 %v662
    %1176 = vmatprep.subr.mxu0 0.0
    %1177 = vmatpush1.msra.mxu0 %v667
    %1178 = vmatprep.subr.mxu0 0.0
    %1179 = vmatpush1.msra.mxu0 0.0
    %1180 = vmatprep.subr.mxu0 0.0
    %1181 = vmatpush1.msra.mxu0 0.0
    %1182 = vmatprep.subr.mxu0 0.0
    %1183 = vmatpush1.msra.mxu0 0.0
    %1184 = vmatprep.subr.mxu0 0.0
    %1185 = vmatpush1.msra.mxu0 0.0
    %1186 = vmatprep.subr.mxu0 0.0
    %1187 = vmatpush1.msra.mxu0 0.0
    %1188 = vmatprep.subr.mxu0 0.0
    %1189 = vmatpush1.msra.mxu0 0.0
    %1190 = vmatprep.subr.mxu0 0.0
    %1191 = vmatpush1.msra.mxu0 0.0
    %1192 = vmatprep.subr.mxu0 0.0
    %1193 = vmatpush1.msra.mxu0 0.0
    %1194 = vmatprep.subr.mxu0 0.0
    %1195 = vmatpush1.msra.mxu0 0.0
    %1196 = vmatprep.subr.mxu0 0.0
    %1197 = vmatpush1.msra.mxu0 0.0
    %1198 = vmatprep.subr.mxu0 0.0
    %1199 = vmatpush1.msra.mxu0 0.0
    %1200 = vmatprep.subr.mxu0 0.0
    %1201 = vmatpush1.msra.mxu0 0.0
    %1202 = vmatprep.subr.mxu0 0.0
    %1203 = vmatpush1.msra.mxu0 0.0
    %1204 = vmatprep.subr.mxu0 0.0
    %1205 = vmatpush1.msra.mxu0 0.0
    %1206 = vmatprep.subr.mxu0 0.0
    %1207 = vmatpush1.msra.mxu0 0.0
    %1208 = vmatprep.subr.mxu0 0.0
    %1209 = vmatpush1.msra.mxu0 0.0
    %1210 = vmatprep.subr.mxu0 0.0
    %1211 = vmatpush1.msra.mxu0 0.0
    %1212 = vmatprep.subr.mxu0 0.0
    %1213 = vmatpush1.msra.mxu0 0.0
    %1214 = vmatprep.subr.mxu0 0.0
    %1215 = vmatpush1.msra.mxu0 0.0
    %1216 = vmatprep.subr.mxu0 0.0
    %1217 = vmatpush1.msra.mxu0 0.0
    %1218 = vmatprep.subr.mxu0 0.0
    %1219 = vmatpush1.msra.mxu0 0.0
    %1220 = vmatprep.subr.mxu0 0.0
    %1221 = vmatpush1.msra.mxu0 0.0
    %1222 = vmatprep.subr.mxu0 0.0
    %1223 = vmatpush1.msra.mxu0 0.0
    %1224 = vmatprep.subr.mxu0 0.0
    %1225 = vmatpush1.msra.mxu0 0.0
    %1226 = vmatprep.subr.mxu0 0.0
    %1227 = vmatpush1.msra.mxu0 0.0
    %1228 = vmatprep.subr.mxu0 0.0
    %1229 = vmatpush1.msra.mxu0 0.0
    %1230 = vmatprep.subr.mxu0 0.0
    %1231 = vmatpush1.msra.mxu0 0.0
    %1232 = vmatprep.subr.mxu0 0.0
    %1233 = vmatpush1.msra.mxu0 0.0
    %1234 = vmatprep.subr.mxu0 0.0
    %1235 = vmatpush1.msra.mxu0 0.0
    %1236 = vmatprep.subr.mxu0 0.0
    %1237 = vmatpush1.msra.mxu0 0.0
    %1238 = vmatprep.mubr.f32.mxu0 0.0
    %1239 = vmatmul.mubr.f32.gmra.mrb[0].mxu0 %v752
    %v1240 = vpop.f32.mrb[0].mxu0
    %v1241 = vadd.f32 0.0, %v1240
    %v1242 = vpop.f32.mrb[0].mxu0
    %1243 = vdwg.mxu0
    %1244 = vmatprep.subr.mxu0 0.0
    %1245 = vmatpush1.msra.mxu0 %v743
    %1246 = vmatprep.subr.mxu0 0.0
    %1247 = vmatpush1.msra.mxu0 %v748
    %1248 = vmatprep.subr.mxu0 0.0
    %1249 = vmatpush1.msra.mxu0 0.0
    %1250 = vmatprep.subr.mxu0 0.0
    %1251 = vmatpush1.msra.mxu0 0.0
    %1252 = vmatprep.subr.mxu0 0.0
    %1253 = vmatpush1.msra.mxu0 0.0
    %1254 = vmatprep.subr.mxu0 0.0
    %1255 = vmatpush1.msra.mxu0 0.0
    %1256 = vmatprep.subr.mxu0 0.0
    %1257 = vmatpush1.msra.mxu0 0.0
    %1258 = vmatprep.subr.mxu0 0.0
    %1259 = vmatpush1.msra.mxu0 0.0
    %1260 = vmatprep.subr.mxu0 0.0
    %1261 = vmatpush1.msra.mxu0 0.0
    %1262 = vmatprep.subr.mxu0 0.0
    %1263 = vmatpush1.msra.mxu0 0.0
    %1264 = vmatprep.subr.mxu0 0.0
    %1265 = vmatpush1.msra.mxu0 0.0
    %1266 = vmatprep.subr.mxu0 0.0
    %1267 = vmatpush1.msra.mxu0 0.0
    %1268 = vmatprep.subr.mxu0 0.0
    %1269 = vmatpush1.msra.mxu0 0.0
    %1270 = vmatprep.subr.mxu0 0.0
    %1271 = vmatpush1.msra.mxu0 0.0
    %1272 = vmatprep.subr.mxu0 0.0
    %1273 = vmatpush1.msra.mxu0 0.0
    %1274 = vmatprep.subr.mxu0 0.0
    %1275 = vmatpush1.msra.mxu0 0.0
    %1276 = vmatprep.subr.mxu0 0.0
    %1277 = vmatpush1.msra.mxu0 0.0
    %1278 = vmatprep.subr.mxu0 0.0
    %1279 = vmatpush1.msra.mxu0 0.0
    %1280 = vmatprep.subr.mxu0 0.0
    %1281 = vmatpush1.msra.mxu0 0.0
    %1282 = vmatprep.subr.mxu0 0.0
    %1283 = vmatpush1.msra.mxu0 0.0
    %1284 = vmatprep.subr.mxu0 0.0
    %1285 = vmatpush1.msra.mxu0 0.0
    %1286 = vmatprep.subr.mxu0 0.0
    %1287 = vmatpush1.msra.mxu0 0.0
    %1288 = vmatprep.subr.mxu0 0.0
    %1289 = vmatpush1.msra.mxu0 0.0
    %1290 = vmatprep.subr.mxu0 0.0
    %1291 = vmatpush1.msra.mxu0 0.0
    %1292 = vmatprep.subr.mxu0 0.0
    %1293 = vmatpush1.msra.mxu0 0.0
    %1294 = vmatprep.subr.mxu0 0.0
    %1295 = vmatpush1.msra.mxu0 0.0
    %1296 = vmatprep.subr.mxu0 0.0
    %1297 = vmatpush1.msra.mxu0 0.0
    %1298 = vmatprep.subr.mxu0 0.0
    %1299 = vmatpush1.msra.mxu0 0.0
    %1300 = vmatprep.subr.mxu0 0.0
    %1301 = vmatpush1.msra.mxu0 0.0
    %1302 = vmatprep.subr.mxu0 0.0
    %1303 = vmatpush1.msra.mxu0 0.0
    %1304 = vmatprep.subr.mxu0 0.0
    %1305 = vmatpush1.msra.mxu0 0.0
    %1306 = vmatprep.subr.mxu0 0.0
    %1307 = vmatpush1.msra.mxu0 0.0
    %1308 = vmatprep.mubr.f32.mxu0 0.0
    %1309 = vmatmul.mubr.f32.gmra.mrb[0].mxu0 %v752
    %v1310 = vpop.f32.mrb[0].mxu0
    %v1311 = vadd.f32 0.0, %v1310
    %v1312 = vpop.f32.mrb[0].mxu0
    %1313 = vdwg.mxu0
    %vm1314 = vcmask 64512
    %1315 = vst.msk [vmem:[#allocation5] sm:$0xff] %vm1314, %v821
    %1316 = vst.msk [vmem:[#allocation5 + $0x10] sm:$0xff] %vm1314, %v891
    %1317 = vst.msk [vmem:[#allocation5 + $0x20] sm:$0xff] %vm1314, %v961
    %1318 = vst.msk [vmem:[#allocation5 + $0x30] sm:$0xff] %vm1314, %v1031
    %1319 = vst.msk [vmem:[#allocation5 + $0x40] sm:$0xff] %vm1314, %v1101
    %1320 = vst.msk [vmem:[#allocation5 + $0x50] sm:$0xff] %vm1314, %v1171
    %1321 = vst.msk [vmem:[#allocation5 + $0x60] sm:$0xff] %vm1314, %v1241
    %1322 = vst.msk [vmem:[#allocation5 + $0x70] sm:$0xff] %vm1314, %v1311
    %v1324 = vsel %vm1314, %v821, 0
    %1326 = vmatprep.subr.mxu0 0.0
    %1327 = vmatpush1.msra.mxu0 %v92
    %1328 = vmatprep.subr.mxu0 0.0
    %1329 = vmatpush1.msra.mxu0 0.0
    %1330 = vmatprep.subr.mxu0 0.0
    %1331 = vmatpush1.msra.mxu0 0.0
    %1332 = vmatprep.subr.mxu0 0.0
    %1333 = vmatpush1.msra.mxu0 0.0
    %1334 = vmatprep.subr.mxu0 0.0
    %1335 = vmatpush1.msra.mxu0 0.0
    %1336 = vmatprep.subr.mxu0 0.0
    %1337 = vmatpush1.msra.mxu0 0.0
    %1338 = vmatprep.subr.mxu0 0.0
    %1339 = vmatpush1.msra.mxu0 0.0
    %1340 = vmatprep.subr.mxu0 0.0
    %1341 = vmatpush1.msra.mxu0 0.0
    %1342 = vmatprep.subr.mxu0 0.0
    %1343 = vmatpush1.msra.mxu0 0.0
    %1344 = vmatprep.subr.mxu0 0.0
    %1345 = vmatpush1.msra.mxu0 0.0
    %1346 = vmatprep.subr.mxu0 0.0
    %1347 = vmatpush1.msra.mxu0 0.0
    %1348 = vmatprep.subr.mxu0 0.0
    %1349 = vmatpush1.msra.mxu0 0.0
    %1350 = vmatprep.subr.mxu0 0.0
    %1351 = vmatpush1.msra.mxu0 0.0
    %1352 = vmatprep.subr.mxu0 0.0
    %1353 = vmatpush1.msra.mxu0 0.0
    %1354 = vmatprep.subr.mxu0 0.0
    %1355 = vmatpush1.msra.mxu0 0.0
    %1356 = vmatprep.subr.mxu0 0.0
    %1357 = vmatpush1.msra.mxu0 0.0
    %1358 = vmatprep.subr.mxu0 0.0
    %1359 = vmatpush1.msra.mxu0 0.0
    %1360 = vmatprep.subr.mxu0 0.0
    %1361 = vmatpush1.msra.mxu0 0.0
    %1362 = vmatprep.subr.mxu0 0.0
    %1363 = vmatpush1.msra.mxu0 0.0
    %1364 = vmatprep.subr.mxu0 0.0
    %1365 = vmatpush1.msra.mxu0 0.0
    %1366 = vmatprep.subr.mxu0 0.0
    %1367 = vmatpush1.msra.mxu0 0.0
    %1368 = vmatprep.subr.mxu0 0.0
    %1369 = vmatpush1.msra.mxu0 0.0
    %1370 = vmatprep.subr.mxu0 0.0
    %1371 = vmatpush1.msra.mxu0 0.0
    %1372 = vmatprep.subr.mxu0 0.0
    %1373 = vmatpush1.msra.mxu0 0.0
    %1374 = vmatprep.subr.mxu0 0.0
    %1375 = vmatpush1.msra.mxu0 0.0
    %1376 = vmatprep.subr.mxu0 0.0
    %1377 = vmatpush1.msra.mxu0 0.0
    %1378 = vmatprep.subr.mxu0 0.0
    %1379 = vmatpush1.msra.mxu0 0.0
    %1380 = vmatprep.subr.mxu0 0.0
    %1381 = vmatpush1.msra.mxu0 0.0
    %1382 = vmatprep.subr.mxu0 0.0
    %1383 = vmatpush1.msra.mxu0 0.0
    %1384 = vmatprep.subr.mxu0 0.0
    %1385 = vmatpush1.msra.mxu0 0.0
    %1386 = vmatprep.subr.mxu0 0.0
    %1387 = vmatpush1.msra.mxu0 0.0
    %1388 = vmatprep.subr.mxu0 0.0
    %1389 = vmatpush1.msra.mxu0 0.0
    %1390 = vmatprep.mubr.f32.mxu0 0.0
    %1391 = vmatmul.mubr.f32.gmra.mrb[0].mxu0 %v1324
    %v1392 = vpop.f32.mrb[0].mxu0
    %v1393 = vadd.f32 0.0, %v1392
    %v1394 = vpop.f32.mrb[0].mxu0
    %1395 = vdwg.mxu0
    %v1397 = vsel %vm1314, %v891, 0
    %1399 = vmatprep.subr.mxu0 0.0
    %1400 = vmatpush1.msra.mxu0 %v92
    %1401 = vmatprep.subr.mxu0 0.0
    %1402 = vmatpush1.msra.mxu0 0.0
    %1403 = vmatprep.subr.mxu0 0.0
    %1404 = vmatpush1.msra.mxu0 0.0
    %1405 = vmatprep.subr.mxu0 0.0
    %1406 = vmatpush1.msra.mxu0 0.0
    %1407 = vmatprep.subr.mxu0 0.0
    %1408 = vmatpush1.msra.mxu0 0.0
    %1409 = vmatprep.subr.mxu0 0.0
    %1410 = vmatpush1.msra.mxu0 0.0
    %1411 = vmatprep.subr.mxu0 0.0
    %1412 = vmatpush1.msra.mxu0 0.0
    %1413 = vmatprep.subr.mxu0 0.0
    %1414 = vmatpush1.msra.mxu0 0.0
    %1415 = vmatprep.subr.mxu0 0.0
    %1416 = vmatpush1.msra.mxu0 0.0
    %1417 = vmatprep.subr.mxu0 0.0
    %1418 = vmatpush1.msra.mxu0 0.0
    %1419 = vmatprep.subr.mxu0 0.0
    %1420 = vmatpush1.msra.mxu0 0.0
    %1421 = vmatprep.subr.mxu0 0.0
    %1422 = vmatpush1.msra.mxu0 0.0
    %1423 = vmatprep.subr.mxu0 0.0
    %1424 = vmatpush1.msra.mxu0 0.0
    %1425 = vmatprep.subr.mxu0 0.0
    %1426 = vmatpush1.msra.mxu0 0.0
    %1427 = vmatprep.subr.mxu0 0.0
    %1428 = vmatpush1.msra.mxu0 0.0
    %1429 = vmatprep.subr.mxu0 0.0
    %1430 = vmatpush1.msra.mxu0 0.0
    %1431 = vmatprep.subr.mxu0 0.0
    %1432 = vmatpush1.msra.mxu0 0.0
    %1433 = vmatprep.subr.mxu0 0.0
    %1434 = vmatpush1.msra.mxu0 0.0
    %1435 = vmatprep.subr.mxu0 0.0
    %1436 = vmatpush1.msra.mxu0 0.0
    %1437 = vmatprep.subr.mxu0 0.0
    %1438 = vmatpush1.msra.mxu0 0.0
    %1439 = vmatprep.subr.mxu0 0.0
    %1440 = vmatpush1.msra.mxu0 0.0
    %1441 = vmatprep.subr.mxu0 0.0
    %1442 = vmatpush1.msra.mxu0 0.0
    %1443 = vmatprep.subr.mxu0 0.0
    %1444 = vmatpush1.msra.mxu0 0.0
    %1445 = vmatprep.subr.mxu0 0.0
    %1446 = vmatpush1.msra.mxu0 0.0
    %1447 = vmatprep.subr.mxu0 0.0
    %1448 = vmatpush1.msra.mxu0 0.0
    %1449 = vmatprep.subr.mxu0 0.0
    %1450 = vmatpush1.msra.mxu0 0.0
    %1451 = vmatprep.subr.mxu0 0.0
    %1452 = vmatpush1.msra.mxu0 0.0
    %1453 = vmatprep.subr.mxu0 0.0
    %1454 = vmatpush1.msra.mxu0 0.0
    %1455 = vmatprep.subr.mxu0 0.0
    %1456 = vmatpush1.msra.mxu0 0.0
    %1457 = vmatprep.subr.mxu0 0.0
    %1458 = vmatpush1.msra.mxu0 0.0
    %1459 = vmatprep.subr.mxu0 0.0
    %1460 = vmatpush1.msra.mxu0 0.0
    %1461 = vmatprep.subr.mxu0 0.0
    %1462 = vmatpush1.msra.mxu0 0.0
    %1463 = vmatprep.mubr.f32.mxu0 0.0
    %1464 = vmatmul.mubr.f32.gmra.mrb[0].mxu0 %v1397
    %v1465 = vpop.f32.mrb[0].mxu0
    %v1466 = vadd.f32 0.0, %v1465
    %v1467 = vpop.f32.mrb[0].mxu0
    %1468 = vdwg.mxu0
    %v1470 = vsel %vm1314, %v961, 0
    %1472 = vmatprep.subr.mxu0 0.0
    %1473 = vmatpush1.msra.mxu0 %v92
    %1474 = vmatprep.subr.mxu0 0.0
    %1475 = vmatpush1.msra.mxu0 0.0
    %1476 = vmatprep.subr.mxu0 0.0
    %1477 = vmatpush1.msra.mxu0 0.0
    %1478 = vmatprep.subr.mxu0 0.0
    %1479 = vmatpush1.msra.mxu0 0.0
    %1480 = vmatprep.subr.mxu0 0.0
    %1481 = vmatpush1.msra.mxu0 0.0
    %1482 = vmatprep.subr.mxu0 0.0
    %1483 = vmatpush1.msra.mxu0 0.0
    %1484 = vmatprep.subr.mxu0 0.0
    %1485 = vmatpush1.msra.mxu0 0.0
    %1486 = vmatprep.subr.mxu0 0.0
    %1487 = vmatpush1.msra.mxu0 0.0
    %1488 = vmatprep.subr.mxu0 0.0
    %1489 = vmatpush1.msra.mxu0 0.0
    %1490 = vmatprep.subr.mxu0 0.0
    %1491 = vmatpush1.msra.mxu0 0.0
    %1492 = vmatprep.subr.mxu0 0.0
    %1493 = vmatpush1.msra.mxu0 0.0
    %1494 = vmatprep.subr.mxu0 0.0
    %1495 = vmatpush1.msra.mxu0 0.0
    %1496 = vmatprep.subr.mxu0 0.0
    %1497 = vmatpush1.msra.mxu0 0.0
    %1498 = vmatprep.subr.mxu0 0.0
    %1499 = vmatpush1.msra.mxu0 0.0
    %1500 = vmatprep.subr.mxu0 0.0
    %1501 = vmatpush1.msra.mxu0 0.0
    %1502 = vmatprep.subr.mxu0 0.0
    %1503 = vmatpush1.msra.mxu0 0.0
    %1504 = vmatprep.subr.mxu0 0.0
    %1505 = vmatpush1.msra.mxu0 0.0
    %1506 = vmatprep.subr.mxu0 0.0
    %1507 = vmatpush1.msra.mxu0 0.0
    %1508 = vmatprep.subr.mxu0 0.0
    %1509 = vmatpush1.msra.mxu0 0.0
    %1510 = vmatprep.subr.mxu0 0.0
    %1511 = vmatpush1.msra.mxu0 0.0
    %1512 = vmatprep.subr.mxu0 0.0
    %1513 = vmatpush1.msra.mxu0 0.0
    %1514 = vmatprep.subr.mxu0 0.0
    %1515 = vmatpush1.msra.mxu0 0.0
    %1516 = vmatprep.subr.mxu0 0.0
    %1517 = vmatpush1.msra.mxu0 0.0
    %1518 = vmatprep.subr.mxu0 0.0
    %1519 = vmatpush1.msra.mxu0 0.0
    %1520 = vmatprep.subr.mxu0 0.0
    %1521 = vmatpush1.msra.mxu0 0.0
    %1522 = vmatprep.subr.mxu0 0.0
    %1523 = vmatpush1.msra.mxu0 0.0
    %1524 = vmatprep.subr.mxu0 0.0
    %1525 = vmatpush1.msra.mxu0 0.0
    %1526 = vmatprep.subr.mxu0 0.0
    %1527 = vmatpush1.msra.mxu0 0.0
    %1528 = vmatprep.subr.mxu0 0.0
    %1529 = vmatpush1.msra.mxu0 0.0
    %1530 = vmatprep.subr.mxu0 0.0
    %1531 = vmatpush1.msra.mxu0 0.0
    %1532 = vmatprep.subr.mxu0 0.0
    %1533 = vmatpush1.msra.mxu0 0.0
    %1534 = vmatprep.subr.mxu0 0.0
    %1535 = vmatpush1.msra.mxu0 0.0
    %1536 = vmatprep.mubr.f32.mxu0 0.0
    %1537 = vmatmul.mubr.f32.gmra.mrb[0].mxu0 %v1470
    %v1538 = vpop.f32.mrb[0].mxu0
    %v1539 = vadd.f32 0.0, %v1538
    %v1540 = vpop.f32.mrb[0].mxu0
    %1541 = vdwg.mxu0
    %v1543 = vsel %vm1314, %v1031, 0
    %1545 = vmatprep.subr.mxu0 0.0
    %1546 = vmatpush1.msra.mxu0 %v92
    %1547 = vmatprep.subr.mxu0 0.0
    %1548 = vmatpush1.msra.mxu0 0.0
    %1549 = vmatprep.subr.mxu0 0.0
    %1550 = vmatpush1.msra.mxu0 0.0
    %1551 = vmatprep.subr.mxu0 0.0
    %1552 = vmatpush1.msra.mxu0 0.0
    %1553 = vmatprep.subr.mxu0 0.0
    %1554 = vmatpush1.msra.mxu0 0.0
    %1555 = vmatprep.subr.mxu0 0.0
    %1556 = vmatpush1.msra.mxu0 0.0
    %1557 = vmatprep.subr.mxu0 0.0
    %1558 = vmatpush1.msra.mxu0 0.0
    %1559 = vmatprep.subr.mxu0 0.0
    %1560 = vmatpush1.msra.mxu0 0.0
    %1561 = vmatprep.subr.mxu0 0.0
    %1562 = vmatpush1.msra.mxu0 0.0
    %1563 = vmatprep.subr.mxu0 0.0
    %1564 = vmatpush1.msra.mxu0 0.0
    %1565 = vmatprep.subr.mxu0 0.0
    %1566 = vmatpush1.msra.mxu0 0.0
    %1567 = vmatprep.subr.mxu0 0.0
    %1568 = vmatpush1.msra.mxu0 0.0
    %1569 = vmatprep.subr.mxu0 0.0
    %1570 = vmatpush1.msra.mxu0 0.0
    %1571 = vmatprep.subr.mxu0 0.0
    %1572 = vmatpush1.msra.mxu0 0.0
    %1573 = vmatprep.subr.mxu0 0.0
    %1574 = vmatpush1.msra.mxu0 0.0
    %1575 = vmatprep.subr.mxu0 0.0
    %1576 = vmatpush1.msra.mxu0 0.0
    %1577 = vmatprep.subr.mxu0 0.0
    %1578 = vmatpush1.msra.mxu0 0.0
    %1579 = vmatprep.subr.mxu0 0.0
    %1580 = vmatpush1.msra.mxu0 0.0
    %1581 = vmatprep.subr.mxu0 0.0
    %1582 = vmatpush1.msra.mxu0 0.0
    %1583 = vmatprep.subr.mxu0 0.0
    %1584 = vmatpush1.msra.mxu0 0.0
    %1585 = vmatprep.subr.mxu0 0.0
    %1586 = vmatpush1.msra.mxu0 0.0
    %1587 = vmatprep.subr.mxu0 0.0
    %1588 = vmatpush1.msra.mxu0 0.0
    %1589 = vmatprep.subr.mxu0 0.0
    %1590 = vmatpush1.msra.mxu0 0.0
    %1591 = vmatprep.subr.mxu0 0.0
    %1592 = vmatpush1.msra.mxu0 0.0
    %1593 = vmatprep.subr.mxu0 0.0
    %1594 = vmatpush1.msra.mxu0 0.0
    %1595 = vmatprep.subr.mxu0 0.0
    %1596 = vmatpush1.msra.mxu0 0.0
    %1597 = vmatprep.subr.mxu0 0.0
    %1598 = vmatpush1.msra.mxu0 0.0
    %1599 = vmatprep.subr.mxu0 0.0
    %1600 = vmatpush1.msra.mxu0 0.0
    %1601 = vmatprep.subr.mxu0 0.0
    %1602 = vmatpush1.msra.mxu0 0.0
    %1603 = vmatprep.subr.mxu0 0.0
    %1604 = vmatpush1.msra.mxu0 0.0
    %1605 = vmatprep.subr.mxu0 0.0
    %1606 = vmatpush1.msra.mxu0 0.0
    %1607 = vmatprep.subr.mxu0 0.0
    %1608 = vmatpush1.msra.mxu0 0.0
    %1609 = vmatprep.mubr.f32.mxu0 0.0
    %1610 = vmatmul.mubr.f32.gmra.mrb[0].mxu0 %v1543
    %v1611 = vpop.f32.mrb[0].mxu0
    %v1612 = vadd.f32 0.0, %v1611
    %v1613 = vpop.f32.mrb[0].mxu0
    %1614 = vdwg.mxu0
    %v1616 = vsel %vm1314, %v1101, 0
    %1618 = vmatprep.subr.mxu0 0.0
    %1619 = vmatpush1.msra.mxu0 %v92
    %1620 = vmatprep.subr.mxu0 0.0
    %1621 = vmatpush1.msra.mxu0 0.0
    %1622 = vmatprep.subr.mxu0 0.0
    %1623 = vmatpush1.msra.mxu0 0.0
    %1624 = vmatprep.subr.mxu0 0.0
    %1625 = vmatpush1.msra.mxu0 0.0
    %1626 = vmatprep.subr.mxu0 0.0
    %1627 = vmatpush1.msra.mxu0 0.0
    %1628 = vmatprep.subr.mxu0 0.0
    %1629 = vmatpush1.msra.mxu0 0.0
    %1630 = vmatprep.subr.mxu0 0.0
    %1631 = vmatpush1.msra.mxu0 0.0
    %1632 = vmatprep.subr.mxu0 0.0
    %1633 = vmatpush1.msra.mxu0 0.0
    %1634 = vmatprep.subr.mxu0 0.0
    %1635 = vmatpush1.msra.mxu0 0.0
    %1636 = vmatprep.subr.mxu0 0.0
    %1637 = vmatpush1.msra.mxu0 0.0
    %1638 = vmatprep.subr.mxu0 0.0
    %1639 = vmatpush1.msra.mxu0 0.0
    %1640 = vmatprep.subr.mxu0 0.0
    %1641 = vmatpush1.msra.mxu0 0.0
    %1642 = vmatprep.subr.mxu0 0.0
    %1643 = vmatpush1.msra.mxu0 0.0
    %1644 = vmatprep.subr.mxu0 0.0
    %1645 = vmatpush1.msra.mxu0 0.0
    %1646 = vmatprep.subr.mxu0 0.0
    %1647 = vmatpush1.msra.mxu0 0.0
    %1648 = vmatprep.subr.mxu0 0.0
    %1649 = vmatpush1.msra.mxu0 0.0
    %1650 = vmatprep.subr.mxu0 0.0
    %1651 = vmatpush1.msra.mxu0 0.0
    %1652 = vmatprep.subr.mxu0 0.0
    %1653 = vmatpush1.msra.mxu0 0.0
    %1654 = vmatprep.subr.mxu0 0.0
    %1655 = vmatpush1.msra.mxu0 0.0
    %1656 = vmatprep.subr.mxu0 0.0
    %1657 = vmatpush1.msra.mxu0 0.0
    %1658 = vmatprep.subr.mxu0 0.0
    %1659 = vmatpush1.msra.mxu0 0.0
    %1660 = vmatprep.subr.mxu0 0.0
    %1661 = vmatpush1.msra.mxu0 0.0
    %1662 = vmatprep.subr.mxu0 0.0
    %1663 = vmatpush1.msra.mxu0 0.0
    %1664 = vmatprep.subr.mxu0 0.0
    %1665 = vmatpush1.msra.mxu0 0.0
    %1666 = vmatprep.subr.mxu0 0.0
    %1667 = vmatpush1.msra.mxu0 0.0
    %1668 = vmatprep.subr.mxu0 0.0
    %1669 = vmatpush1.msra.mxu0 0.0
    %1670 = vmatprep.subr.mxu0 0.0
    %1671 = vmatpush1.msra.mxu0 0.0
    %1672 = vmatprep.subr.mxu0 0.0
    %1673 = vmatpush1.msra.mxu0 0.0
    %1674 = vmatprep.subr.mxu0 0.0
    %1675 = vmatpush1.msra.mxu0 0.0
    %1676 = vmatprep.subr.mxu0 0.0
    %1677 = vmatpush1.msra.mxu0 0.0
    %1678 = vmatprep.subr.mxu0 0.0
    %1679 = vmatpush1.msra.mxu0 0.0
    %1680 = vmatprep.subr.mxu0 0.0
    %1681 = vmatpush1.msra.mxu0 0.0
    %1682 = vmatprep.mubr.f32.mxu0 0.0
    %1683 = vmatmul.mubr.f32.gmra.mrb[0].mxu0 %v1616
    %v1684 = vpop.f32.mrb[0].mxu0
    %v1685 = vadd.f32 0.0, %v1684
    %v1686 = vpop.f32.mrb[0].mxu0
    %1687 = vdwg.mxu0
    %v1689 = vsel %vm1314, %v1171, 0
    %1691 = vmatprep.subr.mxu0 0.0
    %1692 = vmatpush1.msra.mxu0 %v92
    %1693 = vmatprep.subr.mxu0 0.0
    %1694 = vmatpush1.msra.mxu0 0.0
    %1695 = vmatprep.subr.mxu0 0.0
    %1696 = vmatpush1.msra.mxu0 0.0
    %1697 = vmatprep.subr.mxu0 0.0
    %1698 = vmatpush1.msra.mxu0 0.0
    %1699 = vmatprep.subr.mxu0 0.0
    %1700 = vmatpush1.msra.mxu0 0.0
    %1701 = vmatprep.subr.mxu0 0.0
    %1702 = vmatpush1.msra.mxu0 0.0
    %1703 = vmatprep.subr.mxu0 0.0
    %1704 = vmatpush1.msra.mxu0 0.0
    %1705 = vmatprep.subr.mxu0 0.0
    %1706 = vmatpush1.msra.mxu0 0.0
    %1707 = vmatprep.subr.mxu0 0.0
    %1708 = vmatpush1.msra.mxu0 0.0
    %1709 = vmatprep.subr.mxu0 0.0
    %1710 = vmatpush1.msra.mxu0 0.0
    %1711 = vmatprep.subr.mxu0 0.0
    %1712 = vmatpush1.msra.mxu0 0.0
    %1713 = vmatprep.subr.mxu0 0.0
    %1714 = vmatpush1.msra.mxu0 0.0
    %1715 = vmatprep.subr.mxu0 0.0
    %1716 = vmatpush1.msra.mxu0 0.0
    %1717 = vmatprep.subr.mxu0 0.0
    %1718 = vmatpush1.msra.mxu0 0.0
    %1719 = vmatprep.subr.mxu0 0.0
    %1720 = vmatpush1.msra.mxu0 0.0
    %1721 = vmatprep.subr.mxu0 0.0
    %1722 = vmatpush1.msra.mxu0 0.0
    %1723 = vmatprep.subr.mxu0 0.0
    %1724 = vmatpush1.msra.mxu0 0.0
    %1725 = vmatprep.subr.mxu0 0.0
    %1726 = vmatpush1.msra.mxu0 0.0
    %1727 = vmatprep.subr.mxu0 0.0
    %1728 = vmatpush1.msra.mxu0 0.0
    %1729 = vmatprep.subr.mxu0 0.0
    %1730 = vmatpush1.msra.mxu0 0.0
    %1731 = vmatprep.subr.mxu0 0.0
    %1732 = vmatpush1.msra.mxu0 0.0
    %1733 = vmatprep.subr.mxu0 0.0
    %1734 = vmatpush1.msra.mxu0 0.0
    %1735 = vmatprep.subr.mxu0 0.0
    %1736 = vmatpush1.msra.mxu0 0.0
    %1737 = vmatprep.subr.mxu0 0.0
    %1738 = vmatpush1.msra.mxu0 0.0
    %1739 = vmatprep.subr.mxu0 0.0
    %1740 = vmatpush1.msra.mxu0 0.0
    %1741 = vmatprep.subr.mxu0 0.0
    %1742 = vmatpush1.msra.mxu0 0.0
    %1743 = vmatprep.subr.mxu0 0.0
    %1744 = vmatpush1.msra.mxu0 0.0
    %1745 = vmatprep.subr.mxu0 0.0
    %1746 = vmatpush1.msra.mxu0 0.0
    %1747 = vmatprep.subr.mxu0 0.0
    %1748 = vmatpush1.msra.mxu0 0.0
    %1749 = vmatprep.subr.mxu0 0.0
    %1750 = vmatpush1.msra.mxu0 0.0
    %1751 = vmatprep.subr.mxu0 0.0
    %1752 = vmatpush1.msra.mxu0 0.0
    %1753 = vmatprep.subr.mxu0 0.0
    %1754 = vmatpush1.msra.mxu0 0.0
    %1755 = vmatprep.mubr.f32.mxu0 0.0
    %1756 = vmatmul.mubr.f32.gmra.mrb[0].mxu0 %v1689
    %v1757 = vpop.f32.mrb[0].mxu0
    %v1758 = vadd.f32 0.0, %v1757
    %v1759 = vpop.f32.mrb[0].mxu0
    %1760 = vdwg.mxu0
    %v1762 = vsel %vm1314, %v1241, 0
    %1764 = vmatprep.subr.mxu0 0.0
    %1765 = vmatpush1.msra.mxu0 %v92
    %1766 = vmatprep.subr.mxu0 0.0
    %1767 = vmatpush1.msra.mxu0 0.0
    %1768 = vmatprep.subr.mxu0 0.0
    %1769 = vmatpush1.msra.mxu0 0.0
    %1770 = vmatprep.subr.mxu0 0.0
    %1771 = vmatpush1.msra.mxu0 0.0
    %1772 = vmatprep.subr.mxu0 0.0
    %1773 = vmatpush1.msra.mxu0 0.0
    %1774 = vmatprep.subr.mxu0 0.0
    %1775 = vmatpush1.msra.mxu0 0.0
    %1776 = vmatprep.subr.mxu0 0.0
    %1777 = vmatpush1.msra.mxu0 0.0
    %1778 = vmatprep.subr.mxu0 0.0
    %1779 = vmatpush1.msra.mxu0 0.0
    %1780 = vmatprep.subr.mxu0 0.0
    %1781 = vmatpush1.msra.mxu0 0.0
    %1782 = vmatprep.subr.mxu0 0.0
    %1783 = vmatpush1.msra.mxu0 0.0
    %1784 = vmatprep.subr.mxu0 0.0
    %1785 = vmatpush1.msra.mxu0 0.0
    %1786 = vmatprep.subr.mxu0 0.0
    %1787 = vmatpush1.msra.mxu0 0.0
    %1788 = vmatprep.subr.mxu0 0.0
    %1789 = vmatpush1.msra.mxu0 0.0
    %1790 = vmatprep.subr.mxu0 0.0
    %1791 = vmatpush1.msra.mxu0 0.0
    %1792 = vmatprep.subr.mxu0 0.0
    %1793 = vmatpush1.msra.mxu0 0.0
    %1794 = vmatprep.subr.mxu0 0.0
    %1795 = vmatpush1.msra.mxu0 0.0
    %1796 = vmatprep.subr.mxu0 0.0
    %1797 = vmatpush1.msra.mxu0 0.0
    %1798 = vmatprep.subr.mxu0 0.0
    %1799 = vmatpush1.msra.mxu0 0.0
    %1800 = vmatprep.subr.mxu0 0.0
    %1801 = vmatpush1.msra.mxu0 0.0
    %1802 = vmatprep.subr.mxu0 0.0
    %1803 = vmatpush1.msra.mxu0 0.0
    %1804 = vmatprep.subr.mxu0 0.0
    %1805 = vmatpush1.msra.mxu0 0.0
    %1806 = vmatprep.subr.mxu0 0.0
    %1807 = vmatpush1.msra.mxu0 0.0
    %1808 = vmatprep.subr.mxu0 0.0
    %1809 = vmatpush1.msra.mxu0 0.0
    %1810 = vmatprep.subr.mxu0 0.0
    %1811 = vmatpush1.msra.mxu0 0.0
    %1812 = vmatprep.subr.mxu0 0.0
    %1813 = vmatpush1.msra.mxu0 0.0
    %1814 = vmatprep.subr.mxu0 0.0
    %1815 = vmatpush1.msra.mxu0 0.0
    %1816 = vmatprep.subr.mxu0 0.0
    %1817 = vmatpush1.msra.mxu0 0.0
    %1818 = vmatprep.subr.mxu0 0.0
    %1819 = vmatpush1.msra.mxu0 0.0
    %1820 = vmatprep.subr.mxu0 0.0
    %1821 = vmatpush1.msra.mxu0 0.0
    %1822 = vmatprep.subr.mxu0 0.0
    %1823 = vmatpush1.msra.mxu0 0.0
    %1824 = vmatprep.subr.mxu0 0.0
    %1825 = vmatpush1.msra.mxu0 0.0
    %1826 = vmatprep.subr.mxu0 0.0
    %1827 = vmatpush1.msra.mxu0 0.0
    %1828 = vmatprep.mubr.f32.mxu0 0.0
    %1829 = vmatmul.mubr.f32.gmra.mrb[0].mxu0 %v1762
    %v1830 = vpop.f32.mrb[0].mxu0
    %v1831 = vadd.f32 0.0, %v1830
    %v1832 = vpop.f32.mrb[0].mxu0
    %1833 = vdwg.mxu0
    %v1835 = vsel %vm1314, %v1311, 0
    %1837 = vmatprep.subr.mxu0 0.0
    %1838 = vmatpush1.msra.mxu0 %v92
    %1839 = vmatprep.subr.mxu0 0.0
    %1840 = vmatpush1.msra.mxu0 0.0
    %1841 = vmatprep.subr.mxu0 0.0
    %1842 = vmatpush1.msra.mxu0 0.0
    %1843 = vmatprep.subr.mxu0 0.0
    %1844 = vmatpush1.msra.mxu0 0.0
    %1845 = vmatprep.subr.mxu0 0.0
    %1846 = vmatpush1.msra.mxu0 0.0
    %1847 = vmatprep.subr.mxu0 0.0
    %1848 = vmatpush1.msra.mxu0 0.0
    %1849 = vmatprep.subr.mxu0 0.0
    %1850 = vmatpush1.msra.mxu0 0.0
    %1851 = vmatprep.subr.mxu0 0.0
    %1852 = vmatpush1.msra.mxu0 0.0
    %1853 = vmatprep.subr.mxu0 0.0
    %1854 = vmatpush1.msra.mxu0 0.0
    %1855 = vmatprep.subr.mxu0 0.0
    %1856 = vmatpush1.msra.mxu0 0.0
    %1857 = vmatprep.subr.mxu0 0.0
    %1858 = vmatpush1.msra.mxu0 0.0
    %1859 = vmatprep.subr.mxu0 0.0
    %1860 = vmatpush1.msra.mxu0 0.0
    %1861 = vmatprep.subr.mxu0 0.0
    %1862 = vmatpush1.msra.mxu0 0.0
    %1863 = vmatprep.subr.mxu0 0.0
    %1864 = vmatpush1.msra.mxu0 0.0
    %1865 = vmatprep.subr.mxu0 0.0
    %1866 = vmatpush1.msra.mxu0 0.0
    %1867 = vmatprep.subr.mxu0 0.0
    %1868 = vmatpush1.msra.mxu0 0.0
    %1869 = vmatprep.subr.mxu0 0.0
    %1870 = vmatpush1.msra.mxu0 0.0
    %1871 = vmatprep.subr.mxu0 0.0
    %1872 = vmatpush1.msra.mxu0 0.0
    %1873 = vmatprep.subr.mxu0 0.0
    %1874 = vmatpush1.msra.mxu0 0.0
    %1875 = vmatprep.subr.mxu0 0.0
    %1876 = vmatpush1.msra.mxu0 0.0
    %1877 = vmatprep.subr.mxu0 0.0
    %1878 = vmatpush1.msra.mxu0 0.0
    %1879 = vmatprep.subr.mxu0 0.0
    %1880 = vmatpush1.msra.mxu0 0.0
    %1881 = vmatprep.subr.mxu0 0.0
    %1882 = vmatpush1.msra.mxu0 0.0
    %1883 = vmatprep.subr.mxu0 0.0
    %1884 = vmatpush1.msra.mxu0 0.0
    %1885 = vmatprep.subr.mxu0 0.0
    %1886 = vmatpush1.msra.mxu0 0.0
    %1887 = vmatprep.subr.mxu0 0.0
    %1888 = vmatpush1.msra.mxu0 0.0
    %1889 = vmatprep.subr.mxu0 0.0
    %1890 = vmatpush1.msra.mxu0 0.0
    %1891 = vmatprep.subr.mxu0 0.0
    %1892 = vmatpush1.msra.mxu0 0.0
    %1893 = vmatprep.subr.mxu0 0.0
    %1894 = vmatpush1.msra.mxu0 0.0
    %1895 = vmatprep.subr.mxu0 0.0
    %1896 = vmatpush1.msra.mxu0 0.0
    %1897 = vmatprep.subr.mxu0 0.0
    %1898 = vmatpush1.msra.mxu0 0.0
    %1899 = vmatprep.subr.mxu0 0.0
    %1900 = vmatpush1.msra.mxu0 0.0
    %1901 = vmatprep.mubr.f32.mxu0 0.0
    %1902 = vmatmul.mubr.f32.gmra.mrb[0].mxu0 %v1835
    %v1903 = vpop.f32.mrb[0].mxu0
    %v1904 = vadd.f32 0.0, %v1903
    %v1905 = vpop.f32.mrb[0].mxu0
    %1906 = vdwg.mxu0
    %v1907 = vsel %vm1314, %v102, 0
    %1909 = vmatprep.subr.mxu0 0.0
    %1910 = vmatpush1.msra.mxu0 %v1393
    %1911 = vmatprep.subr.mxu0 0.0
    %1912 = vmatpush1.msra.mxu0 0.0
    %1913 = vmatprep.subr.mxu0 0.0
    %1914 = vmatpush1.msra.mxu0 0.0
    %1915 = vmatprep.subr.mxu0 0.0
    %1916 = vmatpush1.msra.mxu0 0.0
    %1917 = vmatprep.subr.mxu0 0.0
    %1918 = vmatpush1.msra.mxu0 0.0
    %1919 = vmatprep.subr.mxu0 0.0
    %1920 = vmatpush1.msra.mxu0 0.0
    %1921 = vmatprep.subr.mxu0 0.0
    %1922 = vmatpush1.msra.mxu0 0.0
    %1923 = vmatprep.subr.mxu0 0.0
    %1924 = vmatpush1.msra.mxu0 0.0
    %1925 = vmatprep.subr.mxu0 0.0
    %1926 = vmatpush1.msra.mxu0 0.0
    %1927 = vmatprep.subr.mxu0 0.0
    %1928 = vmatpush1.msra.mxu0 0.0
    %1929 = vmatprep.subr.mxu0 0.0
    %1930 = vmatpush1.msra.mxu0 0.0
    %1931 = vmatprep.subr.mxu0 0.0
    %1932 = vmatpush1.msra.mxu0 0.0
    %1933 = vmatprep.subr.mxu0 0.0
    %1934 = vmatpush1.msra.mxu0 0.0
    %1935 = vmatprep.subr.mxu0 0.0
    %1936 = vmatpush1.msra.mxu0 0.0
    %1937 = vmatprep.subr.mxu0 0.0
    %1938 = vmatpush1.msra.mxu0 0.0
    %1939 = vmatprep.subr.mxu0 0.0
    %1940 = vmatpush1.msra.mxu0 0.0
    %1941 = vmatprep.subr.mxu0 0.0
    %1942 = vmatpush1.msra.mxu0 0.0
    %1943 = vmatprep.subr.mxu0 0.0
    %1944 = vmatpush1.msra.mxu0 0.0
    %1945 = vmatprep.subr.mxu0 0.0
    %1946 = vmatpush1.msra.mxu0 0.0
    %1947 = vmatprep.subr.mxu0 0.0
    %1948 = vmatpush1.msra.mxu0 0.0
    %1949 = vmatprep.subr.mxu0 0.0
    %1950 = vmatpush1.msra.mxu0 0.0
    %1951 = vmatprep.subr.mxu0 0.0
    %1952 = vmatpush1.msra.mxu0 0.0
    %1953 = vmatprep.subr.mxu0 0.0
    %1954 = vmatpush1.msra.mxu0 0.0
    %1955 = vmatprep.subr.mxu0 0.0
    %1956 = vmatpush1.msra.mxu0 0.0
    %1957 = vmatprep.subr.mxu0 0.0
    %1958 = vmatpush1.msra.mxu0 0.0
    %1959 = vmatprep.subr.mxu0 0.0
    %1960 = vmatpush1.msra.mxu0 0.0
    %1961 = vmatprep.subr.mxu0 0.0
    %1962 = vmatpush1.msra.mxu0 0.0
    %1963 = vmatprep.subr.mxu0 0.0
    %1964 = vmatpush1.msra.mxu0 0.0
    %1965 = vmatprep.subr.mxu0 0.0
    %1966 = vmatpush1.msra.mxu0 0.0
    %1967 = vmatprep.subr.mxu0 0.0
    %1968 = vmatpush1.msra.mxu0 0.0
    %1969 = vmatprep.subr.mxu0 0.0
    %1970 = vmatpush1.msra.mxu0 0.0
    %1971 = vmatprep.subr.mxu0 0.0
    %1972 = vmatpush1.msra.mxu0 0.0
    %1973 = vmatprep.mubr.f32.mxu0 0.0
    %1974 = vmatmul.mubr.f32.gmra.mrb[0].mxu0 %v1907
    %v1975 = vpop.f32.mrb[0].mxu0
    %v1976 = vadd.f32 0.0, %v1975
    %v1977 = vpop.f32.mrb[0].mxu0
    %1978 = vdwg.mxu0
    %1979 = vmatprep.subr.mxu0 0.0
    %1980 = vmatpush1.msra.mxu0 %v1466
    %1981 = vmatprep.subr.mxu0 0.0
    %1982 = vmatpush1.msra.mxu0 0.0
    %1983 = vmatprep.subr.mxu0 0.0
    %1984 = vmatpush1.msra.mxu0 0.0
    %1985 = vmatprep.subr.mxu0 0.0
    %1986 = vmatpush1.msra.mxu0 0.0
    %1987 = vmatprep.subr.mxu0 0.0
    %1988 = vmatpush1.msra.mxu0 0.0
    %1989 = vmatprep.subr.mxu0 0.0
    %1990 = vmatpush1.msra.mxu0 0.0
    %1991 = vmatprep.subr.mxu0 0.0
    %1992 = vmatpush1.msra.mxu0 0.0
    %1993 = vmatprep.subr.mxu0 0.0
    %1994 = vmatpush1.msra.mxu0 0.0
    %1995 = vmatprep.subr.mxu0 0.0
    %1996 = vmatpush1.msra.mxu0 0.0
    %1997 = vmatprep.subr.mxu0 0.0
    %1998 = vmatpush1.msra.mxu0 0.0
    %1999 = vmatprep.subr.mxu0 0.0
    %2000 = vmatpush1.msra.mxu0 0.0
    %2001 = vmatprep.subr.mxu0 0.0
    %2002 = vmatpush1.msra.mxu0 0.0
    %2003 = vmatprep.subr.mxu0 0.0
    %2004 = vmatpush1.msra.mxu0 0.0
    %2005 = vmatprep.subr.mxu0 0.0
    %2006 = vmatpush1.msra.mxu0 0.0
    %2007 = vmatprep.subr.mxu0 0.0
    %2008 = vmatpush1.msra.mxu0 0.0
    %2009 = vmatprep.subr.mxu0 0.0
    %2010 = vmatpush1.msra.mxu0 0.0
    %2011 = vmatprep.subr.mxu0 0.0
    %2012 = vmatpush1.msra.mxu0 0.0
    %2013 = vmatprep.subr.mxu0 0.0
    %2014 = vmatpush1.msra.mxu0 0.0
    %2015 = vmatprep.subr.mxu0 0.0
    %2016 = vmatpush1.msra.mxu0 0.0
    %2017 = vmatprep.subr.mxu0 0.0
    %2018 = vmatpush1.msra.mxu0 0.0
    %2019 = vmatprep.subr.mxu0 0.0
    %2020 = vmatpush1.msra.mxu0 0.0
    %2021 = vmatprep.subr.mxu0 0.0
    %2022 = vmatpush1.msra.mxu0 0.0
    %2023 = vmatprep.subr.mxu0 0.0
    %2024 = vmatpush1.msra.mxu0 0.0
    %2025 = vmatprep.subr.mxu0 0.0
    %2026 = vmatpush1.msra.mxu0 0.0
    %2027 = vmatprep.subr.mxu0 0.0
    %2028 = vmatpush1.msra.mxu0 0.0
    %2029 = vmatprep.subr.mxu0 0.0
    %2030 = vmatpush1.msra.mxu0 0.0
    %2031 = vmatprep.subr.mxu0 0.0
    %2032 = vmatpush1.msra.mxu0 0.0
    %2033 = vmatprep.subr.mxu0 0.0
    %2034 = vmatpush1.msra.mxu0 0.0
    %2035 = vmatprep.subr.mxu0 0.0
    %2036 = vmatpush1.msra.mxu0 0.0
    %2037 = vmatprep.subr.mxu0 0.0
    %2038 = vmatpush1.msra.mxu0 0.0
    %2039 = vmatprep.subr.mxu0 0.0
    %2040 = vmatpush1.msra.mxu0 0.0
    %2041 = vmatprep.subr.mxu0 0.0
    %2042 = vmatpush1.msra.mxu0 0.0
    %2043 = vmatprep.mubr.f32.mxu0 0.0
    %2044 = vmatmul.mubr.f32.gmra.mrb[0].mxu0 %v1907
    %v2045 = vpop.f32.mrb[0].mxu0
    %v2046 = vadd.f32 0.0, %v2045
    %v2047 = vpop.f32.mrb[0].mxu0
    %2048 = vdwg.mxu0
    %2049 = vmatprep.subr.mxu0 0.0
    %2050 = vmatpush1.msra.mxu0 %v1539
    %2051 = vmatprep.subr.mxu0 0.0
    %2052 = vmatpush1.msra.mxu0 0.0
    %2053 = vmatprep.subr.mxu0 0.0
    %2054 = vmatpush1.msra.mxu0 0.0
    %2055 = vmatprep.subr.mxu0 0.0
    %2056 = vmatpush1.msra.mxu0 0.0
    %2057 = vmatprep.subr.mxu0 0.0
    %2058 = vmatpush1.msra.mxu0 0.0
    %2059 = vmatprep.subr.mxu0 0.0
    %2060 = vmatpush1.msra.mxu0 0.0
    %2061 = vmatprep.subr.mxu0 0.0
    %2062 = vmatpush1.msra.mxu0 0.0
    %2063 = vmatprep.subr.mxu0 0.0
    %2064 = vmatpush1.msra.mxu0 0.0
    %2065 = vmatprep.subr.mxu0 0.0
    %2066 = vmatpush1.msra.mxu0 0.0
    %2067 = vmatprep.subr.mxu0 0.0
    %2068 = vmatpush1.msra.mxu0 0.0
    %2069 = vmatprep.subr.mxu0 0.0
    %2070 = vmatpush1.msra.mxu0 0.0
    %2071 = vmatprep.subr.mxu0 0.0
    %2072 = vmatpush1.msra.mxu0 0.0
    %2073 = vmatprep.subr.mxu0 0.0
    %2074 = vmatpush1.msra.mxu0 0.0
    %2075 = vmatprep.subr.mxu0 0.0
    %2076 = vmatpush1.msra.mxu0 0.0
    %2077 = vmatprep.subr.mxu0 0.0
    %2078 = vmatpush1.msra.mxu0 0.0
    %2079 = vmatprep.subr.mxu0 0.0
    %2080 = vmatpush1.msra.mxu0 0.0
    %2081 = vmatprep.subr.mxu0 0.0
    %2082 = vmatpush1.msra.mxu0 0.0
    %2083 = vmatprep.subr.mxu0 0.0
    %2084 = vmatpush1.msra.mxu0 0.0
    %2085 = vmatprep.subr.mxu0 0.0
    %2086 = vmatpush1.msra.mxu0 0.0
    %2087 = vmatprep.subr.mxu0 0.0
    %2088 = vmatpush1.msra.mxu0 0.0
    %2089 = vmatprep.subr.mxu0 0.0
    %2090 = vmatpush1.msra.mxu0 0.0
    %2091 = vmatprep.subr.mxu0 0.0
    %2092 = vmatpush1.msra.mxu0 0.0
    %2093 = vmatprep.subr.mxu0 0.0
    %2094 = vmatpush1.msra.mxu0 0.0
    %2095 = vmatprep.subr.mxu0 0.0
    %2096 = vmatpush1.msra.mxu0 0.0
    %2097 = vmatprep.subr.mxu0 0.0
    %2098 = vmatpush1.msra.mxu0 0.0
    %2099 = vmatprep.subr.mxu0 0.0
    %2100 = vmatpush1.msra.mxu0 0.0
    %2101 = vmatprep.subr.mxu0 0.0
    %2102 = vmatpush1.msra.mxu0 0.0
    %2103 = vmatprep.subr.mxu0 0.0
    %2104 = vmatpush1.msra.mxu0 0.0
    %2105 = vmatprep.subr.mxu0 0.0
    %2106 = vmatpush1.msra.mxu0 0.0
    %2107 = vmatprep.subr.mxu0 0.0
    %2108 = vmatpush1.msra.mxu0 0.0
    %2109 = vmatprep.subr.mxu0 0.0
    %2110 = vmatpush1.msra.mxu0 0.0
    %2111 = vmatprep.subr.mxu0 0.0
    %2112 = vmatpush1.msra.mxu0 0.0
    %2113 = vmatprep.mubr.f32.mxu0 0.0
    %2114 = vmatmul.mubr.f32.gmra.mrb[0].mxu0 %v1907
    %v2115 = vpop.f32.mrb[0].mxu0
    %v2116 = vadd.f32 0.0, %v2115
    %v2117 = vpop.f32.mrb[0].mxu0
    %2118 = vdwg.mxu0
    %2119 = vmatprep.subr.mxu0 0.0
    %2120 = vmatpush1.msra.mxu0 %v1612
    %2121 = vmatprep.subr.mxu0 0.0
    %2122 = vmatpush1.msra.mxu0 0.0
    %2123 = vmatprep.subr.mxu0 0.0
    %2124 = vmatpush1.msra.mxu0 0.0
    %2125 = vmatprep.subr.mxu0 0.0
    %2126 = vmatpush1.msra.mxu0 0.0
    %2127 = vmatprep.subr.mxu0 0.0
    %2128 = vmatpush1.msra.mxu0 0.0
    %2129 = vmatprep.subr.mxu0 0.0
    %2130 = vmatpush1.msra.mxu0 0.0
    %2131 = vmatprep.subr.mxu0 0.0
    %2132 = vmatpush1.msra.mxu0 0.0
    %2133 = vmatprep.subr.mxu0 0.0
    %2134 = vmatpush1.msra.mxu0 0.0
    %2135 = vmatprep.subr.mxu0 0.0
    %2136 = vmatpush1.msra.mxu0 0.0
    %2137 = vmatprep.subr.mxu0 0.0
    %2138 = vmatpush1.msra.mxu0 0.0
    %2139 = vmatprep.subr.mxu0 0.0
    %2140 = vmatpush1.msra.mxu0 0.0
    %2141 = vmatprep.subr.mxu0 0.0
    %2142 = vmatpush1.msra.mxu0 0.0
    %2143 = vmatprep.subr.mxu0 0.0
    %2144 = vmatpush1.msra.mxu0 0.0
    %2145 = vmatprep.subr.mxu0 0.0
    %2146 = vmatpush1.msra.mxu0 0.0
    %2147 = vmatprep.subr.mxu0 0.0
    %2148 = vmatpush1.msra.mxu0 0.0
    %2149 = vmatprep.subr.mxu0 0.0
    %2150 = vmatpush1.msra.mxu0 0.0
    %2151 = vmatprep.subr.mxu0 0.0
    %2152 = vmatpush1.msra.mxu0 0.0
    %2153 = vmatprep.subr.mxu0 0.0
    %2154 = vmatpush1.msra.mxu0 0.0
    %2155 = vmatprep.subr.mxu0 0.0
    %2156 = vmatpush1.msra.mxu0 0.0
    %2157 = vmatprep.subr.mxu0 0.0
    %2158 = vmatpush1.msra.mxu0 0.0
    %2159 = vmatprep.subr.mxu0 0.0
    %2160 = vmatpush1.msra.mxu0 0.0
    %2161 = vmatprep.subr.mxu0 0.0
    %2162 = vmatpush1.msra.mxu0 0.0
    %2163 = vmatprep.subr.mxu0 0.0
    %2164 = vmatpush1.msra.mxu0 0.0
    %2165 = vmatprep.subr.mxu0 0.0
    %2166 = vmatpush1.msra.mxu0 0.0
    %2167 = vmatprep.subr.mxu0 0.0
    %2168 = vmatpush1.msra.mxu0 0.0
    %2169 = vmatprep.subr.mxu0 0.0
    %2170 = vmatpush1.msra.mxu0 0.0
    %2171 = vmatprep.subr.mxu0 0.0
    %2172 = vmatpush1.msra.mxu0 0.0
    %2173 = vmatprep.subr.mxu0 0.0
    %2174 = vmatpush1.msra.mxu0 0.0
    %2175 = vmatprep.subr.mxu0 0.0
    %2176 = vmatpush1.msra.mxu0 0.0
    %2177 = vmatprep.subr.mxu0 0.0
    %2178 = vmatpush1.msra.mxu0 0.0
    %2179 = vmatprep.subr.mxu0 0.0
    %2180 = vmatpush1.msra.mxu0 0.0
    %2181 = vmatprep.subr.mxu0 0.0
    %2182 = vmatpush1.msra.mxu0 0.0
    %2183 = vmatprep.mubr.f32.mxu0 0.0
    %2184 = vmatmul.mubr.f32.gmra.mrb[0].mxu0 %v1907
    %v2185 = vpop.f32.mrb[0].mxu0
    %v2186 = vadd.f32 0.0, %v2185
    %v2187 = vpop.f32.mrb[0].mxu0
    %2188 = vdwg.mxu0
    %2189 = vmatprep.subr.mxu0 0.0
    %2190 = vmatpush1.msra.mxu0 %v1685
    %2191 = vmatprep.subr.mxu0 0.0
    %2192 = vmatpush1.msra.mxu0 0.0
    %2193 = vmatprep.subr.mxu0 0.0
    %2194 = vmatpush1.msra.mxu0 0.0
    %2195 = vmatprep.subr.mxu0 0.0
    %2196 = vmatpush1.msra.mxu0 0.0
    %2197 = vmatprep.subr.mxu0 0.0
    %2198 = vmatpush1.msra.mxu0 0.0
    %2199 = vmatprep.subr.mxu0 0.0
    %2200 = vmatpush1.msra.mxu0 0.0
    %2201 = vmatprep.subr.mxu0 0.0
    %2202 = vmatpush1.msra.mxu0 0.0
    %2203 = vmatprep.subr.mxu0 0.0
    %2204 = vmatpush1.msra.mxu0 0.0
    %2205 = vmatprep.subr.mxu0 0.0
    %2206 = vmatpush1.msra.mxu0 0.0
    %2207 = vmatprep.subr.mxu0 0.0
    %2208 = vmatpush1.msra.mxu0 0.0
    %2209 = vmatprep.subr.mxu0 0.0
    %2210 = vmatpush1.msra.mxu0 0.0
    %2211 = vmatprep.subr.mxu0 0.0
    %2212 = vmatpush1.msra.mxu0 0.0
    %2213 = vmatprep.subr.mxu0 0.0
    %2214 = vmatpush1.msra.mxu0 0.0
    %2215 = vmatprep.subr.mxu0 0.0
    %2216 = vmatpush1.msra.mxu0 0.0
    %2217 = vmatprep.subr.mxu0 0.0
    %2218 = vmatpush1.msra.mxu0 0.0
    %2219 = vmatprep.subr.mxu0 0.0
    %2220 = vmatpush1.msra.mxu0 0.0
    %2221 = vmatprep.subr.mxu0 0.0
    %2222 = vmatpush1.msra.mxu0 0.0
    %2223 = vmatprep.subr.mxu0 0.0
    %2224 = vmatpush1.msra.mxu0 0.0
    %2225 = vmatprep.subr.mxu0 0.0
    %2226 = vmatpush1.msra.mxu0 0.0
    %2227 = vmatprep.subr.mxu0 0.0
    %2228 = vmatpush1.msra.mxu0 0.0
    %2229 = vmatprep.subr.mxu0 0.0
    %2230 = vmatpush1.msra.mxu0 0.0
    %2231 = vmatprep.subr.mxu0 0.0
    %2232 = vmatpush1.msra.mxu0 0.0
    %2233 = vmatprep.subr.mxu0 0.0
    %2234 = vmatpush1.msra.mxu0 0.0
    %2235 = vmatprep.subr.mxu0 0.0
    %2236 = vmatpush1.msra.mxu0 0.0
    %2237 = vmatprep.subr.mxu0 0.0
    %2238 = vmatpush1.msra.mxu0 0.0
    %2239 = vmatprep.subr.mxu0 0.0
    %2240 = vmatpush1.msra.mxu0 0.0
    %2241 = vmatprep.subr.mxu0 0.0
    %2242 = vmatpush1.msra.mxu0 0.0
    %2243 = vmatprep.subr.mxu0 0.0
    %2244 = vmatpush1.msra.mxu0 0.0
    %2245 = vmatprep.subr.mxu0 0.0
    %2246 = vmatpush1.msra.mxu0 0.0
    %2247 = vmatprep.subr.mxu0 0.0
    %2248 = vmatpush1.msra.mxu0 0.0
    %2249 = vmatprep.subr.mxu0 0.0
    %2250 = vmatpush1.msra.mxu0 0.0
    %2251 = vmatprep.subr.mxu0 0.0
    %2252 = vmatpush1.msra.mxu0 0.0
    %2253 = vmatprep.mubr.f32.mxu0 0.0
    %2254 = vmatmul.mubr.f32.gmra.mrb[0].mxu0 %v1907
    %v2255 = vpop.f32.mrb[0].mxu0
    %v2256 = vadd.f32 0.0, %v2255
    %v2257 = vpop.f32.mrb[0].mxu0
    %2258 = vdwg.mxu0
    %2259 = vmatprep.subr.mxu0 0.0
    %2260 = vmatpush1.msra.mxu0 %v1758
    %2261 = vmatprep.subr.mxu0 0.0
    %2262 = vmatpush1.msra.mxu0 0.0
    %2263 = vmatprep.subr.mxu0 0.0
    %2264 = vmatpush1.msra.mxu0 0.0
    %2265 = vmatprep.subr.mxu0 0.0
    %2266 = vmatpush1.msra.mxu0 0.0
    %2267 = vmatprep.subr.mxu0 0.0
    %2268 = vmatpush1.msra.mxu0 0.0
    %2269 = vmatprep.subr.mxu0 0.0
    %2270 = vmatpush1.msra.mxu0 0.0
    %2271 = vmatprep.subr.mxu0 0.0
    %2272 = vmatpush1.msra.mxu0 0.0
    %2273 = vmatprep.subr.mxu0 0.0
    %2274 = vmatpush1.msra.mxu0 0.0
    %2275 = vmatprep.subr.mxu0 0.0
    %2276 = vmatpush1.msra.mxu0 0.0
    %2277 = vmatprep.subr.mxu0 0.0
    %2278 = vmatpush1.msra.mxu0 0.0
    %2279 = vmatprep.subr.mxu0 0.0
    %2280 = vmatpush1.msra.mxu0 0.0
    %2281 = vmatprep.subr.mxu0 0.0
    %2282 = vmatpush1.msra.mxu0 0.0
    %2283 = vmatprep.subr.mxu0 0.0
    %2284 = vmatpush1.msra.mxu0 0.0
    %2285 = vmatprep.subr.mxu0 0.0
    %2286 = vmatpush1.msra.mxu0 0.0
    %2287 = vmatprep.subr.mxu0 0.0
    %2288 = vmatpush1.msra.mxu0 0.0
    %2289 = vmatprep.subr.mxu0 0.0
    %2290 = vmatpush1.msra.mxu0 0.0
    %2291 = vmatprep.subr.mxu0 0.0
    %2292 = vmatpush1.msra.mxu0 0.0
    %2293 = vmatprep.subr.mxu0 0.0
    %2294 = vmatpush1.msra.mxu0 0.0
    %2295 = vmatprep.subr.mxu0 0.0
    %2296 = vmatpush1.msra.mxu0 0.0
    %2297 = vmatprep.subr.mxu0 0.0
    %2298 = vmatpush1.msra.mxu0 0.0
    %2299 = vmatprep.subr.mxu0 0.0
    %2300 = vmatpush1.msra.mxu0 0.0
    %2301 = vmatprep.subr.mxu0 0.0
    %2302 = vmatpush1.msra.mxu0 0.0
    %2303 = vmatprep.subr.mxu0 0.0
    %2304 = vmatpush1.msra.mxu0 0.0
    %2305 = vmatprep.subr.mxu0 0.0
    %2306 = vmatpush1.msra.mxu0 0.0
    %2307 = vmatprep.subr.mxu0 0.0
    %2308 = vmatpush1.msra.mxu0 0.0
    %2309 = vmatprep.subr.mxu0 0.0
    %2310 = vmatpush1.msra.mxu0 0.0
    %2311 = vmatprep.subr.mxu0 0.0
    %2312 = vmatpush1.msra.mxu0 0.0
    %2313 = vmatprep.subr.mxu0 0.0
    %2314 = vmatpush1.msra.mxu0 0.0
    %2315 = vmatprep.subr.mxu0 0.0
    %2316 = vmatpush1.msra.mxu0 0.0
    %2317 = vmatprep.subr.mxu0 0.0
    %2318 = vmatpush1.msra.mxu0 0.0
    %2319 = vmatprep.subr.mxu0 0.0
    %2320 = vmatpush1.msra.mxu0 0.0
    %2321 = vmatprep.subr.mxu0 0.0
    %2322 = vmatpush1.msra.mxu0 0.0
    %2323 = vmatprep.mubr.f32.mxu0 0.0
    %2324 = vmatmul.mubr.f32.gmra.mrb[0].mxu0 %v1907
    %v2325 = vpop.f32.mrb[0].mxu0
    %v2326 = vadd.f32 0.0, %v2325
    %v2327 = vpop.f32.mrb[0].mxu0
    %2328 = vdwg.mxu0
    %2329 = vmatprep.subr.mxu0 0.0
    %2330 = vmatpush1.msra.mxu0 %v1831
    %2331 = vmatprep.subr.mxu0 0.0
    %2332 = vmatpush1.msra.mxu0 0.0
    %2333 = vmatprep.subr.mxu0 0.0
    %2334 = vmatpush1.msra.mxu0 0.0
    %2335 = vmatprep.subr.mxu0 0.0
    %2336 = vmatpush1.msra.mxu0 0.0
    %2337 = vmatprep.subr.mxu0 0.0
    %2338 = vmatpush1.msra.mxu0 0.0
    %2339 = vmatprep.subr.mxu0 0.0
    %2340 = vmatpush1.msra.mxu0 0.0
    %2341 = vmatprep.subr.mxu0 0.0
    %2342 = vmatpush1.msra.mxu0 0.0
    %2343 = vmatprep.subr.mxu0 0.0
    %2344 = vmatpush1.msra.mxu0 0.0
    %2345 = vmatprep.subr.mxu0 0.0
    %2346 = vmatpush1.msra.mxu0 0.0
    %2347 = vmatprep.subr.mxu0 0.0
    %2348 = vmatpush1.msra.mxu0 0.0
    %2349 = vmatprep.subr.mxu0 0.0
    %2350 = vmatpush1.msra.mxu0 0.0
    %2351 = vmatprep.subr.mxu0 0.0
    %2352 = vmatpush1.msra.mxu0 0.0
    %2353 = vmatprep.subr.mxu0 0.0
    %2354 = vmatpush1.msra.mxu0 0.0
    %2355 = vmatprep.subr.mxu0 0.0
    %2356 = vmatpush1.msra.mxu0 0.0
    %2357 = vmatprep.subr.mxu0 0.0
    %2358 = vmatpush1.msra.mxu0 0.0
    %2359 = vmatprep.subr.mxu0 0.0
    %2360 = vmatpush1.msra.mxu0 0.0
    %2361 = vmatprep.subr.mxu0 0.0
    %2362 = vmatpush1.msra.mxu0 0.0
    %2363 = vmatprep.subr.mxu0 0.0
    %2364 = vmatpush1.msra.mxu0 0.0
    %2365 = vmatprep.subr.mxu0 0.0
    %2366 = vmatpush1.msra.mxu0 0.0
    %2367 = vmatprep.subr.mxu0 0.0
    %2368 = vmatpush1.msra.mxu0 0.0
    %2369 = vmatprep.subr.mxu0 0.0
    %2370 = vmatpush1.msra.mxu0 0.0
    %2371 = vmatprep.subr.mxu0 0.0
    %2372 = vmatpush1.msra.mxu0 0.0
    %2373 = vmatprep.subr.mxu0 0.0
    %2374 = vmatpush1.msra.mxu0 0.0
    %2375 = vmatprep.subr.mxu0 0.0
    %2376 = vmatpush1.msra.mxu0 0.0
    %2377 = vmatprep.subr.mxu0 0.0
    %2378 = vmatpush1.msra.mxu0 0.0
    %2379 = vmatprep.subr.mxu0 0.0
    %2380 = vmatpush1.msra.mxu0 0.0
    %2381 = vmatprep.subr.mxu0 0.0
    %2382 = vmatpush1.msra.mxu0 0.0
    %2383 = vmatprep.subr.mxu0 0.0
    %2384 = vmatpush1.msra.mxu0 0.0
    %2385 = vmatprep.subr.mxu0 0.0
    %2386 = vmatpush1.msra.mxu0 0.0
    %2387 = vmatprep.subr.mxu0 0.0
    %2388 = vmatpush1.msra.mxu0 0.0
    %2389 = vmatprep.subr.mxu0 0.0
    %2390 = vmatpush1.msra.mxu0 0.0
    %2391 = vmatprep.subr.mxu0 0.0
    %2392 = vmatpush1.msra.mxu0 0.0
    %2393 = vmatprep.mubr.f32.mxu0 0.0
    %2394 = vmatmul.mubr.f32.gmra.mrb[0].mxu0 %v1907
    %v2395 = vpop.f32.mrb[0].mxu0
    %v2396 = vadd.f32 0.0, %v2395
    %v2397 = vpop.f32.mrb[0].mxu0
    %2398 = vdwg.mxu0
    %2399 = vmatprep.subr.mxu0 0.0
    %2400 = vmatpush1.msra.mxu0 %v1904
    %2401 = vmatprep.subr.mxu0 0.0
    %2402 = vmatpush1.msra.mxu0 0.0
    %2403 = vmatprep.subr.mxu0 0.0
    %2404 = vmatpush1.msra.mxu0 0.0
    %2405 = vmatprep.subr.mxu0 0.0
    %2406 = vmatpush1.msra.mxu0 0.0
    %2407 = vmatprep.subr.mxu0 0.0
    %2408 = vmatpush1.msra.mxu0 0.0
    %2409 = vmatprep.subr.mxu0 0.0
    %2410 = vmatpush1.msra.mxu0 0.0
    %2411 = vmatprep.subr.mxu0 0.0
    %2412 = vmatpush1.msra.mxu0 0.0
    %2413 = vmatprep.subr.mxu0 0.0
    %2414 = vmatpush1.msra.mxu0 0.0
    %2415 = vmatprep.subr.mxu0 0.0
    %2416 = vmatpush1.msra.mxu0 0.0
    %2417 = vmatprep.subr.mxu0 0.0
    %2418 = vmatpush1.msra.mxu0 0.0
    %2419 = vmatprep.subr.mxu0 0.0
    %2420 = vmatpush1.msra.mxu0 0.0
    %2421 = vmatprep.subr.mxu0 0.0
    %2422 = vmatpush1.msra.mxu0 0.0
    %2423 = vmatprep.subr.mxu0 0.0
    %2424 = vmatpush1.msra.mxu0 0.0
    %2425 = vmatprep.subr.mxu0 0.0
    %2426 = vmatpush1.msra.mxu0 0.0
    %2427 = vmatprep.subr.mxu0 0.0
    %2428 = vmatpush1.msra.mxu0 0.0
    %2429 = vmatprep.subr.mxu0 0.0
    %2430 = vmatpush1.msra.mxu0 0.0
    %2431 = vmatprep.subr.mxu0 0.0
    %2432 = vmatpush1.msra.mxu0 0.0
    %2433 = vmatprep.subr.mxu0 0.0
    %2434 = vmatpush1.msra.mxu0 0.0
    %2435 = vmatprep.subr.mxu0 0.0
    %2436 = vmatpush1.msra.mxu0 0.0
    %2437 = vmatprep.subr.mxu0 0.0
    %2438 = vmatpush1.msra.mxu0 0.0
    %2439 = vmatprep.subr.mxu0 0.0
    %2440 = vmatpush1.msra.mxu0 0.0
    %2441 = vmatprep.subr.mxu0 0.0
    %2442 = vmatpush1.msra.mxu0 0.0
    %2443 = vmatprep.subr.mxu0 0.0
    %2444 = vmatpush1.msra.mxu0 0.0
    %2445 = vmatprep.subr.mxu0 0.0
    %2446 = vmatpush1.msra.mxu0 0.0
    %2447 = vmatprep.subr.mxu0 0.0
    %2448 = vmatpush1.msra.mxu0 0.0
    %2449 = vmatprep.subr.mxu0 0.0
    %2450 = vmatpush1.msra.mxu0 0.0
    %2451 = vmatprep.subr.mxu0 0.0
    %2452 = vmatpush1.msra.mxu0 0.0
    %2453 = vmatprep.subr.mxu0 0.0
    %2454 = vmatpush1.msra.mxu0 0.0
    %2455 = vmatprep.subr.mxu0 0.0
    %2456 = vmatpush1.msra.mxu0 0.0
    %2457 = vmatprep.subr.mxu0 0.0
    %2458 = vmatpush1.msra.mxu0 0.0
    %2459 = vmatprep.subr.mxu0 0.0
    %2460 = vmatpush1.msra.mxu0 0.0
    %2461 = vmatprep.subr.mxu0 0.0
    %2462 = vmatpush1.msra.mxu0 0.0
    %2463 = vmatprep.mubr.f32.mxu0 0.0
    %2464 = vmatmul.mubr.f32.gmra.mrb[0].mxu0 %v1907
    %v2465 = vpop.f32.mrb[0].mxu0
    %v2466 = vadd.f32 0.0, %v2465
    %v2467 = vpop.f32.mrb[0].mxu0
    %2468 = vdwg.mxu0
    %vm2469 = vcmask 27648
    %2470 = vst.msk [vmem:[#allocation5] sm:$0xf] %vm2469, %v1976
    %2471 = vst.msk [vmem:[#allocation5 + $0x10] sm:$0xf] %vm2469, %v2046
    %2472 = vst.msk [vmem:[#allocation5 + $0x20] sm:$0xf] %vm2469, %v2116
    %2473 = vst.msk [vmem:[#allocation5 + $0x30] sm:$0xf] %vm2469, %v2186
    %2474 = vst.msk [vmem:[#allocation5 + $0x40] sm:$0xf] %vm2469, %v2256
    %2475 = vst.msk [vmem:[#allocation5 + $0x50] sm:$0xf] %vm2469, %v2326
    %2476 = vst.msk [vmem:[#allocation5 + $0x60] sm:$0xf] %vm2469, %v2396
    %2477 = vst.msk [vmem:[#allocation5 + $0x70] sm:$0xf] %vm2469, %v2466
    %vm2478 = vcmask 31744
    %v2480 = vsel %vm2478, %v1976, 0
    %vm2482 = vcmask 1043456
    %v2484 = vsel %vm2482, %v92, 0
    %2486 = vmatprep.subr.mxu0 0.0
    %2487 = vmatpush1.msra.mxu0 %v2484
    %2488 = vmatprep.subr.mxu0 0.0
    %2489 = vmatpush1.msra.mxu0 0.0
    %2490 = vmatprep.subr.mxu0 0.0
    %2491 = vmatpush1.msra.mxu0 0.0
    %2492 = vmatprep.subr.mxu0 0.0
    %2493 = vmatpush1.msra.mxu0 0.0
    %2494 = vmatprep.subr.mxu0 0.0
    %2495 = vmatpush1.msra.mxu0 0.0
    %2496 = vmatprep.subr.mxu0 0.0
    %2497 = vmatpush1.msra.mxu0 0.0
    %2498 = vmatprep.subr.mxu0 0.0
    %2499 = vmatpush1.msra.mxu0 0.0
    %2500 = vmatprep.subr.mxu0 0.0
    %2501 = vmatpush1.msra.mxu0 0.0
    %2502 = vmatprep.subr.mxu0 0.0
    %2503 = vmatpush1.msra.mxu0 0.0
    %2504 = vmatprep.subr.mxu0 0.0
    %2505 = vmatpush1.msra.mxu0 0.0
    %2506 = vmatprep.subr.mxu0 0.0
    %2507 = vmatpush1.msra.mxu0 0.0
    %2508 = vmatprep.subr.mxu0 0.0
    %2509 = vmatpush1.msra.mxu0 0.0
    %2510 = vmatprep.subr.mxu0 0.0
    %2511 = vmatpush1.msra.mxu0 0.0
    %2512 = vmatprep.subr.mxu0 0.0
    %2513 = vmatpush1.msra.mxu0 0.0
    %2514 = vmatprep.subr.mxu0 0.0
    %2515 = vmatpush1.msra.mxu0 0.0
    %2516 = vmatprep.subr.mxu0 0.0
    %2517 = vmatpush1.msra.mxu0 0.0
    %2518 = vmatprep.subr.mxu0 0.0
    %2519 = vmatpush1.msra.mxu0 0.0
    %2520 = vmatprep.subr.mxu0 0.0
    %2521 = vmatpush1.msra.mxu0 0.0
    %2522 = vmatprep.subr.mxu0 0.0
    %2523 = vmatpush1.msra.mxu0 0.0
    %2524 = vmatprep.subr.mxu0 0.0
    %2525 = vmatpush1.msra.mxu0 0.0
    %2526 = vmatprep.subr.mxu0 0.0
    %2527 = vmatpush1.msra.mxu0 0.0
    %2528 = vmatprep.subr.mxu0 0.0
    %2529 = vmatpush1.msra.mxu0 0.0
    %2530 = vmatprep.subr.mxu0 0.0
    %2531 = vmatpush1.msra.mxu0 0.0
    %2532 = vmatprep.subr.mxu0 0.0
    %2533 = vmatpush1.msra.mxu0 0.0
    %2534 = vmatprep.subr.mxu0 0.0
    %2535 = vmatpush1.msra.mxu0 0.0
    %2536 = vmatprep.subr.mxu0 0.0
    %2537 = vmatpush1.msra.mxu0 0.0
    %2538 = vmatprep.subr.mxu0 0.0
    %2539 = vmatpush1.msra.mxu0 0.0
    %2540 = vmatprep.subr.mxu0 0.0
    %2541 = vmatpush1.msra.mxu0 0.0
    %2542 = vmatprep.subr.mxu0 0.0
    %2543 = vmatpush1.msra.mxu0 0.0
    %2544 = vmatprep.subr.mxu0 0.0
    %2545 = vmatpush1.msra.mxu0 0.0
    %2546 = vmatprep.subr.mxu0 0.0
    %2547 = vmatpush1.msra.mxu0 0.0
    %2548 = vmatprep.subr.mxu0 0.0
    %2549 = vmatpush1.msra.mxu0 0.0
    %2550 = vmatprep.mubr.f32.mxu0 0.0
    %2551 = vmatmul.mubr.f32.gmra.mrb[0].mxu0 %v2480
    %v2552 = vpop.f32.mrb[0].mxu0
    %v2553 = vadd.f32 0.0, %v2552
    %v2554 = vpop.f32.mrb[0].mxu0
    %2555 = vdwg.mxu0
    %v2557 = vsel %vm2478, %v2046, 0
    %2559 = vmatprep.subr.mxu0 0.0
    %2560 = vmatpush1.msra.mxu0 %v2484
    %2561 = vmatprep.subr.mxu0 0.0
    %2562 = vmatpush1.msra.mxu0 0.0
    %2563 = vmatprep.subr.mxu0 0.0
    %2564 = vmatpush1.msra.mxu0 0.0
    %2565 = vmatprep.subr.mxu0 0.0
    %2566 = vmatpush1.msra.mxu0 0.0
    %2567 = vmatprep.subr.mxu0 0.0
    %2568 = vmatpush1.msra.mxu0 0.0
    %2569 = vmatprep.subr.mxu0 0.0
    %2570 = vmatpush1.msra.mxu0 0.0
    %2571 = vmatprep.subr.mxu0 0.0
    %2572 = vmatpush1.msra.mxu0 0.0
    %2573 = vmatprep.subr.mxu0 0.0
    %2574 = vmatpush1.msra.mxu0 0.0
    %2575 = vmatprep.subr.mxu0 0.0
    %2576 = vmatpush1.msra.mxu0 0.0
    %2577 = vmatprep.subr.mxu0 0.0
    %2578 = vmatpush1.msra.mxu0 0.0
    %2579 = vmatprep.subr.mxu0 0.0
    %2580 = vmatpush1.msra.mxu0 0.0
    %2581 = vmatprep.subr.mxu0 0.0
    %2582 = vmatpush1.msra.mxu0 0.0
    %2583 = vmatprep.subr.mxu0 0.0
    %2584 = vmatpush1.msra.mxu0 0.0
    %2585 = vmatprep.subr.mxu0 0.0
    %2586 = vmatpush1.msra.mxu0 0.0
    %2587 = vmatprep.subr.mxu0 0.0
    %2588 = vmatpush1.msra.mxu0 0.0
    %2589 = vmatprep.subr.mxu0 0.0
    %2590 = vmatpush1.msra.mxu0 0.0
    %2591 = vmatprep.subr.mxu0 0.0
    %2592 = vmatpush1.msra.mxu0 0.0
    %2593 = vmatprep.subr.mxu0 0.0
    %2594 = vmatpush1.msra.mxu0 0.0
    %2595 = vmatprep.subr.mxu0 0.0
    %2596 = vmatpush1.msra.mxu0 0.0
    %2597 = vmatprep.subr.mxu0 0.0
    %2598 = vmatpush1.msra.mxu0 0.0
    %2599 = vmatprep.subr.mxu0 0.0
    %2600 = vmatpush1.msra.mxu0 0.0
    %2601 = vmatprep.subr.mxu0 0.0
    %2602 = vmatpush1.msra.mxu0 0.0
    %2603 = vmatprep.subr.mxu0 0.0
    %2604 = vmatpush1.msra.mxu0 0.0
    %2605 = vmatprep.subr.mxu0 0.0
    %2606 = vmatpush1.msra.mxu0 0.0
    %2607 = vmatprep.subr.mxu0 0.0
    %2608 = vmatpush1.msra.mxu0 0.0
    %2609 = vmatprep.subr.mxu0 0.0
    %2610 = vmatpush1.msra.mxu0 0.0
    %2611 = vmatprep.subr.mxu0 0.0
    %2612 = vmatpush1.msra.mxu0 0.0
    %2613 = vmatprep.subr.mxu0 0.0
    %2614 = vmatpush1.msra.mxu0 0.0
    %2615 = vmatprep.subr.mxu0 0.0
    %2616 = vmatpush1.msra.mxu0 0.0
    %2617 = vmatprep.subr.mxu0 0.0
    %2618 = vmatpush1.msra.mxu0 0.0
    %2619 = vmatprep.subr.mxu0 0.0
    %2620 = vmatpush1.msra.mxu0 0.0
    %2621 = vmatprep.subr.mxu0 0.0
    %2622 = vmatpush1.msra.mxu0 0.0
    %2623 = vmatprep.mubr.f32.mxu0 0.0
    %2624 = vmatmul.mubr.f32.gmra.mrb[0].mxu0 %v2557
    %v2625 = vpop.f32.mrb[0].mxu0
    %v2626 = vadd.f32 0.0, %v2625
    %v2627 = vpop.f32.mrb[0].mxu0
    %2628 = vdwg.mxu0
    %v2630 = vsel %vm2478, %v2116, 0
    %2632 = vmatprep.subr.mxu0 0.0
    %2633 = vmatpush1.msra.mxu0 %v2484
    %2634 = vmatprep.subr.mxu0 0.0
    %2635 = vmatpush1.msra.mxu0 0.0
    %2636 = vmatprep.subr.mxu0 0.0
    %2637 = vmatpush1.msra.mxu0 0.0
    %2638 = vmatprep.subr.mxu0 0.0
    %2639 = vmatpush1.msra.mxu0 0.0
    %2640 = vmatprep.subr.mxu0 0.0
    %2641 = vmatpush1.msra.mxu0 0.0
    %2642 = vmatprep.subr.mxu0 0.0
    %2643 = vmatpush1.msra.mxu0 0.0
    %2644 = vmatprep.subr.mxu0 0.0
    %2645 = vmatpush1.msra.mxu0 0.0
    %2646 = vmatprep.subr.mxu0 0.0
    %2647 = vmatpush1.msra.mxu0 0.0
    %2648 = vmatprep.subr.mxu0 0.0
    %2649 = vmatpush1.msra.mxu0 0.0
    %2650 = vmatprep.subr.mxu0 0.0
    %2651 = vmatpush1.msra.mxu0 0.0
    %2652 = vmatprep.subr.mxu0 0.0
    %2653 = vmatpush1.msra.mxu0 0.0
    %2654 = vmatprep.subr.mxu0 0.0
    %2655 = vmatpush1.msra.mxu0 0.0
    %2656 = vmatprep.subr.mxu0 0.0
    %2657 = vmatpush1.msra.mxu0 0.0
    %2658 = vmatprep.subr.mxu0 0.0
    %2659 = vmatpush1.msra.mxu0 0.0
    %2660 = vmatprep.subr.mxu0 0.0
    %2661 = vmatpush1.msra.mxu0 0.0
    %2662 = vmatprep.subr.mxu0 0.0
    %2663 = vmatpush1.msra.mxu0 0.0
    %2664 = vmatprep.subr.mxu0 0.0
    %2665 = vmatpush1.msra.mxu0 0.0
    %2666 = vmatprep.subr.mxu0 0.0
    %2667 = vmatpush1.msra.mxu0 0.0
    %2668 = vmatprep.subr.mxu0 0.0
    %2669 = vmatpush1.msra.mxu0 0.0
    %2670 = vmatprep.subr.mxu0 0.0
    %2671 = vmatpush1.msra.mxu0 0.0
    %2672 = vmatprep.subr.mxu0 0.0
    %2673 = vmatpush1.msra.mxu0 0.0
    %2674 = vmatprep.subr.mxu0 0.0
    %2675 = vmatpush1.msra.mxu0 0.0
    %2676 = vmatprep.subr.mxu0 0.0
    %2677 = vmatpush1.msra.mxu0 0.0
    %2678 = vmatprep.subr.mxu0 0.0
    %2679 = vmatpush1.msra.mxu0 0.0
    %2680 = vmatprep.subr.mxu0 0.0
    %2681 = vmatpush1.msra.mxu0 0.0
    %2682 = vmatprep.subr.mxu0 0.0
    %2683 = vmatpush1.msra.mxu0 0.0
    %2684 = vmatprep.subr.mxu0 0.0
    %2685 = vmatpush1.msra.mxu0 0.0
    %2686 = vmatprep.subr.mxu0 0.0
    %2687 = vmatpush1.msra.mxu0 0.0
    %2688 = vmatprep.subr.mxu0 0.0
    %2689 = vmatpush1.msra.mxu0 0.0
    %2690 = vmatprep.subr.mxu0 0.0
    %2691 = vmatpush1.msra.mxu0 0.0
    %2692 = vmatprep.subr.mxu0 0.0
    %2693 = vmatpush1.msra.mxu0 0.0
    %2694 = vmatprep.subr.mxu0 0.0
    %2695 = vmatpush1.msra.mxu0 0.0
    %2696 = vmatprep.mubr.f32.mxu0 0.0
    %2697 = vmatmul.mubr.f32.gmra.mrb[0].mxu0 %v2630
    %v2698 = vpop.f32.mrb[0].mxu0
    %v2699 = vadd.f32 0.0, %v2698
    %v2700 = vpop.f32.mrb[0].mxu0
    %2701 = vdwg.mxu0
    %v2703 = vsel %vm2478, %v2186, 0
    %2705 = vmatprep.subr.mxu0 0.0
    %2706 = vmatpush1.msra.mxu0 %v2484
    %2707 = vmatprep.subr.mxu0 0.0
    %2708 = vmatpush1.msra.mxu0 0.0
    %2709 = vmatprep.subr.mxu0 0.0
    %2710 = vmatpush1.msra.mxu0 0.0
    %2711 = vmatprep.subr.mxu0 0.0
    %2712 = vmatpush1.msra.mxu0 0.0
    %2713 = vmatprep.subr.mxu0 0.0
    %2714 = vmatpush1.msra.mxu0 0.0
    %2715 = vmatprep.subr.mxu0 0.0
    %2716 = vmatpush1.msra.mxu0 0.0
    %2717 = vmatprep.subr.mxu0 0.0
    %2718 = vmatpush1.msra.mxu0 0.0
    %2719 = vmatprep.subr.mxu0 0.0
    %2720 = vmatpush1.msra.mxu0 0.0
    %2721 = vmatprep.subr.mxu0 0.0
    %2722 = vmatpush1.msra.mxu0 0.0
    %2723 = vmatprep.subr.mxu0 0.0
    %2724 = vmatpush1.msra.mxu0 0.0
    %2725 = vmatprep.subr.mxu0 0.0
    %2726 = vmatpush1.msra.mxu0 0.0
    %2727 = vmatprep.subr.mxu0 0.0
    %2728 = vmatpush1.msra.mxu0 0.0
    %2729 = vmatprep.subr.mxu0 0.0
    %2730 = vmatpush1.msra.mxu0 0.0
    %2731 = vmatprep.subr.mxu0 0.0
    %2732 = vmatpush1.msra.mxu0 0.0
    %2733 = vmatprep.subr.mxu0 0.0
    %2734 = vmatpush1.msra.mxu0 0.0
    %2735 = vmatprep.subr.mxu0 0.0
    %2736 = vmatpush1.msra.mxu0 0.0
    %2737 = vmatprep.subr.mxu0 0.0
    %2738 = vmatpush1.msra.mxu0 0.0
    %2739 = vmatprep.subr.mxu0 0.0
    %2740 = vmatpush1.msra.mxu0 0.0
    %2741 = vmatprep.subr.mxu0 0.0
    %2742 = vmatpush1.msra.mxu0 0.0
    %2743 = vmatprep.subr.mxu0 0.0
    %2744 = vmatpush1.msra.mxu0 0.0
    %2745 = vmatprep.subr.mxu0 0.0
    %2746 = vmatpush1.msra.mxu0 0.0
    %2747 = vmatprep.subr.mxu0 0.0
    %2748 = vmatpush1.msra.mxu0 0.0
    %2749 = vmatprep.subr.mxu0 0.0
    %2750 = vmatpush1.msra.mxu0 0.0
    %2751 = vmatprep.subr.mxu0 0.0
    %2752 = vmatpush1.msra.mxu0 0.0
    %2753 = vmatprep.subr.mxu0 0.0
    %2754 = vmatpush1.msra.mxu0 0.0
    %2755 = vmatprep.subr.mxu0 0.0
    %2756 = vmatpush1.msra.mxu0 0.0
    %2757 = vmatprep.subr.mxu0 0.0
    %2758 = vmatpush1.msra.mxu0 0.0
    %2759 = vmatprep.subr.mxu0 0.0
    %2760 = vmatpush1.msra.mxu0 0.0
    %2761 = vmatprep.subr.mxu0 0.0
    %2762 = vmatpush1.msra.mxu0 0.0
    %2763 = vmatprep.subr.mxu0 0.0
    %2764 = vmatpush1.msra.mxu0 0.0
    %2765 = vmatprep.subr.mxu0 0.0
    %2766 = vmatpush1.msra.mxu0 0.0
    %2767 = vmatprep.subr.mxu0 0.0
    %2768 = vmatpush1.msra.mxu0 0.0
    %2769 = vmatprep.mubr.f32.mxu0 0.0
    %2770 = vmatmul.mubr.f32.gmra.mrb[0].mxu0 %v2703
    %v2771 = vpop.f32.mrb[0].mxu0
    %v2772 = vadd.f32 0.0, %v2771
    %v2773 = vpop.f32.mrb[0].mxu0
    %2774 = vdwg.mxu0
    %v2776 = vsel %vm2478, %v2256, 0
    %2778 = vmatprep.subr.mxu0 0.0
    %2779 = vmatpush1.msra.mxu0 %v2484
    %2780 = vmatprep.subr.mxu0 0.0
    %2781 = vmatpush1.msra.mxu0 0.0
    %2782 = vmatprep.subr.mxu0 0.0
    %2783 = vmatpush1.msra.mxu0 0.0
    %2784 = vmatprep.subr.mxu0 0.0
    %2785 = vmatpush1.msra.mxu0 0.0
    %2786 = vmatprep.subr.mxu0 0.0
    %2787 = vmatpush1.msra.mxu0 0.0
    %2788 = vmatprep.subr.mxu0 0.0
    %2789 = vmatpush1.msra.mxu0 0.0
    %2790 = vmatprep.subr.mxu0 0.0
    %2791 = vmatpush1.msra.mxu0 0.0
    %2792 = vmatprep.subr.mxu0 0.0
    %2793 = vmatpush1.msra.mxu0 0.0
    %2794 = vmatprep.subr.mxu0 0.0
    %2795 = vmatpush1.msra.mxu0 0.0
    %2796 = vmatprep.subr.mxu0 0.0
    %2797 = vmatpush1.msra.mxu0 0.0
    %2798 = vmatprep.subr.mxu0 0.0
    %2799 = vmatpush1.msra.mxu0 0.0
    %2800 = vmatprep.subr.mxu0 0.0
    %2801 = vmatpush1.msra.mxu0 0.0
    %2802 = vmatprep.subr.mxu0 0.0
    %2803 = vmatpush1.msra.mxu0 0.0
    %2804 = vmatprep.subr.mxu0 0.0
    %2805 = vmatpush1.msra.mxu0 0.0
    %2806 = vmatprep.subr.mxu0 0.0
    %2807 = vmatpush1.msra.mxu0 0.0
    %2808 = vmatprep.subr.mxu0 0.0
    %2809 = vmatpush1.msra.mxu0 0.0
    %2810 = vmatprep.subr.mxu0 0.0
    %2811 = vmatpush1.msra.mxu0 0.0
    %2812 = vmatprep.subr.mxu0 0.0
    %2813 = vmatpush1.msra.mxu0 0.0
    %2814 = vmatprep.subr.mxu0 0.0
    %2815 = vmatpush1.msra.mxu0 0.0
    %2816 = vmatprep.subr.mxu0 0.0
    %2817 = vmatpush1.msra.mxu0 0.0
    %2818 = vmatprep.subr.mxu0 0.0
    %2819 = vmatpush1.msra.mxu0 0.0
    %2820 = vmatprep.subr.mxu0 0.0
    %2821 = vmatpush1.msra.mxu0 0.0
    %2822 = vmatprep.subr.mxu0 0.0
    %2823 = vmatpush1.msra.mxu0 0.0
    %2824 = vmatprep.subr.mxu0 0.0
    %2825 = vmatpush1.msra.mxu0 0.0
    %2826 = vmatprep.subr.mxu0 0.0
    %2827 = vmatpush1.msra.mxu0 0.0
    %2828 = vmatprep.subr.mxu0 0.0
    %2829 = vmatpush1.msra.mxu0 0.0
    %2830 = vmatprep.subr.mxu0 0.0
    %2831 = vmatpush1.msra.mxu0 0.0
    %2832 = vmatprep.subr.mxu0 0.0
    %2833 = vmatpush1.msra.mxu0 0.0
    %2834 = vmatprep.subr.mxu0 0.0
    %2835 = vmatpush1.msra.mxu0 0.0
    %2836 = vmatprep.subr.mxu0 0.0
    %2837 = vmatpush1.msra.mxu0 0.0
    %2838 = vmatprep.subr.mxu0 0.0
    %2839 = vmatpush1.msra.mxu0 0.0
    %2840 = vmatprep.subr.mxu0 0.0
    %2841 = vmatpush1.msra.mxu0 0.0
    %2842 = vmatprep.mubr.f32.mxu0 0.0
    %2843 = vmatmul.mubr.f32.gmra.mrb[0].mxu0 %v2776
    %v2844 = vpop.f32.mrb[0].mxu0
    %v2845 = vadd.f32 0.0, %v2844
    %v2846 = vpop.f32.mrb[0].mxu0
    %2847 = vdwg.mxu0
    %v2849 = vsel %vm2478, %v2326, 0
    %2851 = vmatprep.subr.mxu0 0.0
    %2852 = vmatpush1.msra.mxu0 %v2484
    %2853 = vmatprep.subr.mxu0 0.0
    %2854 = vmatpush1.msra.mxu0 0.0
    %2855 = vmatprep.subr.mxu0 0.0
    %2856 = vmatpush1.msra.mxu0 0.0
    %2857 = vmatprep.subr.mxu0 0.0
    %2858 = vmatpush1.msra.mxu0 0.0
    %2859 = vmatprep.subr.mxu0 0.0
    %2860 = vmatpush1.msra.mxu0 0.0
    %2861 = vmatprep.subr.mxu0 0.0
    %2862 = vmatpush1.msra.mxu0 0.0
    %2863 = vmatprep.subr.mxu0 0.0
    %2864 = vmatpush1.msra.mxu0 0.0
    %2865 = vmatprep.subr.mxu0 0.0
    %2866 = vmatpush1.msra.mxu0 0.0
    %2867 = vmatprep.subr.mxu0 0.0
    %2868 = vmatpush1.msra.mxu0 0.0
    %2869 = vmatprep.subr.mxu0 0.0
    %2870 = vmatpush1.msra.mxu0 0.0
    %2871 = vmatprep.subr.mxu0 0.0
    %2872 = vmatpush1.msra.mxu0 0.0
    %2873 = vmatprep.subr.mxu0 0.0
    %2874 = vmatpush1.msra.mxu0 0.0
    %2875 = vmatprep.subr.mxu0 0.0
    %2876 = vmatpush1.msra.mxu0 0.0
    %2877 = vmatprep.subr.mxu0 0.0
    %2878 = vmatpush1.msra.mxu0 0.0
    %2879 = vmatprep.subr.mxu0 0.0
    %2880 = vmatpush1.msra.mxu0 0.0
    %2881 = vmatprep.subr.mxu0 0.0
    %2882 = vmatpush1.msra.mxu0 0.0
    %2883 = vmatprep.subr.mxu0 0.0
    %2884 = vmatpush1.msra.mxu0 0.0
    %2885 = vmatprep.subr.mxu0 0.0
    %2886 = vmatpush1.msra.mxu0 0.0
    %2887 = vmatprep.subr.mxu0 0.0
    %2888 = vmatpush1.msra.mxu0 0.0
    %2889 = vmatprep.subr.mxu0 0.0
    %2890 = vmatpush1.msra.mxu0 0.0
    %2891 = vmatprep.subr.mxu0 0.0
    %2892 = vmatpush1.msra.mxu0 0.0
    %2893 = vmatprep.subr.mxu0 0.0
    %2894 = vmatpush1.msra.mxu0 0.0
    %2895 = vmatprep.subr.mxu0 0.0
    %2896 = vmatpush1.msra.mxu0 0.0
    %2897 = vmatprep.subr.mxu0 0.0
    %2898 = vmatpush1.msra.mxu0 0.0
    %2899 = vmatprep.subr.mxu0 0.0
    %2900 = vmatpush1.msra.mxu0 0.0
    %2901 = vmatprep.subr.mxu0 0.0
    %2902 = vmatpush1.msra.mxu0 0.0
    %2903 = vmatprep.subr.mxu0 0.0
    %2904 = vmatpush1.msra.mxu0 0.0
    %2905 = vmatprep.subr.mxu0 0.0
    %2906 = vmatpush1.msra.mxu0 0.0
    %2907 = vmatprep.subr.mxu0 0.0
    %2908 = vmatpush1.msra.mxu0 0.0
    %2909 = vmatprep.subr.mxu0 0.0
    %2910 = vmatpush1.msra.mxu0 0.0
    %2911 = vmatprep.subr.mxu0 0.0
    %2912 = vmatpush1.msra.mxu0 0.0
    %2913 = vmatprep.subr.mxu0 0.0
    %2914 = vmatpush1.msra.mxu0 0.0
    %2915 = vmatprep.mubr.f32.mxu0 0.0
    %2916 = vmatmul.mubr.f32.gmra.mrb[0].mxu0 %v2849
    %v2917 = vpop.f32.mrb[0].mxu0
    %v2918 = vadd.f32 0.0, %v2917
    %v2919 = vpop.f32.mrb[0].mxu0
    %2920 = vdwg.mxu0
    %v2922 = vsel %vm2478, %v2396, 0
    %2924 = vmatprep.subr.mxu0 0.0
    %2925 = vmatpush1.msra.mxu0 %v2484
    %2926 = vmatprep.subr.mxu0 0.0
    %2927 = vmatpush1.msra.mxu0 0.0
    %2928 = vmatprep.subr.mxu0 0.0
    %2929 = vmatpush1.msra.mxu0 0.0
    %2930 = vmatprep.subr.mxu0 0.0
    %2931 = vmatpush1.msra.mxu0 0.0
    %2932 = vmatprep.subr.mxu0 0.0
    %2933 = vmatpush1.msra.mxu0 0.0
    %2934 = vmatprep.subr.mxu0 0.0
    %2935 = vmatpush1.msra.mxu0 0.0
    %2936 = vmatprep.subr.mxu0 0.0
    %2937 = vmatpush1.msra.mxu0 0.0
    %2938 = vmatprep.subr.mxu0 0.0
    %2939 = vmatpush1.msra.mxu0 0.0
    %2940 = vmatprep.subr.mxu0 0.0
    %2941 = vmatpush1.msra.mxu0 0.0
    %2942 = vmatprep.subr.mxu0 0.0
    %2943 = vmatpush1.msra.mxu0 0.0
    %2944 = vmatprep.subr.mxu0 0.0
    %2945 = vmatpush1.msra.mxu0 0.0
    %2946 = vmatprep.subr.mxu0 0.0
    %2947 = vmatpush1.msra.mxu0 0.0
    %2948 = vmatprep.subr.mxu0 0.0
    %2949 = vmatpush1.msra.mxu0 0.0
    %2950 = vmatprep.subr.mxu0 0.0
    %2951 = vmatpush1.msra.mxu0 0.0
    %2952 = vmatprep.subr.mxu0 0.0
    %2953 = vmatpush1.msra.mxu0 0.0
    %2954 = vmatprep.subr.mxu0 0.0
    %2955 = vmatpush1.msra.mxu0 0.0
    %2956 = vmatprep.subr.mxu0 0.0
    %2957 = vmatpush1.msra.mxu0 0.0
    %2958 = vmatprep.subr.mxu0 0.0
    %2959 = vmatpush1.msra.mxu0 0.0
    %2960 = vmatprep.subr.mxu0 0.0
    %2961 = vmatpush1.msra.mxu0 0.0
    %2962 = vmatprep.subr.mxu0 0.0
    %2963 = vmatpush1.msra.mxu0 0.0
    %2964 = vmatprep.subr.mxu0 0.0
    %2965 = vmatpush1.msra.mxu0 0.0
    %2966 = vmatprep.subr.mxu0 0.0
    %2967 = vmatpush1.msra.mxu0 0.0
    %2968 = vmatprep.subr.mxu0 0.0
    %2969 = vmatpush1.msra.mxu0 0.0
    %2970 = vmatprep.subr.mxu0 0.0
    %2971 = vmatpush1.msra.mxu0 0.0
    %2972 = vmatprep.subr.mxu0 0.0
    %2973 = vmatpush1.msra.mxu0 0.0
    %2974 = vmatprep.subr.mxu0 0.0
    %2975 = vmatpush1.msra.mxu0 0.0
    %2976 = vmatprep.subr.mxu0 0.0
    %2977 = vmatpush1.msra.mxu0 0.0
    %2978 = vmatprep.subr.mxu0 0.0
    %2979 = vmatpush1.msra.mxu0 0.0
    %2980 = vmatprep.subr.mxu0 0.0
    %2981 = vmatpush1.msra.mxu0 0.0
    %2982 = vmatprep.subr.mxu0 0.0
    %2983 = vmatpush1.msra.mxu0 0.0
    %2984 = vmatprep.subr.mxu0 0.0
    %2985 = vmatpush1.msra.mxu0 0.0
    %2986 = vmatprep.subr.mxu0 0.0
    %2987 = vmatpush1.msra.mxu0 0.0
    %2988 = vmatprep.mubr.f32.mxu0 0.0
    %2989 = vmatmul.mubr.f32.gmra.mrb[0].mxu0 %v2922
    %v2990 = vpop.f32.mrb[0].mxu0
    %v2991 = vadd.f32 0.0, %v2990
    %v2992 = vpop.f32.mrb[0].mxu0
    %2993 = vdwg.mxu0
    %v2995 = vsel %vm2478, %v2466, 0
    %2997 = vmatprep.subr.mxu0 0.0
    %2998 = vmatpush1.msra.mxu0 %v2484
    %2999 = vmatprep.subr.mxu0 0.0
    %3000 = vmatpush1.msra.mxu0 0.0
    %3001 = vmatprep.subr.mxu0 0.0
    %3002 = vmatpush1.msra.mxu0 0.0
    %3003 = vmatprep.subr.mxu0 0.0
    %3004 = vmatpush1.msra.mxu0 0.0
    %3005 = vmatprep.subr.mxu0 0.0
    %3006 = vmatpush1.msra.mxu0 0.0
    %3007 = vmatprep.subr.mxu0 0.0
    %3008 = vmatpush1.msra.mxu0 0.0
    %3009 = vmatprep.subr.mxu0 0.0
    %3010 = vmatpush1.msra.mxu0 0.0
    %3011 = vmatprep.subr.mxu0 0.0
    %3012 = vmatpush1.msra.mxu0 0.0
    %3013 = vmatprep.subr.mxu0 0.0
    %3014 = vmatpush1.msra.mxu0 0.0
    %3015 = vmatprep.subr.mxu0 0.0
    %3016 = vmatpush1.msra.mxu0 0.0
    %3017 = vmatprep.subr.mxu0 0.0
    %3018 = vmatpush1.msra.mxu0 0.0
    %3019 = vmatprep.subr.mxu0 0.0
    %3020 = vmatpush1.msra.mxu0 0.0
    %3021 = vmatprep.subr.mxu0 0.0
    %3022 = vmatpush1.msra.mxu0 0.0
    %3023 = vmatprep.subr.mxu0 0.0
    %3024 = vmatpush1.msra.mxu0 0.0
    %3025 = vmatprep.subr.mxu0 0.0
    %3026 = vmatpush1.msra.mxu0 0.0
    %3027 = vmatprep.subr.mxu0 0.0
    %3028 = vmatpush1.msra.mxu0 0.0
    %3029 = vmatprep.subr.mxu0 0.0
    %3030 = vmatpush1.msra.mxu0 0.0
    %3031 = vmatprep.subr.mxu0 0.0
    %3032 = vmatpush1.msra.mxu0 0.0
    %3033 = vmatprep.subr.mxu0 0.0
    %3034 = vmatpush1.msra.mxu0 0.0
    %3035 = vmatprep.subr.mxu0 0.0
    %3036 = vmatpush1.msra.mxu0 0.0
    %3037 = vmatprep.subr.mxu0 0.0
    %3038 = vmatpush1.msra.mxu0 0.0
    %3039 = vmatprep.subr.mxu0 0.0
    %3040 = vmatpush1.msra.mxu0 0.0
    %3041 = vmatprep.subr.mxu0 0.0
    %3042 = vmatpush1.msra.mxu0 0.0
    %3043 = vmatprep.subr.mxu0 0.0
    %3044 = vmatpush1.msra.mxu0 0.0
    %3045 = vmatprep.subr.mxu0 0.0
    %3046 = vmatpush1.msra.mxu0 0.0
    %3047 = vmatprep.subr.mxu0 0.0
    %3048 = vmatpush1.msra.mxu0 0.0
    %3049 = vmatprep.subr.mxu0 0.0
    %3050 = vmatpush1.msra.mxu0 0.0
    %3051 = vmatprep.subr.mxu0 0.0
    %3052 = vmatpush1.msra.mxu0 0.0
    %3053 = vmatprep.subr.mxu0 0.0
    %3054 = vmatpush1.msra.mxu0 0.0
    %3055 = vmatprep.subr.mxu0 0.0
    %3056 = vmatpush1.msra.mxu0 0.0
    %3057 = vmatprep.subr.mxu0 0.0
    %3058 = vmatpush1.msra.mxu0 0.0
    %3059 = vmatprep.subr.mxu0 0.0
    %3060 = vmatpush1.msra.mxu0 0.0
    %3061 = vmatprep.mubr.f32.mxu0 0.0
    %3062 = vmatmul.mubr.f32.gmra.mrb[0].mxu0 %v2995
    %v3063 = vpop.f32.mrb[0].mxu0
    %v3064 = vadd.f32 0.0, %v3063
    %v3065 = vpop.f32.mrb[0].mxu0
    %3066 = vdwg.mxu0
    %v3067 = vsel %vm2478, %v102, 0
    %v3070 = vsel %vm2482, %v2553, 0
    %3072 = vmatprep.subr.mxu0 0.0
    %3073 = vmatpush1.msra.mxu0 %v3070
    %3074 = vmatprep.subr.mxu0 0.0
    %3075 = vmatpush1.msra.mxu0 0.0
    %3076 = vmatprep.subr.mxu0 0.0
    %3077 = vmatpush1.msra.mxu0 0.0
    %3078 = vmatprep.subr.mxu0 0.0
    %3079 = vmatpush1.msra.mxu0 0.0
    %3080 = vmatprep.subr.mxu0 0.0
    %3081 = vmatpush1.msra.mxu0 0.0
    %3082 = vmatprep.subr.mxu0 0.0
    %3083 = vmatpush1.msra.mxu0 0.0
    %3084 = vmatprep.subr.mxu0 0.0
    %3085 = vmatpush1.msra.mxu0 0.0
    %3086 = vmatprep.subr.mxu0 0.0
    %3087 = vmatpush1.msra.mxu0 0.0
    %3088 = vmatprep.subr.mxu0 0.0
    %3089 = vmatpush1.msra.mxu0 0.0
    %3090 = vmatprep.subr.mxu0 0.0
    %3091 = vmatpush1.msra.mxu0 0.0
    %3092 = vmatprep.subr.mxu0 0.0
    %3093 = vmatpush1.msra.mxu0 0.0
    %3094 = vmatprep.subr.mxu0 0.0
    %3095 = vmatpush1.msra.mxu0 0.0
    %3096 = vmatprep.subr.mxu0 0.0
    %3097 = vmatpush1.msra.mxu0 0.0
    %3098 = vmatprep.subr.mxu0 0.0
    %3099 = vmatpush1.msra.mxu0 0.0
    %3100 = vmatprep.subr.mxu0 0.0
    %3101 = vmatpush1.msra.mxu0 0.0
    %3102 = vmatprep.subr.mxu0 0.0
    %3103 = vmatpush1.msra.mxu0 0.0
    %3104 = vmatprep.subr.mxu0 0.0
    %3105 = vmatpush1.msra.mxu0 0.0
    %3106 = vmatprep.subr.mxu0 0.0
    %3107 = vmatpush1.msra.mxu0 0.0
    %3108 = vmatprep.subr.mxu0 0.0
    %3109 = vmatpush1.msra.mxu0 0.0
    %3110 = vmatprep.subr.mxu0 0.0
    %3111 = vmatpush1.msra.mxu0 0.0
    %3112 = vmatprep.subr.mxu0 0.0
    %3113 = vmatpush1.msra.mxu0 0.0
    %3114 = vmatprep.subr.mxu0 0.0
    %3115 = vmatpush1.msra.mxu0 0.0
    %3116 = vmatprep.subr.mxu0 0.0
    %3117 = vmatpush1.msra.mxu0 0.0
    %3118 = vmatprep.subr.mxu0 0.0
    %3119 = vmatpush1.msra.mxu0 0.0
    %3120 = vmatprep.subr.mxu0 0.0
    %3121 = vmatpush1.msra.mxu0 0.0
    %3122 = vmatprep.subr.mxu0 0.0
    %3123 = vmatpush1.msra.mxu0 0.0
    %3124 = vmatprep.subr.mxu0 0.0
    %3125 = vmatpush1.msra.mxu0 0.0
    %3126 = vmatprep.subr.mxu0 0.0
    %3127 = vmatpush1.msra.mxu0 0.0
    %3128 = vmatprep.subr.mxu0 0.0
    %3129 = vmatpush1.msra.mxu0 0.0
    %3130 = vmatprep.subr.mxu0 0.0
    %3131 = vmatpush1.msra.mxu0 0.0
    %3132 = vmatprep.subr.mxu0 0.0
    %3133 = vmatpush1.msra.mxu0 0.0
    %3134 = vmatprep.subr.mxu0 0.0
    %3135 = vmatpush1.msra.mxu0 0.0
    %3136 = vmatprep.mubr.f32.mxu0 0.0
    %3137 = vmatmul.mubr.f32.gmra.mrb[0].mxu0 %v3067
    %v3138 = vpop.f32.mrb[0].mxu0
    %v3139 = vadd.f32 0.0, %v3138
    %v3140 = vpop.f32.mrb[0].mxu0
    %3141 = vdwg.mxu0
    %v3143 = vsel %vm2482, %v2626, 0
    %3145 = vmatprep.subr.mxu0 0.0
    %3146 = vmatpush1.msra.mxu0 %v3143
    %3147 = vmatprep.subr.mxu0 0.0
    %3148 = vmatpush1.msra.mxu0 0.0
    %3149 = vmatprep.subr.mxu0 0.0
    %3150 = vmatpush1.msra.mxu0 0.0
    %3151 = vmatprep.subr.mxu0 0.0
    %3152 = vmatpush1.msra.mxu0 0.0
    %3153 = vmatprep.subr.mxu0 0.0
    %3154 = vmatpush1.msra.mxu0 0.0
    %3155 = vmatprep.subr.mxu0 0.0
    %3156 = vmatpush1.msra.mxu0 0.0
    %3157 = vmatprep.subr.mxu0 0.0
    %3158 = vmatpush1.msra.mxu0 0.0
    %3159 = vmatprep.subr.mxu0 0.0
    %3160 = vmatpush1.msra.mxu0 0.0
    %3161 = vmatprep.subr.mxu0 0.0
    %3162 = vmatpush1.msra.mxu0 0.0
    %3163 = vmatprep.subr.mxu0 0.0
    %3164 = vmatpush1.msra.mxu0 0.0
    %3165 = vmatprep.subr.mxu0 0.0
    %3166 = vmatpush1.msra.mxu0 0.0
    %3167 = vmatprep.subr.mxu0 0.0
    %3168 = vmatpush1.msra.mxu0 0.0
    %3169 = vmatprep.subr.mxu0 0.0
    %3170 = vmatpush1.msra.mxu0 0.0
    %3171 = vmatprep.subr.mxu0 0.0
    %3172 = vmatpush1.msra.mxu0 0.0
    %3173 = vmatprep.subr.mxu0 0.0
    %3174 = vmatpush1.msra.mxu0 0.0
    %3175 = vmatprep.subr.mxu0 0.0
    %3176 = vmatpush1.msra.mxu0 0.0
    %3177 = vmatprep.subr.mxu0 0.0
    %3178 = vmatpush1.msra.mxu0 0.0
    %3179 = vmatprep.subr.mxu0 0.0
    %3180 = vmatpush1.msra.mxu0 0.0
    %3181 = vmatprep.subr.mxu0 0.0
    %3182 = vmatpush1.msra.mxu0 0.0
    %3183 = vmatprep.subr.mxu0 0.0
    %3184 = vmatpush1.msra.mxu0 0.0
    %3185 = vmatprep.subr.mxu0 0.0
    %3186 = vmatpush1.msra.mxu0 0.0
    %3187 = vmatprep.subr.mxu0 0.0
    %3188 = vmatpush1.msra.mxu0 0.0
    %3189 = vmatprep.subr.mxu0 0.0
    %3190 = vmatpush1.msra.mxu0 0.0
    %3191 = vmatprep.subr.mxu0 0.0
    %3192 = vmatpush1.msra.mxu0 0.0
    %3193 = vmatprep.subr.mxu0 0.0
    %3194 = vmatpush1.msra.mxu0 0.0
    %3195 = vmatprep.subr.mxu0 0.0
    %3196 = vmatpush1.msra.mxu0 0.0
    %3197 = vmatprep.subr.mxu0 0.0
    %3198 = vmatpush1.msra.mxu0 0.0
    %3199 = vmatprep.subr.mxu0 0.0
    %3200 = vmatpush1.msra.mxu0 0.0
    %3201 = vmatprep.subr.mxu0 0.0
    %3202 = vmatpush1.msra.mxu0 0.0
    %3203 = vmatprep.subr.mxu0 0.0
    %3204 = vmatpush1.msra.mxu0 0.0
    %3205 = vmatprep.subr.mxu0 0.0
    %3206 = vmatpush1.msra.mxu0 0.0
    %3207 = vmatprep.subr.mxu0 0.0
    %3208 = vmatpush1.msra.mxu0 0.0
    %3209 = vmatprep.mubr.f32.mxu0 0.0
    %3210 = vmatmul.mubr.f32.gmra.mrb[0].mxu0 %v3067
    %v3211 = vpop.f32.mrb[0].mxu0
    %v3212 = vadd.f32 0.0, %v3211
    %v3213 = vpop.f32.mrb[0].mxu0
    %3214 = vdwg.mxu0
    %v3216 = vsel %vm2482, %v2699, 0
    %3218 = vmatprep.subr.mxu0 0.0
    %3219 = vmatpush1.msra.mxu0 %v3216
    %3220 = vmatprep.subr.mxu0 0.0
    %3221 = vmatpush1.msra.mxu0 0.0
    %3222 = vmatprep.subr.mxu0 0.0
    %3223 = vmatpush1.msra.mxu0 0.0
    %3224 = vmatprep.subr.mxu0 0.0
    %3225 = vmatpush1.msra.mxu0 0.0
    %3226 = vmatprep.subr.mxu0 0.0
    %3227 = vmatpush1.msra.mxu0 0.0
    %3228 = vmatprep.subr.mxu0 0.0
    %3229 = vmatpush1.msra.mxu0 0.0
    %3230 = vmatprep.subr.mxu0 0.0
    %3231 = vmatpush1.msra.mxu0 0.0
    %3232 = vmatprep.subr.mxu0 0.0
    %3233 = vmatpush1.msra.mxu0 0.0
    %3234 = vmatprep.subr.mxu0 0.0
    %3235 = vmatpush1.msra.mxu0 0.0
    %3236 = vmatprep.subr.mxu0 0.0
    %3237 = vmatpush1.msra.mxu0 0.0
    %3238 = vmatprep.subr.mxu0 0.0
    %3239 = vmatpush1.msra.mxu0 0.0
    %3240 = vmatprep.subr.mxu0 0.0
    %3241 = vmatpush1.msra.mxu0 0.0
    %3242 = vmatprep.subr.mxu0 0.0
    %3243 = vmatpush1.msra.mxu0 0.0
    %3244 = vmatprep.subr.mxu0 0.0
    %3245 = vmatpush1.msra.mxu0 0.0
    %3246 = vmatprep.subr.mxu0 0.0
    %3247 = vmatpush1.msra.mxu0 0.0
    %3248 = vmatprep.subr.mxu0 0.0
    %3249 = vmatpush1.msra.mxu0 0.0
    %3250 = vmatprep.subr.mxu0 0.0
    %3251 = vmatpush1.msra.mxu0 0.0
    %3252 = vmatprep.subr.mxu0 0.0
    %3253 = vmatpush1.msra.mxu0 0.0
    %3254 = vmatprep.subr.mxu0 0.0
    %3255 = vmatpush1.msra.mxu0 0.0
    %3256 = vmatprep.subr.mxu0 0.0
    %3257 = vmatpush1.msra.mxu0 0.0
    %3258 = vmatprep.subr.mxu0 0.0
    %3259 = vmatpush1.msra.mxu0 0.0
    %3260 = vmatprep.subr.mxu0 0.0
    %3261 = vmatpush1.msra.mxu0 0.0
    %3262 = vmatprep.subr.mxu0 0.0
    %3263 = vmatpush1.msra.mxu0 0.0
    %3264 = vmatprep.subr.mxu0 0.0
    %3265 = vmatpush1.msra.mxu0 0.0
    %3266 = vmatprep.subr.mxu0 0.0
    %3267 = vmatpush1.msra.mxu0 0.0
    %3268 = vmatprep.subr.mxu0 0.0
    %3269 = vmatpush1.msra.mxu0 0.0
    %3270 = vmatprep.subr.mxu0 0.0
    %3271 = vmatpush1.msra.mxu0 0.0
    %3272 = vmatprep.subr.mxu0 0.0
    %3273 = vmatpush1.msra.mxu0 0.0
    %3274 = vmatprep.subr.mxu0 0.0
    %3275 = vmatpush1.msra.mxu0 0.0
    %3276 = vmatprep.subr.mxu0 0.0
    %3277 = vmatpush1.msra.mxu0 0.0
    %3278 = vmatprep.subr.mxu0 0.0
    %3279 = vmatpush1.msra.mxu0 0.0
    %3280 = vmatprep.subr.mxu0 0.0
    %3281 = vmatpush1.msra.mxu0 0.0
    %3282 = vmatprep.mubr.f32.mxu0 0.0
    %3283 = vmatmul.mubr.f32.gmra.mrb[0].mxu0 %v3067
    %v3284 = vpop.f32.mrb[0].mxu0
    %v3285 = vadd.f32 0.0, %v3284
    %v3286 = vpop.f32.mrb[0].mxu0
    %3287 = vdwg.mxu0
    %v3289 = vsel %vm2482, %v2772, 0
    %3291 = vmatprep.subr.mxu0 0.0
    %3292 = vmatpush1.msra.mxu0 %v3289
    %3293 = vmatprep.subr.mxu0 0.0
    %3294 = vmatpush1.msra.mxu0 0.0
    %3295 = vmatprep.subr.mxu0 0.0
    %3296 = vmatpush1.msra.mxu0 0.0
    %3297 = vmatprep.subr.mxu0 0.0
    %3298 = vmatpush1.msra.mxu0 0.0
    %3299 = vmatprep.subr.mxu0 0.0
    %3300 = vmatpush1.msra.mxu0 0.0
    %3301 = vmatprep.subr.mxu0 0.0
    %3302 = vmatpush1.msra.mxu0 0.0
    %3303 = vmatprep.subr.mxu0 0.0
    %3304 = vmatpush1.msra.mxu0 0.0
    %3305 = vmatprep.subr.mxu0 0.0
    %3306 = vmatpush1.msra.mxu0 0.0
    %3307 = vmatprep.subr.mxu0 0.0
    %3308 = vmatpush1.msra.mxu0 0.0
    %3309 = vmatprep.subr.mxu0 0.0
    %3310 = vmatpush1.msra.mxu0 0.0
    %3311 = vmatprep.subr.mxu0 0.0
    %3312 = vmatpush1.msra.mxu0 0.0
    %3313 = vmatprep.subr.mxu0 0.0
    %3314 = vmatpush1.msra.mxu0 0.0
    %3315 = vmatprep.subr.mxu0 0.0
    %3316 = vmatpush1.msra.mxu0 0.0
    %3317 = vmatprep.subr.mxu0 0.0
    %3318 = vmatpush1.msra.mxu0 0.0
    %3319 = vmatprep.subr.mxu0 0.0
    %3320 = vmatpush1.msra.mxu0 0.0
    %3321 = vmatprep.subr.mxu0 0.0
    %3322 = vmatpush1.msra.mxu0 0.0
    %3323 = vmatprep.subr.mxu0 0.0
    %3324 = vmatpush1.msra.mxu0 0.0
    %3325 = vmatprep.subr.mxu0 0.0
    %3326 = vmatpush1.msra.mxu0 0.0
    %3327 = vmatprep.subr.mxu0 0.0
    %3328 = vmatpush1.msra.mxu0 0.0
    %3329 = vmatprep.subr.mxu0 0.0
    %3330 = vmatpush1.msra.mxu0 0.0
    %3331 = vmatprep.subr.mxu0 0.0
    %3332 = vmatpush1.msra.mxu0 0.0
    %3333 = vmatprep.subr.mxu0 0.0
    %3334 = vmatpush1.msra.mxu0 0.0
    %3335 = vmatprep.subr.mxu0 0.0
    %3336 = vmatpush1.msra.mxu0 0.0
    %3337 = vmatprep.subr.mxu0 0.0
    %3338 = vmatpush1.msra.mxu0 0.0
    %3339 = vmatprep.subr.mxu0 0.0
    %3340 = vmatpush1.msra.mxu0 0.0
    %3341 = vmatprep.subr.mxu0 0.0
    %3342 = vmatpush1.msra.mxu0 0.0
    %3343 = vmatprep.subr.mxu0 0.0
    %3344 = vmatpush1.msra.mxu0 0.0
    %3345 = vmatprep.subr.mxu0 0.0
    %3346 = vmatpush1.msra.mxu0 0.0
    %3347 = vmatprep.subr.mxu0 0.0
    %3348 = vmatpush1.msra.mxu0 0.0
    %3349 = vmatprep.subr.mxu0 0.0
    %3350 = vmatpush1.msra.mxu0 0.0
    %3351 = vmatprep.subr.mxu0 0.0
    %3352 = vmatpush1.msra.mxu0 0.0
    %3353 = vmatprep.subr.mxu0 0.0
    %3354 = vmatpush1.msra.mxu0 0.0
    %3355 = vmatprep.mubr.f32.mxu0 0.0
    %3356 = vmatmul.mubr.f32.gmra.mrb[0].mxu0 %v3067
    %v3357 = vpop.f32.mrb[0].mxu0
    %v3358 = vadd.f32 0.0, %v3357
    %v3359 = vpop.f32.mrb[0].mxu0
    %3360 = vdwg.mxu0
    %v3362 = vsel %vm2482, %v2845, 0
    %3364 = vmatprep.subr.mxu0 0.0
    %3365 = vmatpush1.msra.mxu0 %v3362
    %3366 = vmatprep.subr.mxu0 0.0
    %3367 = vmatpush1.msra.mxu0 0.0
    %3368 = vmatprep.subr.mxu0 0.0
    %3369 = vmatpush1.msra.mxu0 0.0
    %3370 = vmatprep.subr.mxu0 0.0
    %3371 = vmatpush1.msra.mxu0 0.0
    %3372 = vmatprep.subr.mxu0 0.0
    %3373 = vmatpush1.msra.mxu0 0.0
    %3374 = vmatprep.subr.mxu0 0.0
    %3375 = vmatpush1.msra.mxu0 0.0
    %3376 = vmatprep.subr.mxu0 0.0
    %3377 = vmatpush1.msra.mxu0 0.0
    %3378 = vmatprep.subr.mxu0 0.0
    %3379 = vmatpush1.msra.mxu0 0.0
    %3380 = vmatprep.subr.mxu0 0.0
    %3381 = vmatpush1.msra.mxu0 0.0
    %3382 = vmatprep.subr.mxu0 0.0
    %3383 = vmatpush1.msra.mxu0 0.0
    %3384 = vmatprep.subr.mxu0 0.0
    %3385 = vmatpush1.msra.mxu0 0.0
    %3386 = vmatprep.subr.mxu0 0.0
    %3387 = vmatpush1.msra.mxu0 0.0
    %3388 = vmatprep.subr.mxu0 0.0
    %3389 = vmatpush1.msra.mxu0 0.0
    %3390 = vmatprep.subr.mxu0 0.0
    %3391 = vmatpush1.msra.mxu0 0.0
    %3392 = vmatprep.subr.mxu0 0.0
    %3393 = vmatpush1.msra.mxu0 0.0
    %3394 = vmatprep.subr.mxu0 0.0
    %3395 = vmatpush1.msra.mxu0 0.0
    %3396 = vmatprep.subr.mxu0 0.0
    %3397 = vmatpush1.msra.mxu0 0.0
    %3398 = vmatprep.subr.mxu0 0.0
    %3399 = vmatpush1.msra.mxu0 0.0
    %3400 = vmatprep.subr.mxu0 0.0
    %3401 = vmatpush1.msra.mxu0 0.0
    %3402 = vmatprep.subr.mxu0 0.0
    %3403 = vmatpush1.msra.mxu0 0.0
    %3404 = vmatprep.subr.mxu0 0.0
    %3405 = vmatpush1.msra.mxu0 0.0
    %3406 = vmatprep.subr.mxu0 0.0
    %3407 = vmatpush1.msra.mxu0 0.0
    %3408 = vmatprep.subr.mxu0 0.0
    %3409 = vmatpush1.msra.mxu0 0.0
    %3410 = vmatprep.subr.mxu0 0.0
    %3411 = vmatpush1.msra.mxu0 0.0
    %3412 = vmatprep.subr.mxu0 0.0
    %3413 = vmatpush1.msra.mxu0 0.0
    %3414 = vmatprep.subr.mxu0 0.0
    %3415 = vmatpush1.msra.mxu0 0.0
    %3416 = vmatprep.subr.mxu0 0.0
    %3417 = vmatpush1.msra.mxu0 0.0
    %3418 = vmatprep.subr.mxu0 0.0
    %3419 = vmatpush1.msra.mxu0 0.0
    %3420 = vmatprep.subr.mxu0 0.0
    %3421 = vmatpush1.msra.mxu0 0.0
    %3422 = vmatprep.subr.mxu0 0.0
    %3423 = vmatpush1.msra.mxu0 0.0
    %3424 = vmatprep.subr.mxu0 0.0
    %3425 = vmatpush1.msra.mxu0 0.0
    %3426 = vmatprep.subr.mxu0 0.0
    %3427 = vmatpush1.msra.mxu0 0.0
    %3428 = vmatprep.mubr.f32.mxu0 0.0
    %3429 = vmatmul.mubr.f32.gmra.mrb[0].mxu0 %v3067
    %v3430 = vpop.f32.mrb[0].mxu0
    %v3431 = vadd.f32 0.0, %v3430
    %v3432 = vpop.f32.mrb[0].mxu0
    %3433 = vdwg.mxu0
    %v3435 = vsel %vm2482, %v2918, 0
    %3437 = vmatprep.subr.mxu0 0.0
    %3438 = vmatpush1.msra.mxu0 %v3435
    %3439 = vmatprep.subr.mxu0 0.0
    %3440 = vmatpush1.msra.mxu0 0.0
    %3441 = vmatprep.subr.mxu0 0.0
    %3442 = vmatpush1.msra.mxu0 0.0
    %3443 = vmatprep.subr.mxu0 0.0
    %3444 = vmatpush1.msra.mxu0 0.0
    %3445 = vmatprep.subr.mxu0 0.0
    %3446 = vmatpush1.msra.mxu0 0.0
    %3447 = vmatprep.subr.mxu0 0.0
    %3448 = vmatpush1.msra.mxu0 0.0
    %3449 = vmatprep.subr.mxu0 0.0
    %3450 = vmatpush1.msra.mxu0 0.0
    %3451 = vmatprep.subr.mxu0 0.0
    %3452 = vmatpush1.msra.mxu0 0.0
    %3453 = vmatprep.subr.mxu0 0.0
    %3454 = vmatpush1.msra.mxu0 0.0
    %3455 = vmatprep.subr.mxu0 0.0
    %3456 = vmatpush1.msra.mxu0 0.0
    %3457 = vmatprep.subr.mxu0 0.0
    %3458 = vmatpush1.msra.mxu0 0.0
    %3459 = vmatprep.subr.mxu0 0.0
    %3460 = vmatpush1.msra.mxu0 0.0
    %3461 = vmatprep.subr.mxu0 0.0
    %3462 = vmatpush1.msra.mxu0 0.0
    %3463 = vmatprep.subr.mxu0 0.0
    %3464 = vmatpush1.msra.mxu0 0.0
    %3465 = vmatprep.subr.mxu0 0.0
    %3466 = vmatpush1.msra.mxu0 0.0
    %3467 = vmatprep.subr.mxu0 0.0
    %3468 = vmatpush1.msra.mxu0 0.0
    %3469 = vmatprep.subr.mxu0 0.0
    %3470 = vmatpush1.msra.mxu0 0.0
    %3471 = vmatprep.subr.mxu0 0.0
    %3472 = vmatpush1.msra.mxu0 0.0
    %3473 = vmatprep.subr.mxu0 0.0
    %3474 = vmatpush1.msra.mxu0 0.0
    %3475 = vmatprep.subr.mxu0 0.0
    %3476 = vmatpush1.msra.mxu0 0.0
    %3477 = vmatprep.subr.mxu0 0.0
    %3478 = vmatpush1.msra.mxu0 0.0
    %3479 = vmatprep.subr.mxu0 0.0
    %3480 = vmatpush1.msra.mxu0 0.0
    %3481 = vmatprep.subr.mxu0 0.0
    %3482 = vmatpush1.msra.mxu0 0.0
    %3483 = vmatprep.subr.mxu0 0.0
    %3484 = vmatpush1.msra.mxu0 0.0
    %3485 = vmatprep.subr.mxu0 0.0
    %3486 = vmatpush1.msra.mxu0 0.0
    %3487 = vmatprep.subr.mxu0 0.0
    %3488 = vmatpush1.msra.mxu0 0.0
    %3489 = vmatprep.subr.mxu0 0.0
    %3490 = vmatpush1.msra.mxu0 0.0
    %3491 = vmatprep.subr.mxu0 0.0
    %3492 = vmatpush1.msra.mxu0 0.0
    %3493 = vmatprep.subr.mxu0 0.0
    %3494 = vmatpush1.msra.mxu0 0.0
    %3495 = vmatprep.subr.mxu0 0.0
    %3496 = vmatpush1.msra.mxu0 0.0
    %3497 = vmatprep.subr.mxu0 0.0
    %3498 = vmatpush1.msra.mxu0 0.0
    %3499 = vmatprep.subr.mxu0 0.0
    %3500 = vmatpush1.msra.mxu0 0.0
    %3501 = vmatprep.mubr.f32.mxu0 0.0
    %3502 = vmatmul.mubr.f32.gmra.mrb[0].mxu0 %v3067
    %v3503 = vpop.f32.mrb[0].mxu0
    %v3504 = vadd.f32 0.0, %v3503
    %v3505 = vpop.f32.mrb[0].mxu0
    %3506 = vdwg.mxu0
    %v3508 = vsel %vm2482, %v2991, 0
    %3510 = vmatprep.subr.mxu0 0.0
    %3511 = vmatpush1.msra.mxu0 %v3508
    %3512 = vmatprep.subr.mxu0 0.0
    %3513 = vmatpush1.msra.mxu0 0.0
    %3514 = vmatprep.subr.mxu0 0.0
    %3515 = vmatpush1.msra.mxu0 0.0
    %3516 = vmatprep.subr.mxu0 0.0
    %3517 = vmatpush1.msra.mxu0 0.0
    %3518 = vmatprep.subr.mxu0 0.0
    %3519 = vmatpush1.msra.mxu0 0.0
    %3520 = vmatprep.subr.mxu0 0.0
    %3521 = vmatpush1.msra.mxu0 0.0
    %3522 = vmatprep.subr.mxu0 0.0
    %3523 = vmatpush1.msra.mxu0 0.0
    %3524 = vmatprep.subr.mxu0 0.0
    %3525 = vmatpush1.msra.mxu0 0.0
    %3526 = vmatprep.subr.mxu0 0.0
    %3527 = vmatpush1.msra.mxu0 0.0
    %3528 = vmatprep.subr.mxu0 0.0
    %3529 = vmatpush1.msra.mxu0 0.0
    %3530 = vmatprep.subr.mxu0 0.0
    %3531 = vmatpush1.msra.mxu0 0.0
    %3532 = vmatprep.subr.mxu0 0.0
    %3533 = vmatpush1.msra.mxu0 0.0
    %3534 = vmatprep.subr.mxu0 0.0
    %3535 = vmatpush1.msra.mxu0 0.0
    %3536 = vmatprep.subr.mxu0 0.0
    %3537 = vmatpush1.msra.mxu0 0.0
    %3538 = vmatprep.subr.mxu0 0.0
    %3539 = vmatpush1.msra.mxu0 0.0
    %3540 = vmatprep.subr.mxu0 0.0
    %3541 = vmatpush1.msra.mxu0 0.0
    %3542 = vmatprep.subr.mxu0 0.0
    %3543 = vmatpush1.msra.mxu0 0.0
    %3544 = vmatprep.subr.mxu0 0.0
    %3545 = vmatpush1.msra.mxu0 0.0
    %3546 = vmatprep.subr.mxu0 0.0
    %3547 = vmatpush1.msra.mxu0 0.0
    %3548 = vmatprep.subr.mxu0 0.0
    %3549 = vmatpush1.msra.mxu0 0.0
    %3550 = vmatprep.subr.mxu0 0.0
    %3551 = vmatpush1.msra.mxu0 0.0
    %3552 = vmatprep.subr.mxu0 0.0
    %3553 = vmatpush1.msra.mxu0 0.0
    %3554 = vmatprep.subr.mxu0 0.0
    %3555 = vmatpush1.msra.mxu0 0.0
    %3556 = vmatprep.subr.mxu0 0.0
    %3557 = vmatpush1.msra.mxu0 0.0
    %3558 = vmatprep.subr.mxu0 0.0
    %3559 = vmatpush1.msra.mxu0 0.0
    %3560 = vmatprep.subr.mxu0 0.0
    %3561 = vmatpush1.msra.mxu0 0.0
    %3562 = vmatprep.subr.mxu0 0.0
    %3563 = vmatpush1.msra.mxu0 0.0
    %3564 = vmatprep.subr.mxu0 0.0
    %3565 = vmatpush1.msra.mxu0 0.0
    %3566 = vmatprep.subr.mxu0 0.0
    %3567 = vmatpush1.msra.mxu0 0.0
    %3568 = vmatprep.subr.mxu0 0.0
    %3569 = vmatpush1.msra.mxu0 0.0
    %3570 = vmatprep.subr.mxu0 0.0
    %3571 = vmatpush1.msra.mxu0 0.0
    %3572 = vmatprep.subr.mxu0 0.0
    %3573 = vmatpush1.msra.mxu0 0.0
    %3574 = vmatprep.mubr.f32.mxu0 0.0
    %3575 = vmatmul.mubr.f32.gmra.mrb[0].mxu0 %v3067
    %v3576 = vpop.f32.mrb[0].mxu0
    %v3577 = vadd.f32 0.0, %v3576
    %v3578 = vpop.f32.mrb[0].mxu0
    %3579 = vdwg.mxu0
    %v3581 = vsel %vm2482, %v3064, 0
    %3583 = vmatprep.subr.mxu0 0.0
    %3584 = vmatpush1.msra.mxu0 %v3581
    %3585 = vmatprep.subr.mxu0 0.0
    %3586 = vmatpush1.msra.mxu0 0.0
    %3587 = vmatprep.subr.mxu0 0.0
    %3588 = vmatpush1.msra.mxu0 0.0
    %3589 = vmatprep.subr.mxu0 0.0
    %3590 = vmatpush1.msra.mxu0 0.0
    %3591 = vmatprep.subr.mxu0 0.0
    %3592 = vmatpush1.msra.mxu0 0.0
    %3593 = vmatprep.subr.mxu0 0.0
    %3594 = vmatpush1.msra.mxu0 0.0
    %3595 = vmatprep.subr.mxu0 0.0
    %3596 = vmatpush1.msra.mxu0 0.0
    %3597 = vmatprep.subr.mxu0 0.0
    %3598 = vmatpush1.msra.mxu0 0.0
    %3599 = vmatprep.subr.mxu0 0.0
    %3600 = vmatpush1.msra.mxu0 0.0
    %3601 = vmatprep.subr.mxu0 0.0
    %3602 = vmatpush1.msra.mxu0 0.0
    %3603 = vmatprep.subr.mxu0 0.0
    %3604 = vmatpush1.msra.mxu0 0.0
    %3605 = vmatprep.subr.mxu0 0.0
    %3606 = vmatpush1.msra.mxu0 0.0
    %3607 = vmatprep.subr.mxu0 0.0
    %3608 = vmatpush1.msra.mxu0 0.0
    %3609 = vmatprep.subr.mxu0 0.0
    %3610 = vmatpush1.msra.mxu0 0.0
    %3611 = vmatprep.subr.mxu0 0.0
    %3612 = vmatpush1.msra.mxu0 0.0
    %3613 = vmatprep.subr.mxu0 0.0
    %3614 = vmatpush1.msra.mxu0 0.0
    %3615 = vmatprep.subr.mxu0 0.0
    %3616 = vmatpush1.msra.mxu0 0.0
    %3617 = vmatprep.subr.mxu0 0.0
    %3618 = vmatpush1.msra.mxu0 0.0
    %3619 = vmatprep.subr.mxu0 0.0
    %3620 = vmatpush1.msra.mxu0 0.0
    %3621 = vmatprep.subr.mxu0 0.0
    %3622 = vmatpush1.msra.mxu0 0.0
    %3623 = vmatprep.subr.mxu0 0.0
    %3624 = vmatpush1.msra.mxu0 0.0
    %3625 = vmatprep.subr.mxu0 0.0
    %3626 = vmatpush1.msra.mxu0 0.0
    %3627 = vmatprep.subr.mxu0 0.0
    %3628 = vmatpush1.msra.mxu0 0.0
    %3629 = vmatprep.subr.mxu0 0.0
    %3630 = vmatpush1.msra.mxu0 0.0
    %3631 = vmatprep.subr.mxu0 0.0
    %3632 = vmatpush1.msra.mxu0 0.0
    %3633 = vmatprep.subr.mxu0 0.0
    %3634 = vmatpush1.msra.mxu0 0.0
    %3635 = vmatprep.subr.mxu0 0.0
    %3636 = vmatpush1.msra.mxu0 0.0
    %3637 = vmatprep.subr.mxu0 0.0
    %3638 = vmatpush1.msra.mxu0 0.0
    %3639 = vmatprep.subr.mxu0 0.0
    %3640 = vmatpush1.msra.mxu0 0.0
    %3641 = vmatprep.subr.mxu0 0.0
    %3642 = vmatpush1.msra.mxu0 0.0
    %3643 = vmatprep.subr.mxu0 0.0
    %3644 = vmatpush1.msra.mxu0 0.0
    %3645 = vmatprep.subr.mxu0 0.0
    %3646 = vmatpush1.msra.mxu0 0.0
    %3647 = vmatprep.mubr.f32.mxu0 0.0
    %3648 = vmatmul.mubr.f32.gmra.mrb[0].mxu0 %v3067
    %v3649 = vpop.f32.mrb[0].mxu0
    %v3650 = vadd.f32 0.0, %v3649
    %v3651 = vpop.f32.mrb[0].mxu0
    %3652 = vdwg.mxu0
    %vm3653 = vcmask 9216
    %3654 = vst.msk [vmem:[#allocation5] sm:$0x3] %vm3653, %v3139
    %3655 = vst.msk [vmem:[#allocation5 + $0x10] sm:$0x3] %vm3653, %v3212
    %3656 = vst.msk [vmem:[#allocation5 + $0x20] sm:$0x3] %vm3653, %v3285
    %3657 = vst.msk [vmem:[#allocation5 + $0x30] sm:$0x3] %vm3653, %v3358
    %3658 = vst.msk [vmem:[#allocation5 + $0x40] sm:$0x3] %vm3653, %v3431
    %3659 = vst.msk [vmem:[#allocation5 + $0x50] sm:$0x3] %vm3653, %v3504
    %3660 = vst.msk [vmem:[#allocation5 + $0x60] sm:$0x3] %vm3653, %v3577
    %3661 = vst.msk [vmem:[#allocation5 + $0x70] sm:$0x3] %vm3653, %v3650
    // Predicated region
    $region10: #{tpu_custom_call.1} parent=1 // pred_check
      _
    $region11: #{tpu_custom_call.1} parent=1 // pred_check_branch
      %3663 = sbr.rel (0) target = $region13
    $region12: #{tpu_custom_call.1} parent=1 // pred_region
      %s3665 = ssub.s32 2048, 2048
      %3666 = vsyncadd [#allocation4], %s3665
      %s3667 = sshll.u32 [#allocation5], 4
      %s3668 = int_to_ptr.vmem [resolvable:$true] %s3667
      %3673 = dma.vmem_to_hbm [thread:$0]  %s3668, 2048, %s1, [#allocation4], 128, 128, 8
    $region13: #{tpu_custom_call.1} parent=1 // pred_fallthru
      _
    // Predicated region
    $region14: #{tpu_custom_call.1} parent=1 // pred_check
      _
    $region15: #{tpu_custom_call.1} parent=1 // pred_check_branch
      %3675 = sbr.rel (0) target = $region17
    $region16: #{tpu_custom_call.1} parent=1 // pred_region
      %3676 = dma.done [#allocation4], 2048
    $region17: #{tpu_custom_call.1} parent=1 // pred_fallthru
      _
    %3677 = vsyncpa [#allocation3], 1
    %3678 = vsyncpa [#allocation4], 1

</llo_original>
